<compile_context>
chip_gen: v6e
topology: v6e:2x2x1
jax: 0.10.0
libtpu: 0.0.40
codegen_flags: <defaults>
</compile_context>

<pallas_src>
import math

import jax
import jax.numpy as jnp
from jax.experimental import pallas as pl
from jax.experimental.pallas import tpu as pltpu

IN_DIM = 113
F_PAD = 128                              # single padded lane width for all feature dims
LAYER_DIMS = [113, 100, 50, 10, 50, 100, 113]
LAYER_NAMES = ("enc1", "enc2", "enc3", "dec1", "dec2", "dec3")


def _round_up(n, m):
    return ((n + m - 1) // m) * m


def _choose_tile_b(B):
    """>= 2 tiles (so v7x's 2nd TensorCore gets work), each capped at 512 rows
    (512-1024 is the measured HBM-roofline sweet spot; 512 keeps the double-buffered
    VMEM footprint modest on v7x's 64 MiB)."""
    half = _round_up(pl.cdiv(B, 2), 8)
    return max(8, min(512, half))


# --------------------------------------------------------------------------------------
# Kernel: one batch tile, whole encoder+decoder chain in VMEM.
# --------------------------------------------------------------------------------------
def _autoencoder_kernel(
    x_ref,
    w1_ref, b1_ref, w2_ref, b2_ref, w3_ref, b3_ref,
    w4_ref, b4_ref, w5_ref, b5_ref, w6_ref, b6_ref,
    enc_ref, dec_ref,
    xpad_ref,
):
    compute = jnp.bfloat16

    def dense(h, w_ref, b_ref):
        # MXU matmul with bf16 inputs, f32 accumulation; bias add in f32 (VPU).
        return jnp.dot(h, w_ref[...], preferred_element_type=jnp.float32) + b_ref[...]

    # ---- pad x to 128 lanes inside the kernel (no wrapper-side pad/cast pass) ----
    tb = xpad_ref.shape[0]
    xpad_ref[:, IN_DIM:] = jnp.zeros((tb, F_PAD - IN_DIM), xpad_ref.dtype)
    xpad_ref[:, :IN_DIM] = x_ref[...].astype(compute)
    x = xpad_ref[...]                                         # [TILE_B, 128] bf16

    # ---------- encoder ----------
    h = jnp.maximum(dense(x, w1_ref, b1_ref), 0.0).astype(compute)
    h = jnp.maximum(dense(h, w2_ref, b2_ref), 0.0).astype(compute)
    enc = dense(h, w3_ref, b3_ref)                            # f32; padded cols exactly 0
    enc_bf = enc.astype(compute)
    enc_ref[...] = enc_bf                                     # lane-dense bf16 store

    # ---------- decoder ----------
    h = jnp.maximum(dense(enc_bf, w4_ref, b4_ref), 0.0).astype(compute)
    h = jnp.maximum(dense(h, w5_ref, b5_ref), 0.0).astype(compute)
    dec = jax.nn.sigmoid(dense(h, w6_ref, b6_ref))            # f32 (EUP)
    dec_ref[...] = dec.astype(dec_ref.dtype)                  # lane-dense bf16 store


# --------------------------------------------------------------------------------------
# One-time parameter preparation (hoisted out of the forward path).
# PyTorch layout W: [out, in] -> transposed to (in, out), zero-padded to (128, 128), bf16.
# Biases zero-padded to (1, 128), kept f32.  The zero padding of W3 cols / b3 entries is
# what keeps the padded enc lanes exactly zero.
# --------------------------------------------------------------------------------------
def prepare_params(params):
    flat = []
    for name, fan_in, fan_out in zip(LAYER_NAMES, LAYER_DIMS[:-1], LAYER_DIMS[1:]):
        W, b = params[name]
        Wt = jnp.zeros((F_PAD, F_PAD), jnp.float32).at[:fan_in, :fan_out].set(
            jnp.asarray(W, jnp.float32).T)
        bp = jnp.zeros((1, F_PAD), jnp.float32).at[0, :fan_out].set(
            jnp.asarray(b, jnp.float32))
        flat.append(Wt.astype(jnp.bfloat16))   # matmul operand dtype
        flat.append(bp)                        # bias stays f32
    return tuple(flat)


# --------------------------------------------------------------------------------------
# Forward wrapper.
# --------------------------------------------------------------------------------------
def autoencoder_forward(x, prepped, tile_b=None):
    """x: [B, 113] float32. prepped: output of prepare_params. Returns (enc [B,10], dec [B,113])."""
    B, F = x.shape
    assert F == IN_DIM
    if tile_b is None:
        tile_b = _choose_tile_b(B)
    tile_b = max(8, _round_up(min(tile_b, _round_up(B, 8)), 8))
    B_pad = _round_up(B, tile_b)

    # Only pad the batch dim (and only when needed); feature padding happens in-kernel.
    xp = x if B_pad == B else jnp.pad(x, ((0, B_pad - B), (0, 0)))

    grid = (B_pad // tile_b,)
    x_spec = pl.BlockSpec((tile_b, IN_DIM), lambda i: (i, 0))      # last dim = full extent
    w_spec = pl.BlockSpec((F_PAD, F_PAD), lambda i: (0, 0))        # weights stay VMEM-resident
    b_spec = pl.BlockSpec((1, F_PAD), lambda i: (0, 0))
    out_spec = pl.BlockSpec((tile_b, F_PAD), lambda i: (i, 0))
    in_specs = [x_spec] + [w_spec, b_spec] * 6

    weight_bytes = sum(int(a.size) * a.dtype.itemsize for a in prepped)
    cost = pl.CostEstimate(
        flops=2 * B_pad * 6 * F_PAD * F_PAD,
        transcendentals=B_pad * F_PAD,                              # sigmoid
        bytes_accessed=B_pad * IN_DIM * 4 + 2 * B_pad * F_PAD * 2 + weight_bytes,
    )

    enc_pad, dec_pad = pl.pallas_call(
        _autoencoder_kernel,
        out_shape=(
            jax.ShapeDtypeStruct((B_pad, F_PAD), jnp.bfloat16),     # bf16 writeback
            jax.ShapeDtypeStruct((B_pad, F_PAD), jnp.bfloat16),
        ),
        grid=grid,
        in_specs=in_specs,
        out_specs=(out_spec, out_spec),
        scratch_shapes=[pltpu.VMEM((tile_b, F_PAD), jnp.bfloat16)], # in-kernel x padding buffer
        compiler_params=pltpu.CompilerParams(
            dimension_semantics=("parallel",),
            vmem_limit_bytes=32 * 1024 * 1024,                      # headroom on v5e's 16 MiB default
        ),
        cost_estimate=cost,
    )(xp, *prepped)

    # Tiny sliced views back to the PyTorch shapes / dtype (padded lanes & rows dropped).
    return (enc_pad[:B, :10].astype(jnp.float32),
            dec_pad[:B, :IN_DIM].astype(jnp.float32))


# --------------------------------------------------------------------------------------
# Init + plain-JAX reference.
# --------------------------------------------------------------------------------------
def init_params(key):
    """Deterministic init mimicking PyTorch nn.Linear default (uniform +-1/sqrt(fan_in))."""
    dims = {
        "enc1": (113, 100), "enc2": (100, 50), "enc3": (50, 10),
        "dec1": (10, 50), "dec2": (50, 100), "dec3": (100, 113),
    }
    params = {}
    for name, (fan_in, fan_out) in dims.items():
        key, kw, kb = jax.random.split(key, 3)
        bound = 1.0 / math.sqrt(fan_in)
        W = jax.random.uniform(kw, (fan_out, fan_in), jnp.float32, -bound, bound)
        b = jax.random.uniform(kb, (fan_out,), jnp.float32, -bound, bound)
        params[name] = (W, b)
    return params


def _reference_forward(x, params):
    h = x
    W, b = params["enc1"]; h = jnp.maximum(h @ W.T + b, 0.0)
    W, b = params["enc2"]; h = jnp.maximum(h @ W.T + b, 0.0)
    W, b = params["enc3"]; enc = h @ W.T + b
    h = enc
    W, b = params["dec1"]; h = jnp.maximum(h @ W.T + b, 0.0)
    W, b = params["dec2"]; h = jnp.maximum(h @ W.T + b, 0.0)
    W, b = params["dec3"]; dec = jax.nn.sigmoid(h @ W.T + b)
    return enc, dec


if __name__ == "__main__":
    key = jax.random.PRNGKey(0)
    key, kx = jax.random.split(key)

    # B chosen so the default tiling gives 2 x 512-row tiles: tile in the 512-1024 sweet
    # spot AND an even >=2 grid so both v7x TensorCores get work (per perf review).
    B = 1024
    x = jax.random.uniform(kx, (B, 113), jnp.float32)
    params = init_params(key)
    prepped = prepare_params(params)          # hoisted weight prep (one time)

    fwd = jax.jit(autoencoder_forward, static_argnames=("tile_b",))
    encoded, decoded = fwd(x, prepped)        # default tile_b -> 512, grid=(2,)
    jax.block_until_ready((encoded, decoded))

    enc_ref, dec_ref = _reference_forward(x, params)
    assert encoded.shape == (B, 10) and decoded.shape == (B, 113)
    # bf16 matmul inputs / bf16 writeback -> looser tolerance than pure f32
    assert jnp.allclose(encoded, enc_ref, atol=3e-2, rtol=3e-2), float(
        jnp.max(jnp.abs(encoded - enc_ref)))
    assert jnp.allclose(decoded, dec_ref, atol=3e-2, rtol=3e-2), float(
        jnp.max(jnp.abs(decoded - dec_ref)))

    print("KERNEL_OK")
</pallas_src>

<mosaic_0001>
module attributes {stable_mosaic.version = 11 : i64} {
  func.func @_autoencoder_kernel(%arg0: i32, %arg1: memref<512x113xf32, #tpu.memory_space<vmem>>, %arg2: memref<128x128xbf16, #tpu.memory_space<vmem>>, %arg3: memref<1x128xf32, #tpu.memory_space<vmem>>, %arg4: memref<128x128xbf16, #tpu.memory_space<vmem>>, %arg5: memref<1x128xf32, #tpu.memory_space<vmem>>, %arg6: memref<128x128xbf16, #tpu.memory_space<vmem>>, %arg7: memref<1x128xf32, #tpu.memory_space<vmem>>, %arg8: memref<128x128xbf16, #tpu.memory_space<vmem>>, %arg9: memref<1x128xf32, #tpu.memory_space<vmem>>, %arg10: memref<128x128xbf16, #tpu.memory_space<vmem>>, %arg11: memref<1x128xf32, #tpu.memory_space<vmem>>, %arg12: memref<128x128xbf16, #tpu.memory_space<vmem>>, %arg13: memref<1x128xf32, #tpu.memory_space<vmem>>, %arg14: memref<512x128xbf16, #tpu.memory_space<vmem>>, %arg15: memref<512x128xbf16, #tpu.memory_space<vmem>>, %arg16: memref<512x128xbf16, #tpu.memory_space<vmem>>) attributes {dimension_semantics = [#tpu.dimension_semantics<parallel>], iteration_bounds = array<i64: 2>, scalar_prefetch = 0 : i64, scratch_operands = 1 : i64, tpu.core_type = #tpu.core_type<tc>, window_params = [{transform_indices = @transform_0, window_bounds = array<i64: 512, 113>}, {pipeline_mode = #tpu.pipeline_mode<synchronous>, transform_indices = @transform_1, window_bounds = array<i64: 128, 128>}, {pipeline_mode = #tpu.pipeline_mode<synchronous>, transform_indices = @transform_2, window_bounds = array<i64: 1, 128>}, {pipeline_mode = #tpu.pipeline_mode<synchronous>, transform_indices = @transform_3, window_bounds = array<i64: 128, 128>}, {pipeline_mode = #tpu.pipeline_mode<synchronous>, transform_indices = @transform_4, window_bounds = array<i64: 1, 128>}, {pipeline_mode = #tpu.pipeline_mode<synchronous>, transform_indices = @transform_5, window_bounds = array<i64: 128, 128>}, {pipeline_mode = #tpu.pipeline_mode<synchronous>, transform_indices = @transform_6, window_bounds = array<i64: 1, 128>}, {pipeline_mode = #tpu.pipeline_mode<synchronous>, transform_indices = @transform_7, window_bounds = array<i64: 128, 128>}, {pipeline_mode = #tpu.pipeline_mode<synchronous>, transform_indices = @transform_8, window_bounds = array<i64: 1, 128>}, {pipeline_mode = #tpu.pipeline_mode<synchronous>, transform_indices = @transform_9, window_bounds = array<i64: 128, 128>}, {pipeline_mode = #tpu.pipeline_mode<synchronous>, transform_indices = @transform_10, window_bounds = array<i64: 1, 128>}, {pipeline_mode = #tpu.pipeline_mode<synchronous>, transform_indices = @transform_11, window_bounds = array<i64: 128, 128>}, {pipeline_mode = #tpu.pipeline_mode<synchronous>, transform_indices = @transform_12, window_bounds = array<i64: 1, 128>}, {transform_indices = @transform_13, window_bounds = array<i64: 512, 128>}, {transform_indices = @transform_14, window_bounds = array<i64: 512, 128>}]} {
    %cst = arith.constant 0.000000e+00 : bf16
    %0 = vector.broadcast %cst : bf16 to vector<512x15xbf16>
    %c0 = arith.constant 0 : index
    %c113 = arith.constant 113 : index
    %1 = vector.load %arg16[%c0, %c113] : memref<512x128xbf16, #tpu.memory_space<vmem>>, vector<512x15xbf16>
    tpu.vector_store %arg16[%c0, %c113], %0 {strides = array<i32>} : memref<512x128xbf16, #tpu.memory_space<vmem>>, vector<512x15xbf16>,
    %c0_0 = arith.constant 0 : index
    %c0_1 = arith.constant 0 : index
    %2 = vector.load %arg1[%c0_0, %c0_1] : memref<512x113xf32, #tpu.memory_space<vmem>>, vector<512x113xf32>
    %3 = arith.truncf %2 : vector<512x113xf32> to vector<512x113xbf16>
    %c0_2 = arith.constant 0 : index
    %c0_3 = arith.constant 0 : index
    %4 = vector.load %arg16[%c0_2, %c0_3] : memref<512x128xbf16, #tpu.memory_space<vmem>>, vector<512x113xbf16>
    tpu.vector_store %arg16[%c0_2, %c0_3], %3 {strides = array<i32>} : memref<512x128xbf16, #tpu.memory_space<vmem>>, vector<512x113xbf16>,
    %c0_4 = arith.constant 0 : index
    %c0_5 = arith.constant 0 : index
    %5 = vector.load %arg16[%c0_4, %c0_5] : memref<512x128xbf16, #tpu.memory_space<vmem>>, vector<512x128xbf16>
    %c0_6 = arith.constant 0 : index
    %c0_7 = arith.constant 0 : index
    %6 = vector.load %arg2[%c0_6, %c0_7] : memref<128x128xbf16, #tpu.memory_space<vmem>>, vector<128x128xbf16>
    %cst_8 = arith.constant dense<0.000000e+00> : vector<512x128xf32>
    %7 = tpu.matmul %5, %6, %cst_8 {dimension_numbers = #tpu.dot_dimension_numbers<[1], [0], [0], [1], [0, 0, 1, 1], [], []>} : vector<512x128xbf16>, vector<128x128xbf16>, vector<512x128xf32> -> vector<512x128xf32>
    %c0_9 = arith.constant 0 : index
    %c0_10 = arith.constant 0 : index
    %8 = vector.load %arg3[%c0_9, %c0_10] : memref<1x128xf32, #tpu.memory_space<vmem>>, vector<1x128xf32>
    %9 = vector.broadcast %8 : vector<1x128xf32> to vector<512x128xf32>
    %10 = arith.addf %7, %9 : vector<512x128xf32>
    %cst_11 = arith.constant 0.000000e+00 : f32
    %11 = vector.broadcast %cst_11 : f32 to vector<512x128xf32>
    %12 = arith.maximumf %10, %11 : vector<512x128xf32>
    %13 = arith.truncf %12 : vector<512x128xf32> to vector<512x128xbf16>
    %c0_12 = arith.constant 0 : index
    %c0_13 = arith.constant 0 : index
    %14 = vector.load %arg4[%c0_12, %c0_13] : memref<128x128xbf16, #tpu.memory_space<vmem>>, vector<128x128xbf16>
    %cst_14 = arith.constant dense<0.000000e+00> : vector<512x128xf32>
    %15 = tpu.matmul %13, %14, %cst_14 {dimension_numbers = #tpu.dot_dimension_numbers<[1], [0], [0], [1], [0, 0, 1, 1], [], []>} : vector<512x128xbf16>, vector<128x128xbf16>, vector<512x128xf32> -> vector<512x128xf32>
    %c0_15 = arith.constant 0 : index
    %c0_16 = arith.constant 0 : index
    %16 = vector.load %arg5[%c0_15, %c0_16] : memref<1x128xf32, #tpu.memory_space<vmem>>, vector<1x128xf32>
    %17 = vector.broadcast %16 : vector<1x128xf32> to vector<512x128xf32>
    %18 = arith.addf %15, %17 : vector<512x128xf32>
    %cst_17 = arith.constant 0.000000e+00 : f32
    %19 = vector.broadcast %cst_17 : f32 to vector<512x128xf32>
    %20 = arith.maximumf %18, %19 : vector<512x128xf32>
    %21 = arith.truncf %20 : vector<512x128xf32> to vector<512x128xbf16>
    %c0_18 = arith.constant 0 : index
    %c0_19 = arith.constant 0 : index
    %22 = vector.load %arg6[%c0_18, %c0_19] : memref<128x128xbf16, #tpu.memory_space<vmem>>, vector<128x128xbf16>
    %cst_20 = arith.constant dense<0.000000e+00> : vector<512x128xf32>
    %23 = tpu.matmul %21, %22, %cst_20 {dimension_numbers = #tpu.dot_dimension_numbers<[1], [0], [0], [1], [0, 0, 1, 1], [], []>} : vector<512x128xbf16>, vector<128x128xbf16>, vector<512x128xf32> -> vector<512x128xf32>
    %c0_21 = arith.constant 0 : index
    %c0_22 = arith.constant 0 : index
    %24 = vector.load %arg7[%c0_21, %c0_22] : memref<1x128xf32, #tpu.memory_space<vmem>>, vector<1x128xf32>
    %25 = vector.broadcast %24 : vector<1x128xf32> to vector<512x128xf32>
    %26 = arith.addf %23, %25 : vector<512x128xf32>
    %27 = arith.truncf %26 : vector<512x128xf32> to vector<512x128xbf16>
    %c0_23 = arith.constant 0 : index
    %c0_24 = arith.constant 0 : index
    %28 = vector.load %arg14[%c0_23, %c0_24] : memref<512x128xbf16, #tpu.memory_space<vmem>>, vector<512x128xbf16>
    tpu.vector_store %arg14[%c0_23, %c0_24], %27 {strides = array<i32>} : memref<512x128xbf16, #tpu.memory_space<vmem>>, vector<512x128xbf16>,
    %c0_25 = arith.constant 0 : index
    %c0_26 = arith.constant 0 : index
    %29 = vector.load %arg8[%c0_25, %c0_26] : memref<128x128xbf16, #tpu.memory_space<vmem>>, vector<128x128xbf16>
    %cst_27 = arith.constant dense<0.000000e+00> : vector<512x128xf32>
    %30 = tpu.matmul %27, %29, %cst_27 {dimension_numbers = #tpu.dot_dimension_numbers<[1], [0], [0], [1], [0, 0, 1, 1], [], []>} : vector<512x128xbf16>, vector<128x128xbf16>, vector<512x128xf32> -> vector<512x128xf32>
    %c0_28 = arith.constant 0 : index
    %c0_29 = arith.constant 0 : index
    %31 = vector.load %arg9[%c0_28, %c0_29] : memref<1x128xf32, #tpu.memory_space<vmem>>, vector<1x128xf32>
    %32 = vector.broadcast %31 : vector<1x128xf32> to vector<512x128xf32>
    %33 = arith.addf %30, %32 : vector<512x128xf32>
    %cst_30 = arith.constant 0.000000e+00 : f32
    %34 = vector.broadcast %cst_30 : f32 to vector<512x128xf32>
    %35 = arith.maximumf %33, %34 : vector<512x128xf32>
    %36 = arith.truncf %35 : vector<512x128xf32> to vector<512x128xbf16>
    %c0_31 = arith.constant 0 : index
    %c0_32 = arith.constant 0 : index
    %37 = vector.load %arg10[%c0_31, %c0_32] : memref<128x128xbf16, #tpu.memory_space<vmem>>, vector<128x128xbf16>
    %cst_33 = arith.constant dense<0.000000e+00> : vector<512x128xf32>
    %38 = tpu.matmul %36, %37, %cst_33 {dimension_numbers = #tpu.dot_dimension_numbers<[1], [0], [0], [1], [0, 0, 1, 1], [], []>} : vector<512x128xbf16>, vector<128x128xbf16>, vector<512x128xf32> -> vector<512x128xf32>
    %c0_34 = arith.constant 0 : index
    %c0_35 = arith.constant 0 : index
    %39 = vector.load %arg11[%c0_34, %c0_35] : memref<1x128xf32, #tpu.memory_space<vmem>>, vector<1x128xf32>
    %40 = vector.broadcast %39 : vector<1x128xf32> to vector<512x128xf32>
    %41 = arith.addf %38, %40 : vector<512x128xf32>
    %cst_36 = arith.constant 0.000000e+00 : f32
    %42 = vector.broadcast %cst_36 : f32 to vector<512x128xf32>
    %43 = arith.maximumf %41, %42 : vector<512x128xf32>
    %44 = arith.truncf %43 : vector<512x128xf32> to vector<512x128xbf16>
    %c0_37 = arith.constant 0 : index
    %c0_38 = arith.constant 0 : index
    %45 = vector.load %arg12[%c0_37, %c0_38] : memref<128x128xbf16, #tpu.memory_space<vmem>>, vector<128x128xbf16>
    %cst_39 = arith.constant dense<0.000000e+00> : vector<512x128xf32>
    %46 = tpu.matmul %44, %45, %cst_39 {dimension_numbers = #tpu.dot_dimension_numbers<[1], [0], [0], [1], [0, 0, 1, 1], [], []>} : vector<512x128xbf16>, vector<128x128xbf16>, vector<512x128xf32> -> vector<512x128xf32>
    %c0_40 = arith.constant 0 : index
    %c0_41 = arith.constant 0 : index
    %47 = vector.load %arg13[%c0_40, %c0_41] : memref<1x128xf32, #tpu.memory_space<vmem>>, vector<1x128xf32>
    %48 = vector.broadcast %47 : vector<1x128xf32> to vector<512x128xf32>
    %49 = arith.addf %46, %48 : vector<512x128xf32>
    %50 = arith.negf %49 : vector<512x128xf32>
    %51 = math.exp %50 : vector<512x128xf32>
    %cst_42 = arith.constant 1.000000e+00 : f32
    %52 = vector.broadcast %cst_42 : f32 to vector<512x128xf32>
    %53 = arith.addf %52, %51 : vector<512x128xf32>
    %54 = arith.divf %52, %53 : vector<512x128xf32>
    %55 = arith.truncf %54 : vector<512x128xf32> to vector<512x128xbf16>
    %c0_43 = arith.constant 0 : index
    %c0_44 = arith.constant 0 : index
    %56 = vector.load %arg15[%c0_43, %c0_44] : memref<512x128xbf16, #tpu.memory_space<vmem>>, vector<512x128xbf16>
    tpu.vector_store %arg15[%c0_43, %c0_44], %55 {strides = array<i32>} : memref<512x128xbf16, #tpu.memory_space<vmem>>, vector<512x128xbf16>,
    return
  }
  func.func @transform_0(%arg0: i32) -> (i32, i32) {
    %c0_i32 = arith.constant 0 : i32
    %c0_i32_0 = arith.constant 0 : i32
    return %arg0, %c0_i32 : i32, i32
  }
  func.func @transform_1(%arg0: i32) -> (i32, i32) {
    %c0_i32 = arith.constant 0 : i32
    %c0_i32_0 = arith.constant 0 : i32
    %c0_i32_1 = arith.constant 0 : i32
    return %c0_i32, %c0_i32_0 : i32, i32
  }
  func.func @transform_2(%arg0: i32) -> (i32, i32) {
    %c0_i32 = arith.constant 0 : i32
    %c0_i32_0 = arith.constant 0 : i32
    %c0_i32_1 = arith.constant 0 : i32
    return %c0_i32, %c0_i32_0 : i32, i32
  }
  func.func @transform_3(%arg0: i32) -> (i32, i32) {
    %c0_i32 = arith.constant 0 : i32
    %c0_i32_0 = arith.constant 0 : i32
    %c0_i32_1 = arith.constant 0 : i32
    return %c0_i32, %c0_i32_0 : i32, i32
  }
  func.func @transform_4(%arg0: i32) -> (i32, i32) {
    %c0_i32 = arith.constant 0 : i32
    %c0_i32_0 = arith.constant 0 : i32
    %c0_i32_1 = arith.constant 0 : i32
    return %c0_i32, %c0_i32_0 : i32, i32
  }
  func.func @transform_5(%arg0: i32) -> (i32, i32) {
    %c0_i32 = arith.constant 0 : i32
    %c0_i32_0 = arith.constant 0 : i32
    %c0_i32_1 = arith.constant 0 : i32
    return %c0_i32, %c0_i32_0 : i32, i32
  }
  func.func @transform_6(%arg0: i32) -> (i32, i32) {
    %c0_i32 = arith.constant 0 : i32
    %c0_i32_0 = arith.constant 0 : i32
    %c0_i32_1 = arith.constant 0 : i32
    return %c0_i32, %c0_i32_0 : i32, i32
  }
  func.func @transform_7(%arg0: i32) -> (i32, i32) {
    %c0_i32 = arith.constant 0 : i32
    %c0_i32_0 = arith.constant 0 : i32
    %c0_i32_1 = arith.constant 0 : i32
    return %c0_i32, %c0_i32_0 : i32, i32
  }
  func.func @transform_8(%arg0: i32) -> (i32, i32) {
    %c0_i32 = arith.constant 0 : i32
    %c0_i32_0 = arith.constant 0 : i32
    %c0_i32_1 = arith.constant 0 : i32
    return %c0_i32, %c0_i32_0 : i32, i32
  }
  func.func @transform_9(%arg0: i32) -> (i32, i32) {
    %c0_i32 = arith.constant 0 : i32
    %c0_i32_0 = arith.constant 0 : i32
    %c0_i32_1 = arith.constant 0 : i32
    return %c0_i32, %c0_i32_0 : i32, i32
  }
  func.func @transform_10(%arg0: i32) -> (i32, i32) {
    %c0_i32 = arith.constant 0 : i32
    %c0_i32_0 = arith.constant 0 : i32
    %c0_i32_1 = arith.constant 0 : i32
    return %c0_i32, %c0_i32_0 : i32, i32
  }
  func.func @transform_11(%arg0: i32) -> (i32, i32) {
    %c0_i32 = arith.constant 0 : i32
    %c0_i32_0 = arith.constant 0 : i32
    %c0_i32_1 = arith.constant 0 : i32
    return %c0_i32, %c0_i32_0 : i32, i32
  }
  func.func @transform_12(%arg0: i32) -> (i32, i32) {
    %c0_i32 = arith.constant 0 : i32
    %c0_i32_0 = arith.constant 0 : i32
    %c0_i32_1 = arith.constant 0 : i32
    return %c0_i32, %c0_i32_0 : i32, i32
  }
  func.func @transform_13(%arg0: i32) -> (i32, i32) {
    %c0_i32 = arith.constant 0 : i32
    %c0_i32_0 = arith.constant 0 : i32
    return %arg0, %c0_i32 : i32, i32
  }
  func.func @transform_14(%arg0: i32) -> (i32, i32) {
    %c0_i32 = arith.constant 0 : i32
    %c0_i32_0 = arith.constant 0 : i32
    return %arg0, %c0_i32 : i32, i32
  }
}

</mosaic_0001>

<llo_original>
// kernel: autoencoder_forward.1
$region0: #{autoencoder_forward.1}
  #allocation0 [shape = 'u32[]', space=smem, size = 0x4, offset = 0x4, fixed_abs, tag = 'smem constant byte address 0x4 - core index']
  #allocation1 [shape = 'u32[144,128]{1,0:T(1,128)}', space=vmem, size = 0x12000, scoped, tag = 'internal scratch']
  #allocation2 [shape = 'bf16[512,128]{1,0:T(8,128)(2,1)}', space=vmem, size = 0x20000, scoped, tag = 'scratch operand']
  %s0 = inlined_call_operand.vmem [shape: f32[1024,113], index: 0, kind: input, shape index: {}]
  %s1 = inlined_call_operand.vmem [shape: bf16[128,128], index: 1, kind: input, shape index: {}]
  %s2 = inlined_call_operand.vmem [shape: f32[1,128], index: 2, kind: input, shape index: {}]
  %s3 = inlined_call_operand.vmem [shape: bf16[128,128], index: 3, kind: input, shape index: {}]
  %s4 = inlined_call_operand.vmem [shape: f32[1,128], index: 4, kind: input, shape index: {}]
  %s5 = inlined_call_operand.vmem [shape: bf16[128,128], index: 5, kind: input, shape index: {}]
  %s6 = inlined_call_operand.vmem [shape: f32[1,128], index: 6, kind: input, shape index: {}]
  %s7 = inlined_call_operand.vmem [shape: bf16[128,128], index: 7, kind: input, shape index: {}]
  %s8 = inlined_call_operand.vmem [shape: f32[1,128], index: 8, kind: input, shape index: {}]
  %s9 = inlined_call_operand.vmem [shape: bf16[128,128], index: 9, kind: input, shape index: {}]
  %s10 = inlined_call_operand.vmem [shape: f32[1,128], index: 10, kind: input, shape index: {}]
  %s11 = inlined_call_operand.vmem [shape: bf16[128,128], index: 11, kind: input, shape index: {}]
  %s12 = inlined_call_operand.vmem [shape: f32[1,128], index: 12, kind: input, shape index: {}]
  %s13 = inlined_call_operand.vmem [shape: bf16[1024,128], index: 13, kind: output, shape index: {0}]
  %s14 = inlined_call_operand.vmem [shape: bf16[1024,128], index: 14, kind: output, shape index: {1}]
  %15 = xla_tuple %s13, %s14
  %s16 = sld [smem:[#allocation0]]
  $region93: #{autoencoder_forward.1} parent=0
    _
  %s18 = ssub.s32 1, %s16
  %s19 = scalar_select 0, %s18, %s16
  loop: start=0, step=1, limit=4
  $region2: #{autoencoder_forward.1} parent=0 // loop_pre_header
    _
  $region3: #{autoencoder_forward.1} parent=0 // loop_header
    %s21 = sphi 0, %s25
    %p22 = scmp.ge.s32.totalorder %s21, 4
    %s31 = sphi 0, %s33
    %s34 = sphi 0, %s31
    %s35 = sphi 0, %s34
    %s51 = sphi 0, %s35
    %s55 = sphi 0, %s55
    %s57 = sphi 0, %s55
    %s58 = sphi 0, %s57
    %s72 = sphi 0, %s58
    %s76 = sphi 0, %s76
    %s78 = sphi 0, %s76
    %s79 = sphi 0, %s78
    %s93 = sphi 0, %s79
    %s97 = sphi 0, %s97
    %s99 = sphi 0, %s97
    %s100 = sphi 0, %s99
    %s114 = sphi 0, %s100
    %s118 = sphi 0, %s118
    %s120 = sphi 0, %s118
    %s121 = sphi 0, %s120
    %s135 = sphi 0, %s121
    %s139 = sphi 0, %s139
    %s141 = sphi 0, %s139
    %s142 = sphi 0, %s141
    %s156 = sphi 0, %s142
    %s160 = sphi 0, %s160
    %s162 = sphi 0, %s160
    %s163 = sphi 0, %s162
    %s177 = sphi 0, %s163
    %s181 = sphi 0, %s181
    %s183 = sphi 0, %s181
    %s184 = sphi 0, %s183
    %s198 = sphi 0, %s184
    %s202 = sphi 0, %s202
    %s204 = sphi 0, %s202
    %s205 = sphi 0, %s204
    %s219 = sphi 0, %s205
    %s223 = sphi 0, %s223
    %s225 = sphi 0, %s223
    %s226 = sphi 0, %s225
    %s240 = sphi 0, %s226
    %s244 = sphi 0, %s244
    %s246 = sphi 0, %s244
    %s247 = sphi 0, %s246
    %s261 = sphi 0, %s247
    %s265 = sphi 0, %s265
    %s267 = sphi 0, %s265
    %s268 = sphi 0, %s267
    %s282 = sphi 0, %s268
    %s286 = sphi 0, %s286
    %s288 = sphi 0, %s286
    %s289 = sphi 0, %s288
    %s303 = sphi 0, %s289
    %s309 = sphi 0, %s311
    %s312 = sphi 0, %s309
    %s313 = sphi 0, %s312
    %s329 = sphi 0, %s313
    %s335 = sphi 0, %s337
    %s338 = sphi 0, %s335
    %s339 = sphi 0, %s338
    %s355 = sphi 0, %s339
  $region4: #{autoencoder_forward.1} parent=0 // loop_header_branch
    %24 = sbr.rel (%p22) target = $region8
  $region5: #{autoencoder_forward.1} parent=0 // loop_body
    %s26 = ssub.s32 %s21, 1
    %s27 = ssub.s32 %s21, 2
    %s28 = sadd.s32 %s21, 1
    %s29 = ssub.s32 %s21, %s28
    %p30 = scmp.eq.s32.totalorder %s29, 0
    %s32 = sadd.s32 %s31, 1
    %s33 = scalar_select %p30, %s31, %s32
    %p36 = pneg %p30
    %p37 = scmp.eq.s32.totalorder %s21, 1
    %p38 = por %p36, %p37
    %p39 = scmp.ne.s32.totalorder %s31, %s34
    %p40 = scmp.eq.s32.totalorder %s21, 0
    %p41 = por %p39, %p40
    %p42 = scmp.ne.s32.totalorder %s31, %s34
    %p43 = scmp.eq.s32.totalorder %s26, 1
    %p44 = por %p42, %p43
    %p45 = scmp.ne.s32.totalorder %s34, %s35
    %p46 = scmp.eq.s32.totalorder %s26, 0
    %p47 = por %p45, %p46
    %p48 = scmp.ne.s32.totalorder %s34, %s35
    %p49 = scmp.eq.s32.totalorder %s27, 1
    %p50 = por %p48, %p49
    %p52 = scmp.ne.s32.totalorder %s35, %s51
    %p53 = scmp.eq.s32.totalorder %s27, 0
    %p54 = por %p52, %p53
    %s56 = sadd.s32 %s55, 1
    %p59 = scmp.eq.s32.totalorder %s21, 1
    %p60 = scmp.ne.s32.totalorder %s55, %s57
    %p61 = scmp.eq.s32.totalorder %s21, 0
    %p62 = por %p60, %p61
    %p63 = scmp.ne.s32.totalorder %s55, %s57
    %p64 = scmp.eq.s32.totalorder %s26, 1
    %p65 = por %p63, %p64
    %p66 = scmp.ne.s32.totalorder %s57, %s58
    %p67 = scmp.eq.s32.totalorder %s26, 0
    %p68 = por %p66, %p67
    %p69 = scmp.ne.s32.totalorder %s57, %s58
    %p70 = scmp.eq.s32.totalorder %s27, 1
    %p71 = por %p69, %p70
    %p73 = scmp.ne.s32.totalorder %s58, %s72
    %p74 = scmp.eq.s32.totalorder %s27, 0
    %p75 = por %p73, %p74
    %s77 = sadd.s32 %s76, 1
    %p80 = scmp.eq.s32.totalorder %s21, 1
    %p81 = scmp.ne.s32.totalorder %s76, %s78
    %p82 = scmp.eq.s32.totalorder %s21, 0
    %p83 = por %p81, %p82
    %p84 = scmp.ne.s32.totalorder %s76, %s78
    %p85 = scmp.eq.s32.totalorder %s26, 1
    %p86 = por %p84, %p85
    %p87 = scmp.ne.s32.totalorder %s78, %s79
    %p88 = scmp.eq.s32.totalorder %s26, 0
    %p89 = por %p87, %p88
    %p90 = scmp.ne.s32.totalorder %s78, %s79
    %p91 = scmp.eq.s32.totalorder %s27, 1
    %p92 = por %p90, %p91
    %p94 = scmp.ne.s32.totalorder %s79, %s93
    %p95 = scmp.eq.s32.totalorder %s27, 0
    %p96 = por %p94, %p95
    %s98 = sadd.s32 %s97, 1
    %p101 = scmp.eq.s32.totalorder %s21, 1
    %p102 = scmp.ne.s32.totalorder %s97, %s99
    %p103 = scmp.eq.s32.totalorder %s21, 0
    %p104 = por %p102, %p103
    %p105 = scmp.ne.s32.totalorder %s97, %s99
    %p106 = scmp.eq.s32.totalorder %s26, 1
    %p107 = por %p105, %p106
    %p108 = scmp.ne.s32.totalorder %s99, %s100
    %p109 = scmp.eq.s32.totalorder %s26, 0
    %p110 = por %p108, %p109
    %p111 = scmp.ne.s32.totalorder %s99, %s100
    %p112 = scmp.eq.s32.totalorder %s27, 1
    %p113 = por %p111, %p112
    %p115 = scmp.ne.s32.totalorder %s100, %s114
    %p116 = scmp.eq.s32.totalorder %s27, 0
    %p117 = por %p115, %p116
    %s119 = sadd.s32 %s118, 1
    %p122 = scmp.eq.s32.totalorder %s21, 1
    %p123 = scmp.ne.s32.totalorder %s118, %s120
    %p124 = scmp.eq.s32.totalorder %s21, 0
    %p125 = por %p123, %p124
    %p126 = scmp.ne.s32.totalorder %s118, %s120
    %p127 = scmp.eq.s32.totalorder %s26, 1
    %p128 = por %p126, %p127
    %p129 = scmp.ne.s32.totalorder %s120, %s121
    %p130 = scmp.eq.s32.totalorder %s26, 0
    %p131 = por %p129, %p130
    %p132 = scmp.ne.s32.totalorder %s120, %s121
    %p133 = scmp.eq.s32.totalorder %s27, 1
    %p134 = por %p132, %p133
    %p136 = scmp.ne.s32.totalorder %s121, %s135
    %p137 = scmp.eq.s32.totalorder %s27, 0
    %p138 = por %p136, %p137
    %s140 = sadd.s32 %s139, 1
    %p143 = scmp.eq.s32.totalorder %s21, 1
    %p144 = scmp.ne.s32.totalorder %s139, %s141
    %p145 = scmp.eq.s32.totalorder %s21, 0
    %p146 = por %p144, %p145
    %p147 = scmp.ne.s32.totalorder %s139, %s141
    %p148 = scmp.eq.s32.totalorder %s26, 1
    %p149 = por %p147, %p148
    %p150 = scmp.ne.s32.totalorder %s141, %s142
    %p151 = scmp.eq.s32.totalorder %s26, 0
    %p152 = por %p150, %p151
    %p153 = scmp.ne.s32.totalorder %s141, %s142
    %p154 = scmp.eq.s32.totalorder %s27, 1
    %p155 = por %p153, %p154
    %p157 = scmp.ne.s32.totalorder %s142, %s156
    %p158 = scmp.eq.s32.totalorder %s27, 0
    %p159 = por %p157, %p158
    %s161 = sadd.s32 %s160, 1
    %p164 = scmp.eq.s32.totalorder %s21, 1
    %p165 = scmp.ne.s32.totalorder %s160, %s162
    %p166 = scmp.eq.s32.totalorder %s21, 0
    %p167 = por %p165, %p166
    %p168 = scmp.ne.s32.totalorder %s160, %s162
    %p169 = scmp.eq.s32.totalorder %s26, 1
    %p170 = por %p168, %p169
    %p171 = scmp.ne.s32.totalorder %s162, %s163
    %p172 = scmp.eq.s32.totalorder %s26, 0
    %p173 = por %p171, %p172
    %p174 = scmp.ne.s32.totalorder %s162, %s163
    %p175 = scmp.eq.s32.totalorder %s27, 1
    %p176 = por %p174, %p175
    %p178 = scmp.ne.s32.totalorder %s163, %s177
    %p179 = scmp.eq.s32.totalorder %s27, 0
    %p180 = por %p178, %p179
    %s182 = sadd.s32 %s181, 1
    %p185 = scmp.eq.s32.totalorder %s21, 1
    %p186 = scmp.ne.s32.totalorder %s181, %s183
    %p187 = scmp.eq.s32.totalorder %s21, 0
    %p188 = por %p186, %p187
    %p189 = scmp.ne.s32.totalorder %s181, %s183
    %p190 = scmp.eq.s32.totalorder %s26, 1
    %p191 = por %p189, %p190
    %p192 = scmp.ne.s32.totalorder %s183, %s184
    %p193 = scmp.eq.s32.totalorder %s26, 0
    %p194 = por %p192, %p193
    %p195 = scmp.ne.s32.totalorder %s183, %s184
    %p196 = scmp.eq.s32.totalorder %s27, 1
    %p197 = por %p195, %p196
    %p199 = scmp.ne.s32.totalorder %s184, %s198
    %p200 = scmp.eq.s32.totalorder %s27, 0
    %p201 = por %p199, %p200
    %s203 = sadd.s32 %s202, 1
    %p206 = scmp.eq.s32.totalorder %s21, 1
    %p207 = scmp.ne.s32.totalorder %s202, %s204
    %p208 = scmp.eq.s32.totalorder %s21, 0
    %p209 = por %p207, %p208
    %p210 = scmp.ne.s32.totalorder %s202, %s204
    %p211 = scmp.eq.s32.totalorder %s26, 1
    %p212 = por %p210, %p211
    %p213 = scmp.ne.s32.totalorder %s204, %s205
    %p214 = scmp.eq.s32.totalorder %s26, 0
    %p215 = por %p213, %p214
    %p216 = scmp.ne.s32.totalorder %s204, %s205
    %p217 = scmp.eq.s32.totalorder %s27, 1
    %p218 = por %p216, %p217
    %p220 = scmp.ne.s32.totalorder %s205, %s219
    %p221 = scmp.eq.s32.totalorder %s27, 0
    %p222 = por %p220, %p221
    %s224 = sadd.s32 %s223, 1
    %p227 = scmp.eq.s32.totalorder %s21, 1
    %p228 = scmp.ne.s32.totalorder %s223, %s225
    %p229 = scmp.eq.s32.totalorder %s21, 0
    %p230 = por %p228, %p229
    %p231 = scmp.ne.s32.totalorder %s223, %s225
    %p232 = scmp.eq.s32.totalorder %s26, 1
    %p233 = por %p231, %p232
    %p234 = scmp.ne.s32.totalorder %s225, %s226
    %p235 = scmp.eq.s32.totalorder %s26, 0
    %p236 = por %p234, %p235
    %p237 = scmp.ne.s32.totalorder %s225, %s226
    %p238 = scmp.eq.s32.totalorder %s27, 1
    %p239 = por %p237, %p238
    %p241 = scmp.ne.s32.totalorder %s226, %s240
    %p242 = scmp.eq.s32.totalorder %s27, 0
    %p243 = por %p241, %p242
    %s245 = sadd.s32 %s244, 1
    %p248 = scmp.eq.s32.totalorder %s21, 1
    %p249 = scmp.ne.s32.totalorder %s244, %s246
    %p250 = scmp.eq.s32.totalorder %s21, 0
    %p251 = por %p249, %p250
    %p252 = scmp.ne.s32.totalorder %s244, %s246
    %p253 = scmp.eq.s32.totalorder %s26, 1
    %p254 = por %p252, %p253
    %p255 = scmp.ne.s32.totalorder %s246, %s247
    %p256 = scmp.eq.s32.totalorder %s26, 0
    %p257 = por %p255, %p256
    %p258 = scmp.ne.s32.totalorder %s246, %s247
    %p259 = scmp.eq.s32.totalorder %s27, 1
    %p260 = por %p258, %p259
    %p262 = scmp.ne.s32.totalorder %s247, %s261
    %p263 = scmp.eq.s32.totalorder %s27, 0
    %p264 = por %p262, %p263
    %s266 = sadd.s32 %s265, 1
    %p269 = scmp.eq.s32.totalorder %s21, 1
    %p270 = scmp.ne.s32.totalorder %s265, %s267
    %p271 = scmp.eq.s32.totalorder %s21, 0
    %p272 = por %p270, %p271
    %p273 = scmp.ne.s32.totalorder %s265, %s267
    %p274 = scmp.eq.s32.totalorder %s26, 1
    %p275 = por %p273, %p274
    %p276 = scmp.ne.s32.totalorder %s267, %s268
    %p277 = scmp.eq.s32.totalorder %s26, 0
    %p278 = por %p276, %p277
    %p279 = scmp.ne.s32.totalorder %s267, %s268
    %p280 = scmp.eq.s32.totalorder %s27, 1
    %p281 = por %p279, %p280
    %p283 = scmp.ne.s32.totalorder %s268, %s282
    %p284 = scmp.eq.s32.totalorder %s27, 0
    %p285 = por %p283, %p284
    %s287 = sadd.s32 %s286, 1
    %p290 = scmp.eq.s32.totalorder %s21, 1
    %p291 = scmp.ne.s32.totalorder %s286, %s288
    %p292 = scmp.eq.s32.totalorder %s21, 0
    %p293 = por %p291, %p292
    %p294 = scmp.ne.s32.totalorder %s286, %s288
    %p295 = scmp.eq.s32.totalorder %s26, 1
    %p296 = por %p294, %p295
    %p297 = scmp.ne.s32.totalorder %s288, %s289
    %p298 = scmp.eq.s32.totalorder %s26, 0
    %p299 = por %p297, %p298
    %p300 = scmp.ne.s32.totalorder %s288, %s289
    %p301 = scmp.eq.s32.totalorder %s27, 1
    %p302 = por %p300, %p301
    %p304 = scmp.ne.s32.totalorder %s289, %s303
    %p305 = scmp.eq.s32.totalorder %s27, 0
    %p306 = por %p304, %p305
    %s307 = ssub.s32 %s21, %s28
    %p308 = scmp.eq.s32.totalorder %s307, 0
    %s310 = sadd.s32 %s309, 1
    %s311 = scalar_select %p308, %s309, %s310
    %p314 = pneg %p308
    %p315 = scmp.eq.s32.totalorder %s21, 1
    %p316 = por %p314, %p315
    %p317 = scmp.ne.s32.totalorder %s309, %s312
    %p318 = scmp.eq.s32.totalorder %s21, 0
    %p319 = por %p317, %p318
    %p320 = scmp.ne.s32.totalorder %s309, %s312
    %p321 = scmp.eq.s32.totalorder %s26, 1
    %p322 = por %p320, %p321
    %p323 = scmp.ne.s32.totalorder %s312, %s313
    %p324 = scmp.eq.s32.totalorder %s26, 0
    %p325 = por %p323, %p324
    %p326 = scmp.ne.s32.totalorder %s312, %s313
    %p327 = scmp.eq.s32.totalorder %s27, 1
    %p328 = por %p326, %p327
    %p330 = scmp.ne.s32.totalorder %s313, %s329
    %p331 = scmp.eq.s32.totalorder %s27, 0
    %p332 = por %p330, %p331
    %s333 = ssub.s32 %s21, %s28
    %p334 = scmp.eq.s32.totalorder %s333, 0
    %s336 = sadd.s32 %s335, 1
    %s337 = scalar_select %p334, %s335, %s336
    %p340 = pneg %p334
    %p341 = scmp.eq.s32.totalorder %s21, 1
    %p342 = por %p340, %p341
    %p343 = scmp.ne.s32.totalorder %s335, %s338
    %p344 = scmp.eq.s32.totalorder %s21, 0
    %p345 = por %p343, %p344
    %p346 = scmp.ne.s32.totalorder %s335, %s338
    %p347 = scmp.eq.s32.totalorder %s26, 1
    %p348 = por %p346, %p347
    %p349 = scmp.ne.s32.totalorder %s338, %s339
    %p350 = scmp.eq.s32.totalorder %s26, 0
    %p351 = por %p349, %p350
    %p352 = scmp.ne.s32.totalorder %s338, %s339
    %p353 = scmp.eq.s32.totalorder %s27, 1
    %p354 = por %p352, %p353
    %p356 = scmp.ne.s32.totalorder %s339, %s355
    %p357 = scmp.eq.s32.totalorder %s27, 0
    %p358 = por %p356, %p357
    %p359 = scmp.le.s32.totalorder 1, %s21
    %p360 = scmp.lt.s32.totalorder %s21, 3
    %p361 = pnand %p359, %p360
    %p362 = pneg %p361
    // Predicated region
    $region9: #{autoencoder_forward.1} parent=5 // pred_check
      _
    $region10: #{autoencoder_forward.1} parent=5 // pred_check_branch
      %364 = sbr.rel (%p361) target = $region12
    $region11: #{autoencoder_forward.1} parent=5 // pred_region
      %s365 = ssub.s32 %s21, 1
      // Predicated region
      $region13: #{autoencoder_forward.1} parent=11 // pred_check
        %p366 = pneg %p68
      $region14: #{autoencoder_forward.1} parent=11 // pred_check_branch
        %368 = sbr.rel (%p366) target = $region16
      $region15: #{autoencoder_forward.1} parent=11 // pred_region
        _
      $region16: #{autoencoder_forward.1} parent=11 // pred_fallthru
        _
      // Predicated region
      $region17: #{autoencoder_forward.1} parent=11 // pred_check
        %p369 = pneg %p89
      $region18: #{autoencoder_forward.1} parent=11 // pred_check_branch
        %371 = sbr.rel (%p369) target = $region20
      $region19: #{autoencoder_forward.1} parent=11 // pred_region
        _
      $region20: #{autoencoder_forward.1} parent=11 // pred_fallthru
        _
      // Predicated region
      $region21: #{autoencoder_forward.1} parent=11 // pred_check
        %p372 = pneg %p110
      $region22: #{autoencoder_forward.1} parent=11 // pred_check_branch
        %374 = sbr.rel (%p372) target = $region24
      $region23: #{autoencoder_forward.1} parent=11 // pred_region
        _
      $region24: #{autoencoder_forward.1} parent=11 // pred_fallthru
        _
      // Predicated region
      $region25: #{autoencoder_forward.1} parent=11 // pred_check
        %p375 = pneg %p131
      $region26: #{autoencoder_forward.1} parent=11 // pred_check_branch
        %377 = sbr.rel (%p375) target = $region28
      $region27: #{autoencoder_forward.1} parent=11 // pred_region
        _
      $region28: #{autoencoder_forward.1} parent=11 // pred_fallthru
        _
      // Predicated region
      $region29: #{autoencoder_forward.1} parent=11 // pred_check
        %p378 = pneg %p152
      $region30: #{autoencoder_forward.1} parent=11 // pred_check_branch
        %380 = sbr.rel (%p378) target = $region32
      $region31: #{autoencoder_forward.1} parent=11 // pred_region
        _
      $region32: #{autoencoder_forward.1} parent=11 // pred_fallthru
        _
      // Predicated region
      $region33: #{autoencoder_forward.1} parent=11 // pred_check
        %p381 = pneg %p173
      $region34: #{autoencoder_forward.1} parent=11 // pred_check_branch
        %383 = sbr.rel (%p381) target = $region36
      $region35: #{autoencoder_forward.1} parent=11 // pred_region
        _
      $region36: #{autoencoder_forward.1} parent=11 // pred_fallthru
        _
      // Predicated region
      $region37: #{autoencoder_forward.1} parent=11 // pred_check
        %p384 = pneg %p194
      $region38: #{autoencoder_forward.1} parent=11 // pred_check_branch
        %386 = sbr.rel (%p384) target = $region40
      $region39: #{autoencoder_forward.1} parent=11 // pred_region
        _
      $region40: #{autoencoder_forward.1} parent=11 // pred_fallthru
        _
      // Predicated region
      $region41: #{autoencoder_forward.1} parent=11 // pred_check
        %p387 = pneg %p215
      $region42: #{autoencoder_forward.1} parent=11 // pred_check_branch
        %389 = sbr.rel (%p387) target = $region44
      $region43: #{autoencoder_forward.1} parent=11 // pred_region
        _
      $region44: #{autoencoder_forward.1} parent=11 // pred_fallthru
        _
      // Predicated region
      $region45: #{autoencoder_forward.1} parent=11 // pred_check
        %p390 = pneg %p236
      $region46: #{autoencoder_forward.1} parent=11 // pred_check_branch
        %392 = sbr.rel (%p390) target = $region48
      $region47: #{autoencoder_forward.1} parent=11 // pred_region
        _
      $region48: #{autoencoder_forward.1} parent=11 // pred_fallthru
        _
      // Predicated region
      $region49: #{autoencoder_forward.1} parent=11 // pred_check
        %p393 = pneg %p257
      $region50: #{autoencoder_forward.1} parent=11 // pred_check_branch
        %395 = sbr.rel (%p393) target = $region52
      $region51: #{autoencoder_forward.1} parent=11 // pred_region
        _
      $region52: #{autoencoder_forward.1} parent=11 // pred_fallthru
        _
      // Predicated region
      $region53: #{autoencoder_forward.1} parent=11 // pred_check
        %p396 = pneg %p278
      $region54: #{autoencoder_forward.1} parent=11 // pred_check_branch
        %398 = sbr.rel (%p396) target = $region56
      $region55: #{autoencoder_forward.1} parent=11 // pred_region
        _
      $region56: #{autoencoder_forward.1} parent=11 // pred_fallthru
        _
      // Predicated region
      $region57: #{autoencoder_forward.1} parent=11 // pred_check
        %p399 = pneg %p299
      $region58: #{autoencoder_forward.1} parent=11 // pred_check_branch
        %401 = sbr.rel (%p399) target = $region60
      $region59: #{autoencoder_forward.1} parent=11 // pred_region
        _
      $region60: #{autoencoder_forward.1} parent=11 // pred_fallthru
        _
    $region12: #{autoencoder_forward.1} parent=5 // pred_fallthru
      _
    %p402 = scmp.lt.s32.totalorder %s21, 2
    // Predicated region
    $region61: #{autoencoder_forward.1} parent=5 // pred_check
      %p403 = pneg %p402
    $region62: #{autoencoder_forward.1} parent=5 // pred_check_branch
      %405 = sbr.rel (%p403) target = $region64
    $region63: #{autoencoder_forward.1} parent=5 // pred_region
      // Predicated region
      $region65: #{autoencoder_forward.1} parent=63 // pred_check
        %p406 = pneg %p41
      $region66: #{autoencoder_forward.1} parent=63 // pred_check_branch
        %408 = sbr.rel (%p406) target = $region68
      $region67: #{autoencoder_forward.1} parent=63 // pred_region
        %s409 = smul.u32 64, %s21
        %p410 = scmp.lt.s32.totalorder %s409, 127
        %s411 = scalar_select %p410, %s409, 127
        %s412 = smul.addr %s411, 8
        %s413 = scalar_lea.vmem %s0, %s412
        %s414 = smul.u32 64, %s21
      $region68: #{autoencoder_forward.1} parent=63 // pred_fallthru
        _
    $region64: #{autoencoder_forward.1} parent=5 // pred_fallthru
      _
    %p415 = scmp.le.s32.totalorder 1, %s21
    %p416 = scmp.lt.s32.totalorder %s21, 3
    %p417 = pnand %p415, %p416
    %p418 = pneg %p417
    // Predicated region
    $region69: #{autoencoder_forward.1} parent=5 // pred_check
      _
    $region70: #{autoencoder_forward.1} parent=5 // pred_check_branch
      %420 = sbr.rel (%p417) target = $region72
    $region71: #{autoencoder_forward.1} parent=5 // pred_region
      %s421 = ssub.s32 %s21, 1
      %s422 = smul.u32 64, %s26
      %p423 = scmp.lt.s32.totalorder %s422, 127
      %s424 = scalar_select %p423, %s422, 127
      %s425 = smul.addr %s424, 8
      %s426 = scalar_lea.vmem %s0, %s425
      %p427 = pneg %p47
      %p428 = pneg %p44
      %p429 = pneg %p68
      %p430 = pneg %p65
      %p431 = pneg %p89
      %p432 = pneg %p86
      %p433 = pneg %p110
      %p434 = pneg %p107
      %p435 = pneg %p131
      %p436 = pneg %p128
      %p437 = pneg %p152
      %p438 = pneg %p149
      %p439 = pneg %p173
      %p440 = pneg %p170
      %p441 = pneg %p194
      %p442 = pneg %p191
      %p443 = pneg %p215
      %p444 = pneg %p212
      %p445 = pneg %p236
      %p446 = pneg %p233
      %p447 = pneg %p257
      %p448 = pneg %p254
      %p449 = pneg %p278
      %p450 = pneg %p275
      %p451 = pneg %p299
      %p452 = pneg %p296
      %p453 = pneg %p325
      %p454 = pneg %p322
      %s455 = smul.u32 64, %s26
      %p456 = scmp.lt.s32.totalorder %s455, 127
      %s457 = scalar_select %p456, %s455, 127
      %s458 = smul.addr %s457, 4
      %s459 = scalar_lea.vmem %s13, %s458
      %p460 = pneg %p351
      %p461 = pneg %p348
      %s462 = smul.u32 64, %s26
      %p463 = scmp.lt.s32.totalorder %s462, 127
      %s464 = scalar_select %p463, %s462, 127
      %s465 = smul.addr %s464, 4
      %s466 = scalar_lea.vmem %s14, %s465
      %s467 = smul.u32 64, %s26
      %p468 = scmp.lt.s32.totalorder %s467, 127
      %s469 = scalar_select %p468, %s467, 127
      %s470 = smul.addr %s469, 8
      %s471 = scalar_lea.vmem %s0, %s470
      %s472 = smul.u32 64, %s26
      %s473 = smul.u32 64, %s26
      %p474 = scmp.lt.s32.totalorder %s473, 127
      %s475 = scalar_select %p474, %s473, 127
      %s476 = smul.addr %s475, 4
      %s477 = scalar_lea.vmem %s13, %s476
      %s478 = smul.u32 64, %s26
      %s479 = smul.u32 64, %s26
      %p480 = scmp.lt.s32.totalorder %s479, 127
      %s481 = scalar_select %p480, %s479, 127
      %s482 = smul.addr %s481, 4
      %s483 = scalar_lea.vmem %s14, %s482
      %s484 = smul.u32 64, %s26
      %vm486 = vcmask 1044360
      %487 = vst.msk [vmem:[#allocation2] sm:$0xf] %vm486, 0
      %488 = vst.msk [vmem:[#allocation2 + $0x4] sm:$0xf] %vm486, 0
      %489 = vst.msk [vmem:[#allocation2 + $0x8] sm:$0xf] %vm486, 0
      %490 = vst.msk [vmem:[#allocation2 + $0xc] sm:$0xf] %vm486, 0
      %491 = vst.msk [vmem:[#allocation2 + $0x10] sm:$0xf] %vm486, 0
      %492 = vst.msk [vmem:[#allocation2 + $0x14] sm:$0xf] %vm486, 0
      %493 = vst.msk [vmem:[#allocation2 + $0x18] sm:$0xf] %vm486, 0
      %494 = vst.msk [vmem:[#allocation2 + $0x1c] sm:$0xf] %vm486, 0
      %495 = vst.msk [vmem:[#allocation2 + $0x20] sm:$0xf] %vm486, 0
      %496 = vst.msk [vmem:[#allocation2 + $0x24] sm:$0xf] %vm486, 0
      %497 = vst.msk [vmem:[#allocation2 + $0x28] sm:$0xf] %vm486, 0
      %498 = vst.msk [vmem:[#allocation2 + $0x2c] sm:$0xf] %vm486, 0
      %499 = vst.msk [vmem:[#allocation2 + $0x30] sm:$0xf] %vm486, 0
      %500 = vst.msk [vmem:[#allocation2 + $0x34] sm:$0xf] %vm486, 0
      %501 = vst.msk [vmem:[#allocation2 + $0x38] sm:$0xf] %vm486, 0
      %502 = vst.msk [vmem:[#allocation2 + $0x3c] sm:$0xf] %vm486, 0
      %503 = vst.msk [vmem:[#allocation2 + $0x40] sm:$0xf] %vm486, 0
      %504 = vst.msk [vmem:[#allocation2 + $0x44] sm:$0xf] %vm486, 0
      %505 = vst.msk [vmem:[#allocation2 + $0x48] sm:$0xf] %vm486, 0
      %506 = vst.msk [vmem:[#allocation2 + $0x4c] sm:$0xf] %vm486, 0
      %507 = vst.msk [vmem:[#allocation2 + $0x50] sm:$0xf] %vm486, 0
      %508 = vst.msk [vmem:[#allocation2 + $0x54] sm:$0xf] %vm486, 0
      %509 = vst.msk [vmem:[#allocation2 + $0x58] sm:$0xf] %vm486, 0
      %510 = vst.msk [vmem:[#allocation2 + $0x5c] sm:$0xf] %vm486, 0
      %511 = vst.msk [vmem:[#allocation2 + $0x60] sm:$0xf] %vm486, 0
      %512 = vst.msk [vmem:[#allocation2 + $0x64] sm:$0xf] %vm486, 0
      %513 = vst.msk [vmem:[#allocation2 + $0x68] sm:$0xf] %vm486, 0
      %514 = vst.msk [vmem:[#allocation2 + $0x6c] sm:$0xf] %vm486, 0
      %515 = vst.msk [vmem:[#allocation2 + $0x70] sm:$0xf] %vm486, 0
      %516 = vst.msk [vmem:[#allocation2 + $0x74] sm:$0xf] %vm486, 0
      %517 = vst.msk [vmem:[#allocation2 + $0x78] sm:$0xf] %vm486, 0
      %518 = vst.msk [vmem:[#allocation2 + $0x7c] sm:$0xf] %vm486, 0
      %519 = vst.msk [vmem:[#allocation2 + $0x80] sm:$0xf] %vm486, 0
      %520 = vst.msk [vmem:[#allocation2 + $0x84] sm:$0xf] %vm486, 0
      %521 = vst.msk [vmem:[#allocation2 + $0x88] sm:$0xf] %vm486, 0
      %522 = vst.msk [vmem:[#allocation2 + $0x8c] sm:$0xf] %vm486, 0
      %523 = vst.msk [vmem:[#allocation2 + $0x90] sm:$0xf] %vm486, 0
      %524 = vst.msk [vmem:[#allocation2 + $0x94] sm:$0xf] %vm486, 0
      %525 = vst.msk [vmem:[#allocation2 + $0x98] sm:$0xf] %vm486, 0
      %526 = vst.msk [vmem:[#allocation2 + $0x9c] sm:$0xf] %vm486, 0
      %527 = vst.msk [vmem:[#allocation2 + $0xa0] sm:$0xf] %vm486, 0
      %528 = vst.msk [vmem:[#allocation2 + $0xa4] sm:$0xf] %vm486, 0
      %529 = vst.msk [vmem:[#allocation2 + $0xa8] sm:$0xf] %vm486, 0
      %530 = vst.msk [vmem:[#allocation2 + $0xac] sm:$0xf] %vm486, 0
      %531 = vst.msk [vmem:[#allocation2 + $0xb0] sm:$0xf] %vm486, 0
      %532 = vst.msk [vmem:[#allocation2 + $0xb4] sm:$0xf] %vm486, 0
      %533 = vst.msk [vmem:[#allocation2 + $0xb8] sm:$0xf] %vm486, 0
      %534 = vst.msk [vmem:[#allocation2 + $0xbc] sm:$0xf] %vm486, 0
      %535 = vst.msk [vmem:[#allocation2 + $0xc0] sm:$0xf] %vm486, 0
      %536 = vst.msk [vmem:[#allocation2 + $0xc4] sm:$0xf] %vm486, 0
      %537 = vst.msk [vmem:[#allocation2 + $0xc8] sm:$0xf] %vm486, 0
      %538 = vst.msk [vmem:[#allocation2 + $0xcc] sm:$0xf] %vm486, 0
      %539 = vst.msk [vmem:[#allocation2 + $0xd0] sm:$0xf] %vm486, 0
      %540 = vst.msk [vmem:[#allocation2 + $0xd4] sm:$0xf] %vm486, 0
      %541 = vst.msk [vmem:[#allocation2 + $0xd8] sm:$0xf] %vm486, 0
      %542 = vst.msk [vmem:[#allocation2 + $0xdc] sm:$0xf] %vm486, 0
      %543 = vst.msk [vmem:[#allocation2 + $0xe0] sm:$0xf] %vm486, 0
      %544 = vst.msk [vmem:[#allocation2 + $0xe4] sm:$0xf] %vm486, 0
      %545 = vst.msk [vmem:[#allocation2 + $0xe8] sm:$0xf] %vm486, 0
      %546 = vst.msk [vmem:[#allocation2 + $0xec] sm:$0xf] %vm486, 0
      %547 = vst.msk [vmem:[#allocation2 + $0xf0] sm:$0xf] %vm486, 0
      %548 = vst.msk [vmem:[#allocation2 + $0xf4] sm:$0xf] %vm486, 0
      %549 = vst.msk [vmem:[#allocation2 + $0xf8] sm:$0xf] %vm486, 0
      %550 = vst.msk [vmem:[#allocation2 + $0xfc] sm:$0xf] %vm486, 0
      %v551 = vld [vmem:[%s471] sm:$0xff]
      %v552 = vld [vmem:[%s471 + $0x8] sm:$0xff]
      %v553 = vld [vmem:[%s471 + $0x10] sm:$0xff]
      %v554 = vld [vmem:[%s471 + $0x18] sm:$0xff]
      %v555 = vld [vmem:[%s471 + $0x20] sm:$0xff]
      %v556 = vld [vmem:[%s471 + $0x28] sm:$0xff]
      %v557 = vld [vmem:[%s471 + $0x30] sm:$0xff]
      %v558 = vld [vmem:[%s471 + $0x38] sm:$0xff]
      %v559 = vld [vmem:[%s471 + $0x40] sm:$0xff]
      %v560 = vld [vmem:[%s471 + $0x48] sm:$0xff]
      %v561 = vld [vmem:[%s471 + $0x50] sm:$0xff]
      %v562 = vld [vmem:[%s471 + $0x58] sm:$0xff]
      %v563 = vld [vmem:[%s471 + $0x60] sm:$0xff]
      %v564 = vld [vmem:[%s471 + $0x68] sm:$0xff]
      %v565 = vld [vmem:[%s471 + $0x70] sm:$0xff]
      %v566 = vld [vmem:[%s471 + $0x78] sm:$0xff]
      %v567 = vld [vmem:[%s471 + $0x80] sm:$0xff]
      %v568 = vld [vmem:[%s471 + $0x88] sm:$0xff]
      %v569 = vld [vmem:[%s471 + $0x90] sm:$0xff]
      %v570 = vld [vmem:[%s471 + $0x98] sm:$0xff]
      %v571 = vld [vmem:[%s471 + $0xa0] sm:$0xff]
      %v572 = vld [vmem:[%s471 + $0xa8] sm:$0xff]
      %v573 = vld [vmem:[%s471 + $0xb0] sm:$0xff]
      %v574 = vld [vmem:[%s471 + $0xb8] sm:$0xff]
      %v575 = vld [vmem:[%s471 + $0xc0] sm:$0xff]
      %v576 = vld [vmem:[%s471 + $0xc8] sm:$0xff]
      %v577 = vld [vmem:[%s471 + $0xd0] sm:$0xff]
      %v578 = vld [vmem:[%s471 + $0xd8] sm:$0xff]
      %v579 = vld [vmem:[%s471 + $0xe0] sm:$0xff]
      %v580 = vld [vmem:[%s471 + $0xe8] sm:$0xff]
      %v581 = vld [vmem:[%s471 + $0xf0] sm:$0xff]
      %v582 = vld [vmem:[%s471 + $0xf8] sm:$0xff]
      %v583 = vld [vmem:[%s471 + $0x100] sm:$0xff]
      %v584 = vld [vmem:[%s471 + $0x108] sm:$0xff]
      %v585 = vld [vmem:[%s471 + $0x110] sm:$0xff]
      %v586 = vld [vmem:[%s471 + $0x118] sm:$0xff]
      %v587 = vld [vmem:[%s471 + $0x120] sm:$0xff]
      %v588 = vld [vmem:[%s471 + $0x128] sm:$0xff]
      %v589 = vld [vmem:[%s471 + $0x130] sm:$0xff]
      %v590 = vld [vmem:[%s471 + $0x138] sm:$0xff]
      %v591 = vld [vmem:[%s471 + $0x140] sm:$0xff]
      %v592 = vld [vmem:[%s471 + $0x148] sm:$0xff]
      %v593 = vld [vmem:[%s471 + $0x150] sm:$0xff]
      %v594 = vld [vmem:[%s471 + $0x158] sm:$0xff]
      %v595 = vld [vmem:[%s471 + $0x160] sm:$0xff]
      %v596 = vld [vmem:[%s471 + $0x168] sm:$0xff]
      %v597 = vld [vmem:[%s471 + $0x170] sm:$0xff]
      %v598 = vld [vmem:[%s471 + $0x178] sm:$0xff]
      %v599 = vld [vmem:[%s471 + $0x180] sm:$0xff]
      %v600 = vld [vmem:[%s471 + $0x188] sm:$0xff]
      %v601 = vld [vmem:[%s471 + $0x190] sm:$0xff]
      %v602 = vld [vmem:[%s471 + $0x198] sm:$0xff]
      %v603 = vld [vmem:[%s471 + $0x1a0] sm:$0xff]
      %v604 = vld [vmem:[%s471 + $0x1a8] sm:$0xff]
      %v605 = vld [vmem:[%s471 + $0x1b0] sm:$0xff]
      %v606 = vld [vmem:[%s471 + $0x1b8] sm:$0xff]
      %v607 = vld [vmem:[%s471 + $0x1c0] sm:$0xff]
      %v608 = vld [vmem:[%s471 + $0x1c8] sm:$0xff]
      %v609 = vld [vmem:[%s471 + $0x1d0] sm:$0xff]
      %v610 = vld [vmem:[%s471 + $0x1d8] sm:$0xff]
      %v611 = vld [vmem:[%s471 + $0x1e0] sm:$0xff]
      %v612 = vld [vmem:[%s471 + $0x1e8] sm:$0xff]
      %v613 = vld [vmem:[%s471 + $0x1f0] sm:$0xff]
      %v614 = vld [vmem:[%s471 + $0x1f8] sm:$0xff]
      %v615 = vpack.c.bf16 %v552, %v551
      %v616 = vpack.c.bf16 %v554, %v553
      %v617 = vpack.c.bf16 %v556, %v555
      %v618 = vpack.c.bf16 %v558, %v557
      %v619 = vpack.c.bf16 %v560, %v559
      %v620 = vpack.c.bf16 %v562, %v561
      %v621 = vpack.c.bf16 %v564, %v563
      %v622 = vpack.c.bf16 %v566, %v565
      %v623 = vpack.c.bf16 %v568, %v567
      %v624 = vpack.c.bf16 %v570, %v569
      %v625 = vpack.c.bf16 %v572, %v571
      %v626 = vpack.c.bf16 %v574, %v573
      %v627 = vpack.c.bf16 %v576, %v575
      %v628 = vpack.c.bf16 %v578, %v577
      %v629 = vpack.c.bf16 %v580, %v579
      %v630 = vpack.c.bf16 %v582, %v581
      %v631 = vpack.c.bf16 %v584, %v583
      %v632 = vpack.c.bf16 %v586, %v585
      %v633 = vpack.c.bf16 %v588, %v587
      %v634 = vpack.c.bf16 %v590, %v589
      %v635 = vpack.c.bf16 %v592, %v591
      %v636 = vpack.c.bf16 %v594, %v593
      %v637 = vpack.c.bf16 %v596, %v595
      %v638 = vpack.c.bf16 %v598, %v597
      %v639 = vpack.c.bf16 %v600, %v599
      %v640 = vpack.c.bf16 %v602, %v601
      %v641 = vpack.c.bf16 %v604, %v603
      %v642 = vpack.c.bf16 %v606, %v605
      %v643 = vpack.c.bf16 %v608, %v607
      %v644 = vpack.c.bf16 %v610, %v609
      %v645 = vpack.c.bf16 %v612, %v611
      %v646 = vpack.c.bf16 %v614, %v613
      %v679 = vunpack.c.l.b16 %v615
      %v680 = vunpack.c.h.b16 %v615
      %v681 = vunpack.c.l.b16 %v616
      %v682 = vunpack.c.h.b16 %v616
      %v683 = vunpack.c.l.b16 %v617
      %v684 = vunpack.c.h.b16 %v617
      %v685 = vunpack.c.l.b16 %v618
      %v686 = vunpack.c.h.b16 %v618
      %v687 = vunpack.c.l.b16 %v619
      %v688 = vunpack.c.h.b16 %v619
      %v689 = vunpack.c.l.b16 %v620
      %v690 = vunpack.c.h.b16 %v620
      %v691 = vunpack.c.l.b16 %v621
      %v692 = vunpack.c.h.b16 %v621
      %v693 = vunpack.c.l.b16 %v622
      %v694 = vunpack.c.h.b16 %v622
      %v695 = vunpack.c.l.b16 %v623
      %v696 = vunpack.c.h.b16 %v623
      %v697 = vunpack.c.l.b16 %v624
      %v698 = vunpack.c.h.b16 %v624
      %v699 = vunpack.c.l.b16 %v625
      %v700 = vunpack.c.h.b16 %v625
      %v701 = vunpack.c.l.b16 %v626
      %v702 = vunpack.c.h.b16 %v626
      %v703 = vunpack.c.l.b16 %v627
      %v704 = vunpack.c.h.b16 %v627
      %v705 = vunpack.c.l.b16 %v628
      %v706 = vunpack.c.h.b16 %v628
      %v707 = vunpack.c.l.b16 %v629
      %v708 = vunpack.c.h.b16 %v629
      %v709 = vunpack.c.l.b16 %v630
      %v710 = vunpack.c.h.b16 %v630
      %v711 = vunpack.c.l.b16 %v631
      %v712 = vunpack.c.h.b16 %v631
      %v713 = vunpack.c.l.b16 %v632
      %v714 = vunpack.c.h.b16 %v632
      %v715 = vunpack.c.l.b16 %v633
      %v716 = vunpack.c.h.b16 %v633
      %v717 = vunpack.c.l.b16 %v634
      %v718 = vunpack.c.h.b16 %v634
      %v719 = vunpack.c.l.b16 %v635
      %v720 = vunpack.c.h.b16 %v635
      %v721 = vunpack.c.l.b16 %v636
      %v722 = vunpack.c.h.b16 %v636
      %v723 = vunpack.c.l.b16 %v637
      %v724 = vunpack.c.h.b16 %v637
      %v725 = vunpack.c.l.b16 %v638
      %v726 = vunpack.c.h.b16 %v638
      %v727 = vunpack.c.l.b16 %v639
      %v728 = vunpack.c.h.b16 %v639
      %v729 = vunpack.c.l.b16 %v640
      %v730 = vunpack.c.h.b16 %v640
      %v731 = vunpack.c.l.b16 %v641
      %v732 = vunpack.c.h.b16 %v641
      %v733 = vunpack.c.l.b16 %v642
      %v734 = vunpack.c.h.b16 %v642
      %v735 = vunpack.c.l.b16 %v643
      %v736 = vunpack.c.h.b16 %v643
      %v737 = vunpack.c.l.b16 %v644
      %v738 = vunpack.c.h.b16 %v644
      %v739 = vunpack.c.l.b16 %v645
      %v740 = vunpack.c.h.b16 %v645
      %v741 = vunpack.c.l.b16 %v646
      %v742 = vunpack.c.h.b16 %v646
      %v743 = vpack.c.b16 %v679, %v679
      %v744 = vpack.c.b16 %v680, %v680
      %v745 = vpack.c.b16 %v681, %v681
      %v746 = vpack.c.b16 %v682, %v682
      %v747 = vpack.c.b16 %v683, %v683
      %v748 = vpack.c.b16 %v684, %v684
      %v749 = vpack.c.b16 %v685, %v685
      %v750 = vpack.c.b16 %v686, %v686
      %v751 = vpack.c.b16 %v687, %v687
      %v752 = vpack.c.b16 %v688, %v688
      %v753 = vpack.c.b16 %v689, %v689
      %v754 = vpack.c.b16 %v690, %v690
      %v755 = vpack.c.b16 %v691, %v691
      %v756 = vpack.c.b16 %v692, %v692
      %v757 = vpack.c.b16 %v693, %v693
      %v758 = vpack.c.b16 %v694, %v694
      %v759 = vpack.c.b16 %v695, %v695
      %v760 = vpack.c.b16 %v696, %v696
      %v761 = vpack.c.b16 %v697, %v697
      %v762 = vpack.c.b16 %v698, %v698
      %v763 = vpack.c.b16 %v699, %v699
      %v764 = vpack.c.b16 %v700, %v700
      %v765 = vpack.c.b16 %v701, %v701
      %v766 = vpack.c.b16 %v702, %v702
      %v767 = vpack.c.b16 %v703, %v703
      %v768 = vpack.c.b16 %v704, %v704
      %v769 = vpack.c.b16 %v705, %v705
      %v770 = vpack.c.b16 %v706, %v706
      %v771 = vpack.c.b16 %v707, %v707
      %v772 = vpack.c.b16 %v708, %v708
      %v773 = vpack.c.b16 %v709, %v709
      %v774 = vpack.c.b16 %v710, %v710
      %v775 = vpack.c.b16 %v711, %v711
      %v776 = vpack.c.b16 %v712, %v712
      %v777 = vpack.c.b16 %v713, %v713
      %v778 = vpack.c.b16 %v714, %v714
      %v779 = vpack.c.b16 %v715, %v715
      %v780 = vpack.c.b16 %v716, %v716
      %v781 = vpack.c.b16 %v717, %v717
      %v782 = vpack.c.b16 %v718, %v718
      %v783 = vpack.c.b16 %v719, %v719
      %v784 = vpack.c.b16 %v720, %v720
      %v785 = vpack.c.b16 %v721, %v721
      %v786 = vpack.c.b16 %v722, %v722
      %v787 = vpack.c.b16 %v723, %v723
      %v788 = vpack.c.b16 %v724, %v724
      %v789 = vpack.c.b16 %v725, %v725
      %v790 = vpack.c.b16 %v726, %v726
      %v791 = vpack.c.b16 %v727, %v727
      %v792 = vpack.c.b16 %v728, %v728
      %v793 = vpack.c.b16 %v729, %v729
      %v794 = vpack.c.b16 %v730, %v730
      %v795 = vpack.c.b16 %v731, %v731
      %v796 = vpack.c.b16 %v732, %v732
      %v797 = vpack.c.b16 %v733, %v733
      %v798 = vpack.c.b16 %v734, %v734
      %v799 = vpack.c.b16 %v735, %v735
      %v800 = vpack.c.b16 %v736, %v736
      %v801 = vpack.c.b16 %v737, %v737
      %v802 = vpack.c.b16 %v738, %v738
      %v803 = vpack.c.b16 %v739, %v739
      %v804 = vpack.c.b16 %v740, %v740
      %v805 = vpack.c.b16 %v741, %v741
      %v806 = vpack.c.b16 %v742, %v742
      %vm871 = vcmask 920576
      %872 = vst.msk [vmem:[#allocation2] sm:$0xf] %vm871, %v743
      %873 = vst.msk [vmem:[#allocation2 + $0x4] sm:$0xf] %vm871, %v744
      %874 = vst.msk [vmem:[#allocation2 + $0x8] sm:$0xf] %vm871, %v745
      %875 = vst.msk [vmem:[#allocation2 + $0xc] sm:$0xf] %vm871, %v746
      %876 = vst.msk [vmem:[#allocation2 + $0x10] sm:$0xf] %vm871, %v747
      %877 = vst.msk [vmem:[#allocation2 + $0x14] sm:$0xf] %vm871, %v748
      %878 = vst.msk [vmem:[#allocation2 + $0x18] sm:$0xf] %vm871, %v749
      %879 = vst.msk [vmem:[#allocation2 + $0x1c] sm:$0xf] %vm871, %v750
      %880 = vst.msk [vmem:[#allocation2 + $0x20] sm:$0xf] %vm871, %v751
      %881 = vst.msk [vmem:[#allocation2 + $0x24] sm:$0xf] %vm871, %v752
      %882 = vst.msk [vmem:[#allocation2 + $0x28] sm:$0xf] %vm871, %v753
      %883 = vst.msk [vmem:[#allocation2 + $0x2c] sm:$0xf] %vm871, %v754
      %884 = vst.msk [vmem:[#allocation2 + $0x30] sm:$0xf] %vm871, %v755
      %885 = vst.msk [vmem:[#allocation2 + $0x34] sm:$0xf] %vm871, %v756
      %886 = vst.msk [vmem:[#allocation2 + $0x38] sm:$0xf] %vm871, %v757
      %887 = vst.msk [vmem:[#allocation2 + $0x3c] sm:$0xf] %vm871, %v758
      %888 = vst.msk [vmem:[#allocation2 + $0x40] sm:$0xf] %vm871, %v759
      %889 = vst.msk [vmem:[#allocation2 + $0x44] sm:$0xf] %vm871, %v760
      %890 = vst.msk [vmem:[#allocation2 + $0x48] sm:$0xf] %vm871, %v761
      %891 = vst.msk [vmem:[#allocation2 + $0x4c] sm:$0xf] %vm871, %v762
      %892 = vst.msk [vmem:[#allocation2 + $0x50] sm:$0xf] %vm871, %v763
      %893 = vst.msk [vmem:[#allocation2 + $0x54] sm:$0xf] %vm871, %v764
      %894 = vst.msk [vmem:[#allocation2 + $0x58] sm:$0xf] %vm871, %v765
      %895 = vst.msk [vmem:[#allocation2 + $0x5c] sm:$0xf] %vm871, %v766
      %896 = vst.msk [vmem:[#allocation2 + $0x60] sm:$0xf] %vm871, %v767
      %897 = vst.msk [vmem:[#allocation2 + $0x64] sm:$0xf] %vm871, %v768
      %898 = vst.msk [vmem:[#allocation2 + $0x68] sm:$0xf] %vm871, %v769
      %899 = vst.msk [vmem:[#allocation2 + $0x6c] sm:$0xf] %vm871, %v770
      %900 = vst.msk [vmem:[#allocation2 + $0x70] sm:$0xf] %vm871, %v771
      %901 = vst.msk [vmem:[#allocation2 + $0x74] sm:$0xf] %vm871, %v772
      %902 = vst.msk [vmem:[#allocation2 + $0x78] sm:$0xf] %vm871, %v773
      %903 = vst.msk [vmem:[#allocation2 + $0x7c] sm:$0xf] %vm871, %v774
      %904 = vst.msk [vmem:[#allocation2 + $0x80] sm:$0xf] %vm871, %v775
      %905 = vst.msk [vmem:[#allocation2 + $0x84] sm:$0xf] %vm871, %v776
      %906 = vst.msk [vmem:[#allocation2 + $0x88] sm:$0xf] %vm871, %v777
      %907 = vst.msk [vmem:[#allocation2 + $0x8c] sm:$0xf] %vm871, %v778
      %908 = vst.msk [vmem:[#allocation2 + $0x90] sm:$0xf] %vm871, %v779
      %909 = vst.msk [vmem:[#allocation2 + $0x94] sm:$0xf] %vm871, %v780
      %910 = vst.msk [vmem:[#allocation2 + $0x98] sm:$0xf] %vm871, %v781
      %911 = vst.msk [vmem:[#allocation2 + $0x9c] sm:$0xf] %vm871, %v782
      %912 = vst.msk [vmem:[#allocation2 + $0xa0] sm:$0xf] %vm871, %v783
      %913 = vst.msk [vmem:[#allocation2 + $0xa4] sm:$0xf] %vm871, %v784
      %914 = vst.msk [vmem:[#allocation2 + $0xa8] sm:$0xf] %vm871, %v785
      %915 = vst.msk [vmem:[#allocation2 + $0xac] sm:$0xf] %vm871, %v786
      %916 = vst.msk [vmem:[#allocation2 + $0xb0] sm:$0xf] %vm871, %v787
      %917 = vst.msk [vmem:[#allocation2 + $0xb4] sm:$0xf] %vm871, %v788
      %918 = vst.msk [vmem:[#allocation2 + $0xb8] sm:$0xf] %vm871, %v789
      %919 = vst.msk [vmem:[#allocation2 + $0xbc] sm:$0xf] %vm871, %v790
      %920 = vst.msk [vmem:[#allocation2 + $0xc0] sm:$0xf] %vm871, %v791
      %921 = vst.msk [vmem:[#allocation2 + $0xc4] sm:$0xf] %vm871, %v792
      %922 = vst.msk [vmem:[#allocation2 + $0xc8] sm:$0xf] %vm871, %v793
      %923 = vst.msk [vmem:[#allocation2 + $0xcc] sm:$0xf] %vm871, %v794
      %924 = vst.msk [vmem:[#allocation2 + $0xd0] sm:$0xf] %vm871, %v795
      %925 = vst.msk [vmem:[#allocation2 + $0xd4] sm:$0xf] %vm871, %v796
      %926 = vst.msk [vmem:[#allocation2 + $0xd8] sm:$0xf] %vm871, %v797
      %927 = vst.msk [vmem:[#allocation2 + $0xdc] sm:$0xf] %vm871, %v798
      %928 = vst.msk [vmem:[#allocation2 + $0xe0] sm:$0xf] %vm871, %v799
      %929 = vst.msk [vmem:[#allocation2 + $0xe4] sm:$0xf] %vm871, %v800
      %930 = vst.msk [vmem:[#allocation2 + $0xe8] sm:$0xf] %vm871, %v801
      %931 = vst.msk [vmem:[#allocation2 + $0xec] sm:$0xf] %vm871, %v802
      %932 = vst.msk [vmem:[#allocation2 + $0xf0] sm:$0xf] %vm871, %v803
      %933 = vst.msk [vmem:[#allocation2 + $0xf4] sm:$0xf] %vm871, %v804
      %934 = vst.msk [vmem:[#allocation2 + $0xf8] sm:$0xf] %vm871, %v805
      %935 = vst.msk [vmem:[#allocation2 + $0xfc] sm:$0xf] %vm871, %v806
      %v936 = vld [vmem:[#allocation2] sm:$0xf]
      %v937 = vld [vmem:[#allocation2 + $0x4] sm:$0xf]
      %v938 = vld [vmem:[#allocation2 + $0x8] sm:$0xf]
      %v939 = vld [vmem:[#allocation2 + $0xc] sm:$0xf]
      %v940 = vld [vmem:[#allocation2 + $0x10] sm:$0xf]
      %v941 = vld [vmem:[#allocation2 + $0x14] sm:$0xf]
      %v942 = vld [vmem:[#allocation2 + $0x18] sm:$0xf]
      %v943 = vld [vmem:[#allocation2 + $0x1c] sm:$0xf]
      %v944 = vld [vmem:[#allocation2 + $0x20] sm:$0xf]
      %v945 = vld [vmem:[#allocation2 + $0x24] sm:$0xf]
      %v946 = vld [vmem:[#allocation2 + $0x28] sm:$0xf]
      %v947 = vld [vmem:[#allocation2 + $0x2c] sm:$0xf]
      %v948 = vld [vmem:[#allocation2 + $0x30] sm:$0xf]
      %v949 = vld [vmem:[#allocation2 + $0x34] sm:$0xf]
      %v950 = vld [vmem:[#allocation2 + $0x38] sm:$0xf]
      %v951 = vld [vmem:[#allocation2 + $0x3c] sm:$0xf]
      %v952 = vld [vmem:[#allocation2 + $0x40] sm:$0xf]
      %v953 = vld [vmem:[#allocation2 + $0x44] sm:$0xf]
      %v954 = vld [vmem:[#allocation2 + $0x48] sm:$0xf]
      %v955 = vld [vmem:[#allocation2 + $0x4c] sm:$0xf]
      %v956 = vld [vmem:[#allocation2 + $0x50] sm:$0xf]
      %v957 = vld [vmem:[#allocation2 + $0x54] sm:$0xf]
      %v958 = vld [vmem:[#allocation2 + $0x58] sm:$0xf]
      %v959 = vld [vmem:[#allocation2 + $0x5c] sm:$0xf]
      %v960 = vld [vmem:[#allocation2 + $0x60] sm:$0xf]
      %v961 = vld [vmem:[#allocation2 + $0x64] sm:$0xf]
      %v962 = vld [vmem:[#allocation2 + $0x68] sm:$0xf]
      %v963 = vld [vmem:[#allocation2 + $0x6c] sm:$0xf]
      %v964 = vld [vmem:[#allocation2 + $0x70] sm:$0xf]
      %v965 = vld [vmem:[#allocation2 + $0x74] sm:$0xf]
      %v966 = vld [vmem:[#allocation2 + $0x78] sm:$0xf]
      %v967 = vld [vmem:[#allocation2 + $0x7c] sm:$0xf]
      %v968 = vld [vmem:[#allocation2 + $0x80] sm:$0xf]
      %v969 = vld [vmem:[#allocation2 + $0x84] sm:$0xf]
      %v970 = vld [vmem:[#allocation2 + $0x88] sm:$0xf]
      %v971 = vld [vmem:[#allocation2 + $0x8c] sm:$0xf]
      %v972 = vld [vmem:[#allocation2 + $0x90] sm:$0xf]
      %v973 = vld [vmem:[#allocation2 + $0x94] sm:$0xf]
      %v974 = vld [vmem:[#allocation2 + $0x98] sm:$0xf]
      %v975 = vld [vmem:[#allocation2 + $0x9c] sm:$0xf]
      %v976 = vld [vmem:[#allocation2 + $0xa0] sm:$0xf]
      %v977 = vld [vmem:[#allocation2 + $0xa4] sm:$0xf]
      %v978 = vld [vmem:[#allocation2 + $0xa8] sm:$0xf]
      %v979 = vld [vmem:[#allocation2 + $0xac] sm:$0xf]
      %v980 = vld [vmem:[#allocation2 + $0xb0] sm:$0xf]
      %v981 = vld [vmem:[#allocation2 + $0xb4] sm:$0xf]
      %v982 = vld [vmem:[#allocation2 + $0xb8] sm:$0xf]
      %v983 = vld [vmem:[#allocation2 + $0xbc] sm:$0xf]
      %v984 = vld [vmem:[#allocation2 + $0xc0] sm:$0xf]
      %v985 = vld [vmem:[#allocation2 + $0xc4] sm:$0xf]
      %v986 = vld [vmem:[#allocation2 + $0xc8] sm:$0xf]
      %v987 = vld [vmem:[#allocation2 + $0xcc] sm:$0xf]
      %v988 = vld [vmem:[#allocation2 + $0xd0] sm:$0xf]
      %v989 = vld [vmem:[#allocation2 + $0xd4] sm:$0xf]
      %v990 = vld [vmem:[#allocation2 + $0xd8] sm:$0xf]
      %v991 = vld [vmem:[#allocation2 + $0xdc] sm:$0xf]
      %v992 = vld [vmem:[#allocation2 + $0xe0] sm:$0xf]
      %v993 = vld [vmem:[#allocation2 + $0xe4] sm:$0xf]
      %v994 = vld [vmem:[#allocation2 + $0xe8] sm:$0xf]
      %v995 = vld [vmem:[#allocation2 + $0xec] sm:$0xf]
      %v996 = vld [vmem:[#allocation2 + $0xf0] sm:$0xf]
      %v997 = vld [vmem:[#allocation2 + $0xf4] sm:$0xf]
      %v998 = vld [vmem:[#allocation2 + $0xf8] sm:$0xf]
      %v999 = vld [vmem:[#allocation2 + $0xfc] sm:$0xf]
      %v1000 = vld [vmem:[%s1] sm:$0xf]
      %v1001 = vld [vmem:[%s1 + $0x4] sm:$0xf]
      %v1002 = vld [vmem:[%s1 + $0x8] sm:$0xf]
      %v1003 = vld [vmem:[%s1 + $0xc] sm:$0xf]
      %v1004 = vld [vmem:[%s1 + $0x10] sm:$0xf]
      %v1005 = vld [vmem:[%s1 + $0x14] sm:$0xf]
      %v1006 = vld [vmem:[%s1 + $0x18] sm:$0xf]
      %v1007 = vld [vmem:[%s1 + $0x1c] sm:$0xf]
      %v1008 = vld [vmem:[%s1 + $0x20] sm:$0xf]
      %v1009 = vld [vmem:[%s1 + $0x24] sm:$0xf]
      %v1010 = vld [vmem:[%s1 + $0x28] sm:$0xf]
      %v1011 = vld [vmem:[%s1 + $0x2c] sm:$0xf]
      %v1012 = vld [vmem:[%s1 + $0x30] sm:$0xf]
      %v1013 = vld [vmem:[%s1 + $0x34] sm:$0xf]
      %v1014 = vld [vmem:[%s1 + $0x38] sm:$0xf]
      %v1015 = vld [vmem:[%s1 + $0x3c] sm:$0xf]
      %v1016 = vld [vmem:[%s2] sm:$0x1]
      %v1018 = vlaneseq
      %v1019 = vshrl.u32 %v1018, 7
      %v1020 = vsub.s32 0, %v1019
      %v1021 = vrot.slane %v1016, %v1020
      %v1087 = vunpack.c.l.b16 %v936
      %v1088 = vunpack.c.l.b16 %v937
      %v1089 = vunpack.c.l.b16 %v938
      %v1090 = vunpack.c.l.b16 %v939
      %v1091 = vunpack.c.l.b16 %v940
      %v1092 = vunpack.c.l.b16 %v941
      %v1093 = vunpack.c.l.b16 %v942
      %v1094 = vunpack.c.l.b16 %v943
      %v1095 = vunpack.c.l.b16 %v944
      %v1096 = vunpack.c.l.b16 %v945
      %v1097 = vunpack.c.l.b16 %v946
      %v1098 = vunpack.c.l.b16 %v947
      %v1099 = vunpack.c.l.b16 %v948
      %v1100 = vunpack.c.l.b16 %v949
      %v1101 = vunpack.c.l.b16 %v950
      %v1102 = vunpack.c.l.b16 %v951
      %v1103 = vunpack.c.l.b16 %v952
      %v1104 = vunpack.c.l.b16 %v953
      %v1105 = vunpack.c.l.b16 %v954
      %v1106 = vunpack.c.l.b16 %v955
      %v1107 = vunpack.c.l.b16 %v956
      %v1108 = vunpack.c.l.b16 %v957
      %v1109 = vunpack.c.l.b16 %v958
      %v1110 = vunpack.c.l.b16 %v959
      %v1111 = vunpack.c.l.b16 %v960
      %v1112 = vunpack.c.l.b16 %v961
      %v1113 = vunpack.c.l.b16 %v962
      %v1114 = vunpack.c.l.b16 %v963
      %v1115 = vunpack.c.l.b16 %v964
      %v1116 = vunpack.c.l.b16 %v965
      %v1117 = vunpack.c.l.b16 %v966
      %v1118 = vunpack.c.l.b16 %v967
      %v1119 = vunpack.c.l.b16 %v968
      %v1120 = vunpack.c.l.b16 %v969
      %v1121 = vunpack.c.l.b16 %v970
      %v1122 = vunpack.c.l.b16 %v971
      %v1123 = vunpack.c.l.b16 %v972
      %v1124 = vunpack.c.l.b16 %v973
      %v1125 = vunpack.c.l.b16 %v974
      %v1126 = vunpack.c.l.b16 %v975
      %v1127 = vunpack.c.l.b16 %v976
      %v1128 = vunpack.c.l.b16 %v977
      %v1129 = vunpack.c.l.b16 %v978
      %v1130 = vunpack.c.l.b16 %v979
      %v1131 = vunpack.c.l.b16 %v980
      %v1132 = vunpack.c.l.b16 %v981
      %v1133 = vunpack.c.l.b16 %v982
      %v1134 = vunpack.c.l.b16 %v983
      %v1135 = vunpack.c.l.b16 %v984
      %v1136 = vunpack.c.l.b16 %v985
      %v1137 = vunpack.c.l.b16 %v986
      %v1138 = vunpack.c.l.b16 %v987
      %v1139 = vunpack.c.l.b16 %v988
      %v1140 = vunpack.c.l.b16 %v989
      %v1141 = vunpack.c.l.b16 %v990
      %v1142 = vunpack.c.l.b16 %v991
      %v1143 = vunpack.c.l.b16 %v992
      %v1144 = vunpack.c.l.b16 %v993
      %v1145 = vunpack.c.l.b16 %v994
      %v1146 = vunpack.c.l.b16 %v995
      %v1147 = vunpack.c.l.b16 %v996
      %v1148 = vunpack.c.l.b16 %v997
      %v1149 = vunpack.c.l.b16 %v998
      %v1150 = vunpack.c.l.b16 %v999
      %v1151 = vpack.c.b16 %v1088, %v1087
      %v1152 = vpack.c.b16 %v1090, %v1089
      %v1153 = vpack.c.b16 %v1092, %v1091
      %v1154 = vpack.c.b16 %v1094, %v1093
      %v1155 = vpack.c.b16 %v1096, %v1095
      %v1156 = vpack.c.b16 %v1098, %v1097
      %v1157 = vpack.c.b16 %v1100, %v1099
      %v1158 = vpack.c.b16 %v1102, %v1101
      %v1159 = vpack.c.b16 %v1104, %v1103
      %v1160 = vpack.c.b16 %v1106, %v1105
      %v1161 = vpack.c.b16 %v1108, %v1107
      %v1162 = vpack.c.b16 %v1110, %v1109
      %v1163 = vpack.c.b16 %v1112, %v1111
      %v1164 = vpack.c.b16 %v1114, %v1113
      %v1165 = vpack.c.b16 %v1116, %v1115
      %v1166 = vpack.c.b16 %v1118, %v1117
      %v1167 = vpack.c.b16 %v1120, %v1119
      %v1168 = vpack.c.b16 %v1122, %v1121
      %v1169 = vpack.c.b16 %v1124, %v1123
      %v1170 = vpack.c.b16 %v1126, %v1125
      %v1171 = vpack.c.b16 %v1128, %v1127
      %v1172 = vpack.c.b16 %v1130, %v1129
      %v1173 = vpack.c.b16 %v1132, %v1131
      %v1174 = vpack.c.b16 %v1134, %v1133
      %v1175 = vpack.c.b16 %v1136, %v1135
      %v1176 = vpack.c.b16 %v1138, %v1137
      %v1177 = vpack.c.b16 %v1140, %v1139
      %v1178 = vpack.c.b16 %v1142, %v1141
      %v1179 = vpack.c.b16 %v1144, %v1143
      %v1180 = vpack.c.b16 %v1146, %v1145
      %v1181 = vpack.c.b16 %v1148, %v1147
      %v1182 = vpack.c.b16 %v1150, %v1149
      %v1231 = vunpack.c.l.b16 %v1000
      %v1232 = vunpack.c.l.b16 %v1001
      %v1233 = vunpack.c.l.b16 %v1002
      %v1234 = vunpack.c.l.b16 %v1003
      %v1235 = vunpack.c.l.b16 %v1004
      %v1236 = vunpack.c.l.b16 %v1005
      %v1237 = vunpack.c.l.b16 %v1006
      %v1238 = vunpack.c.l.b16 %v1007
      %v1239 = vunpack.c.l.b16 %v1008
      %v1240 = vunpack.c.l.b16 %v1009
      %v1241 = vunpack.c.l.b16 %v1010
      %v1242 = vunpack.c.l.b16 %v1011
      %v1243 = vunpack.c.l.b16 %v1012
      %v1244 = vunpack.c.l.b16 %v1013
      %v1245 = vunpack.c.l.b16 %v1014
      %v1246 = vunpack.c.l.b16 %v1015
      %v1247 = vpack.c.b16 %v1232, %v1231
      %v1248 = vpack.c.b16 %v1234, %v1233
      %v1249 = vpack.c.b16 %v1236, %v1235
      %v1250 = vpack.c.b16 %v1238, %v1237
      %v1251 = vpack.c.b16 %v1240, %v1239
      %v1252 = vpack.c.b16 %v1242, %v1241
      %v1253 = vpack.c.b16 %v1244, %v1243
      %v1254 = vpack.c.b16 %v1246, %v1245
      %1263 = vmatprep.subr.bf16.mxu0 0
      %1264 = vmatpush1.bf16.msra.mxu0 %v1254
      %1265 = vmatprep.subr.bf16.mxu0 0
      %1266 = vmatpush1.bf16.msra.mxu0 %v1253
      %1267 = vmatprep.subr.bf16.mxu0 0
      %1268 = vmatpush1.bf16.msra.mxu0 %v1252
      %1269 = vmatprep.subr.bf16.mxu0 0
      %1270 = vmatpush1.bf16.msra.mxu0 %v1251
      %1271 = vmatprep.subr.bf16.mxu0 0
      %1272 = vmatpush1.bf16.msra.mxu0 %v1250
      %1273 = vmatprep.subr.bf16.mxu0 0
      %1274 = vmatpush1.bf16.msra.mxu0 %v1249
      %1275 = vmatprep.subr.bf16.mxu0 0
      %1276 = vmatpush1.bf16.msra.mxu0 %v1248
      %1277 = vmatprep.subr.bf16.mxu0 0
      %1278 = vmatpush1.bf16.msra.mxu0 %v1247
      %1279 = vmatprep.subr.bf16.mxu0 0
      %1280 = vmatpush2.bf16.msra.mxu0 0
      %1281 = vmatprep.subr.bf16.mxu0 0
      %1282 = vmatpush2.bf16.msra.mxu0 0
      %1283 = vmatprep.subr.bf16.mxu0 0
      %1284 = vmatpush2.bf16.msra.mxu0 0
      %1285 = vmatprep.subr.bf16.mxu0 0
      %1286 = vmatpush2.bf16.msra.mxu0 0
      %1287 = vmatprep.subr.bf16.mxu0 0
      %1288 = vmatpush2.bf16.msra.mxu0 0
      %1289 = vmatprep.subr.bf16.mxu0 0
      %1290 = vmatpush2.bf16.msra.mxu0 0
      %1291 = vmatprep.subr.bf16.mxu0 0
      %1292 = vmatpush2.bf16.msra.mxu0 0
      %1293 = vmatprep.subr.bf16.mxu0 0
      %1294 = vmatpush2.bf16.msra.mxu0 0
      %1295 = vmatprep.mubr.bf16.mxu0 0
      %1296 = vmatmul.mubr.bf16.gmra.mxu0 %v1151
      %v1297 = vpop.f32.mrf.mxu0
      %v1298 = vadd.f32 %v1021, %v1297
      %v1299 = vpop.f32.mrf.mxu0
      %v1300 = vpop.f32.mrf.mxu0
      %v1301 = vadd.f32 %v1021, %v1300
      %v1302 = vpop.f32.mrf.mxu0
      %1303 = vmatprep.mubr.bf16.mxu0 0
      %1304 = vmatmul.mubr.bf16.gmra.mxu0 %v1152
      %v1305 = vpop.f32.mrf.mxu0
      %v1306 = vadd.f32 %v1021, %v1305
      %v1307 = vpop.f32.mrf.mxu0
      %v1308 = vpop.f32.mrf.mxu0
      %v1309 = vadd.f32 %v1021, %v1308
      %v1310 = vpop.f32.mrf.mxu0
      %1311 = vmatprep.mubr.bf16.mxu0 0
      %1312 = vmatmul.mubr.bf16.gmra.mxu0 %v1153
      %v1313 = vpop.f32.mrf.mxu0
      %v1314 = vadd.f32 %v1021, %v1313
      %v1315 = vpop.f32.mrf.mxu0
      %v1316 = vpop.f32.mrf.mxu0
      %v1317 = vadd.f32 %v1021, %v1316
      %v1318 = vpop.f32.mrf.mxu0
      %1319 = vmatprep.mubr.bf16.mxu0 0
      %1320 = vmatmul.mubr.bf16.gmra.mxu0 %v1154
      %v1321 = vpop.f32.mrf.mxu0
      %v1322 = vadd.f32 %v1021, %v1321
      %v1323 = vpop.f32.mrf.mxu0
      %v1324 = vpop.f32.mrf.mxu0
      %v1325 = vadd.f32 %v1021, %v1324
      %v1326 = vpop.f32.mrf.mxu0
      %1327 = vmatprep.mubr.bf16.mxu0 0
      %1328 = vmatmul.mubr.bf16.gmra.mxu0 %v1155
      %v1329 = vpop.f32.mrf.mxu0
      %v1330 = vadd.f32 %v1021, %v1329
      %v1331 = vpop.f32.mrf.mxu0
      %v1332 = vpop.f32.mrf.mxu0
      %v1333 = vadd.f32 %v1021, %v1332
      %v1334 = vpop.f32.mrf.mxu0
      %1335 = vmatprep.mubr.bf16.mxu0 0
      %1336 = vmatmul.mubr.bf16.gmra.mxu0 %v1156
      %v1337 = vpop.f32.mrf.mxu0
      %v1338 = vadd.f32 %v1021, %v1337
      %v1339 = vpop.f32.mrf.mxu0
      %v1340 = vpop.f32.mrf.mxu0
      %v1341 = vadd.f32 %v1021, %v1340
      %v1342 = vpop.f32.mrf.mxu0
      %1343 = vmatprep.mubr.bf16.mxu0 0
      %1344 = vmatmul.mubr.bf16.gmra.mxu0 %v1157
      %v1345 = vpop.f32.mrf.mxu0
      %v1346 = vadd.f32 %v1021, %v1345
      %v1347 = vpop.f32.mrf.mxu0
      %v1348 = vpop.f32.mrf.mxu0
      %v1349 = vadd.f32 %v1021, %v1348
      %v1350 = vpop.f32.mrf.mxu0
      %1351 = vmatprep.mubr.bf16.mxu0 0
      %1352 = vmatmul.mubr.bf16.gmra.mxu0 %v1158
      %v1353 = vpop.f32.mrf.mxu0
      %v1354 = vadd.f32 %v1021, %v1353
      %v1355 = vpop.f32.mrf.mxu0
      %v1356 = vpop.f32.mrf.mxu0
      %v1357 = vadd.f32 %v1021, %v1356
      %v1358 = vpop.f32.mrf.mxu0
      %1359 = vmatprep.mubr.bf16.mxu0 0
      %1360 = vmatmul.mubr.bf16.gmra.mxu0 %v1159
      %v1361 = vpop.f32.mrf.mxu0
      %v1362 = vadd.f32 %v1021, %v1361
      %v1363 = vpop.f32.mrf.mxu0
      %v1364 = vpop.f32.mrf.mxu0
      %v1365 = vadd.f32 %v1021, %v1364
      %v1366 = vpop.f32.mrf.mxu0
      %1367 = vmatprep.mubr.bf16.mxu0 0
      %1368 = vmatmul.mubr.bf16.gmra.mxu0 %v1160
      %v1369 = vpop.f32.mrf.mxu0
      %v1370 = vadd.f32 %v1021, %v1369
      %v1371 = vpop.f32.mrf.mxu0
      %v1372 = vpop.f32.mrf.mxu0
      %v1373 = vadd.f32 %v1021, %v1372
      %v1374 = vpop.f32.mrf.mxu0
      %1375 = vmatprep.mubr.bf16.mxu0 0
      %1376 = vmatmul.mubr.bf16.gmra.mxu0 %v1161
      %v1377 = vpop.f32.mrf.mxu0
      %v1378 = vadd.f32 %v1021, %v1377
      %v1379 = vpop.f32.mrf.mxu0
      %v1380 = vpop.f32.mrf.mxu0
      %v1381 = vadd.f32 %v1021, %v1380
      %v1382 = vpop.f32.mrf.mxu0
      %1383 = vmatprep.mubr.bf16.mxu0 0
      %1384 = vmatmul.mubr.bf16.gmra.mxu0 %v1162
      %v1385 = vpop.f32.mrf.mxu0
      %v1386 = vadd.f32 %v1021, %v1385
      %v1387 = vpop.f32.mrf.mxu0
      %v1388 = vpop.f32.mrf.mxu0
      %v1389 = vadd.f32 %v1021, %v1388
      %v1390 = vpop.f32.mrf.mxu0
      %1391 = vmatprep.mubr.bf16.mxu0 0
      %1392 = vmatmul.mubr.bf16.gmra.mxu0 %v1163
      %v1393 = vpop.f32.mrf.mxu0
      %v1394 = vadd.f32 %v1021, %v1393
      %v1395 = vpop.f32.mrf.mxu0
      %v1396 = vpop.f32.mrf.mxu0
      %v1397 = vadd.f32 %v1021, %v1396
      %v1398 = vpop.f32.mrf.mxu0
      %1399 = vmatprep.mubr.bf16.mxu0 0
      %1400 = vmatmul.mubr.bf16.gmra.mxu0 %v1164
      %v1401 = vpop.f32.mrf.mxu0
      %v1402 = vadd.f32 %v1021, %v1401
      %v1403 = vpop.f32.mrf.mxu0
      %v1404 = vpop.f32.mrf.mxu0
      %v1405 = vadd.f32 %v1021, %v1404
      %v1406 = vpop.f32.mrf.mxu0
      %1407 = vmatprep.mubr.bf16.mxu0 0
      %1408 = vmatmul.mubr.bf16.gmra.mxu0 %v1165
      %v1409 = vpop.f32.mrf.mxu0
      %v1410 = vadd.f32 %v1021, %v1409
      %v1411 = vpop.f32.mrf.mxu0
      %v1412 = vpop.f32.mrf.mxu0
      %v1413 = vadd.f32 %v1021, %v1412
      %v1414 = vpop.f32.mrf.mxu0
      %1415 = vmatprep.mubr.bf16.mxu0 0
      %1416 = vmatmul.mubr.bf16.gmra.mxu0 %v1166
      %v1417 = vpop.f32.mrf.mxu0
      %v1418 = vadd.f32 %v1021, %v1417
      %v1419 = vpop.f32.mrf.mxu0
      %v1420 = vpop.f32.mrf.mxu0
      %v1421 = vadd.f32 %v1021, %v1420
      %v1422 = vpop.f32.mrf.mxu0
      %1423 = vmatprep.mubr.bf16.mxu0 0
      %1424 = vmatmul.mubr.bf16.gmra.mxu0 %v1167
      %v1425 = vpop.f32.mrf.mxu0
      %v1426 = vadd.f32 %v1021, %v1425
      %v1427 = vpop.f32.mrf.mxu0
      %v1428 = vpop.f32.mrf.mxu0
      %v1429 = vadd.f32 %v1021, %v1428
      %v1430 = vpop.f32.mrf.mxu0
      %1431 = vmatprep.mubr.bf16.mxu0 0
      %1432 = vmatmul.mubr.bf16.gmra.mxu0 %v1168
      %v1433 = vpop.f32.mrf.mxu0
      %v1434 = vadd.f32 %v1021, %v1433
      %v1435 = vpop.f32.mrf.mxu0
      %v1436 = vpop.f32.mrf.mxu0
      %v1437 = vadd.f32 %v1021, %v1436
      %v1438 = vpop.f32.mrf.mxu0
      %1439 = vmatprep.mubr.bf16.mxu0 0
      %1440 = vmatmul.mubr.bf16.gmra.mxu0 %v1169
      %v1441 = vpop.f32.mrf.mxu0
      %v1442 = vadd.f32 %v1021, %v1441
      %v1443 = vpop.f32.mrf.mxu0
      %v1444 = vpop.f32.mrf.mxu0
      %v1445 = vadd.f32 %v1021, %v1444
      %v1446 = vpop.f32.mrf.mxu0
      %1447 = vmatprep.mubr.bf16.mxu0 0
      %1448 = vmatmul.mubr.bf16.gmra.mxu0 %v1170
      %v1449 = vpop.f32.mrf.mxu0
      %v1450 = vadd.f32 %v1021, %v1449
      %v1451 = vpop.f32.mrf.mxu0
      %v1452 = vpop.f32.mrf.mxu0
      %v1453 = vadd.f32 %v1021, %v1452
      %v1454 = vpop.f32.mrf.mxu0
      %1455 = vmatprep.mubr.bf16.mxu0 0
      %1456 = vmatmul.mubr.bf16.gmra.mxu0 %v1171
      %v1457 = vpop.f32.mrf.mxu0
      %v1458 = vadd.f32 %v1021, %v1457
      %v1459 = vpop.f32.mrf.mxu0
      %v1460 = vpop.f32.mrf.mxu0
      %v1461 = vadd.f32 %v1021, %v1460
      %v1462 = vpop.f32.mrf.mxu0
      %1463 = vmatprep.mubr.bf16.mxu0 0
      %1464 = vmatmul.mubr.bf16.gmra.mxu0 %v1172
      %v1465 = vpop.f32.mrf.mxu0
      %v1466 = vadd.f32 %v1021, %v1465
      %v1467 = vpop.f32.mrf.mxu0
      %v1468 = vpop.f32.mrf.mxu0
      %v1469 = vadd.f32 %v1021, %v1468
      %v1470 = vpop.f32.mrf.mxu0
      %1471 = vmatprep.mubr.bf16.mxu0 0
      %1472 = vmatmul.mubr.bf16.gmra.mxu0 %v1173
      %v1473 = vpop.f32.mrf.mxu0
      %v1474 = vadd.f32 %v1021, %v1473
      %v1475 = vpop.f32.mrf.mxu0
      %v1476 = vpop.f32.mrf.mxu0
      %v1477 = vadd.f32 %v1021, %v1476
      %v1478 = vpop.f32.mrf.mxu0
      %1479 = vmatprep.mubr.bf16.mxu0 0
      %1480 = vmatmul.mubr.bf16.gmra.mxu0 %v1174
      %v1481 = vpop.f32.mrf.mxu0
      %v1482 = vadd.f32 %v1021, %v1481
      %v1483 = vpop.f32.mrf.mxu0
      %v1484 = vpop.f32.mrf.mxu0
      %v1485 = vadd.f32 %v1021, %v1484
      %v1486 = vpop.f32.mrf.mxu0
      %1487 = vmatprep.mubr.bf16.mxu0 0
      %1488 = vmatmul.mubr.bf16.gmra.mxu0 %v1175
      %v1489 = vpop.f32.mrf.mxu0
      %v1490 = vadd.f32 %v1021, %v1489
      %v1491 = vpop.f32.mrf.mxu0
      %v1492 = vpop.f32.mrf.mxu0
      %v1493 = vadd.f32 %v1021, %v1492
      %v1494 = vpop.f32.mrf.mxu0
      %1495 = vmatprep.mubr.bf16.mxu0 0
      %1496 = vmatmul.mubr.bf16.gmra.mxu0 %v1176
      %v1497 = vpop.f32.mrf.mxu0
      %v1498 = vadd.f32 %v1021, %v1497
      %v1499 = vpop.f32.mrf.mxu0
      %v1500 = vpop.f32.mrf.mxu0
      %v1501 = vadd.f32 %v1021, %v1500
      %v1502 = vpop.f32.mrf.mxu0
      %1503 = vmatprep.mubr.bf16.mxu0 0
      %1504 = vmatmul.mubr.bf16.gmra.mxu0 %v1177
      %v1505 = vpop.f32.mrf.mxu0
      %v1506 = vadd.f32 %v1021, %v1505
      %v1507 = vpop.f32.mrf.mxu0
      %v1508 = vpop.f32.mrf.mxu0
      %v1509 = vadd.f32 %v1021, %v1508
      %v1510 = vpop.f32.mrf.mxu0
      %1511 = vmatprep.mubr.bf16.mxu0 0
      %1512 = vmatmul.mubr.bf16.gmra.mxu0 %v1178
      %v1513 = vpop.f32.mrf.mxu0
      %v1514 = vadd.f32 %v1021, %v1513
      %v1515 = vpop.f32.mrf.mxu0
      %v1516 = vpop.f32.mrf.mxu0
      %v1517 = vadd.f32 %v1021, %v1516
      %v1518 = vpop.f32.mrf.mxu0
      %1519 = vmatprep.mubr.bf16.mxu0 0
      %1520 = vmatmul.mubr.bf16.gmra.mxu0 %v1179
      %v1521 = vpop.f32.mrf.mxu0
      %v1522 = vadd.f32 %v1021, %v1521
      %v1523 = vpop.f32.mrf.mxu0
      %v1524 = vpop.f32.mrf.mxu0
      %v1525 = vadd.f32 %v1021, %v1524
      %v1526 = vpop.f32.mrf.mxu0
      %1527 = vmatprep.mubr.bf16.mxu0 0
      %1528 = vmatmul.mubr.bf16.gmra.mxu0 %v1180
      %v1529 = vpop.f32.mrf.mxu0
      %v1530 = vadd.f32 %v1021, %v1529
      %v1531 = vpop.f32.mrf.mxu0
      %v1532 = vpop.f32.mrf.mxu0
      %v1533 = vadd.f32 %v1021, %v1532
      %v1534 = vpop.f32.mrf.mxu0
      %1535 = vmatprep.mubr.bf16.mxu0 0
      %1536 = vmatmul.mubr.bf16.gmra.mxu0 %v1181
      %v1537 = vpop.f32.mrf.mxu0
      %v1538 = vadd.f32 %v1021, %v1537
      %v1539 = vpop.f32.mrf.mxu0
      %v1540 = vpop.f32.mrf.mxu0
      %v1541 = vadd.f32 %v1021, %v1540
      %v1542 = vpop.f32.mrf.mxu0
      %1543 = vmatprep.mubr.bf16.mxu0 0
      %1544 = vmatmul.mubr.bf16.gmra.mxu0 %v1182
      %v1545 = vpop.f32.mrf.mxu0
      %v1546 = vadd.f32 %v1021, %v1545
      %v1547 = vpop.f32.mrf.mxu0
      %v1548 = vpop.f32.mrf.mxu0
      %v1549 = vadd.f32 %v1021, %v1548
      %v1550 = vpop.f32.mrf.mxu0
      %1551 = vdwg.mxu0
      %v1552 = vmax.f32 %v1298, 0.0
      %v1553 = vmax.f32 %v1301, 0.0
      %v1554 = vmax.f32 %v1306, 0.0
      %v1555 = vmax.f32 %v1309, 0.0
      %v1556 = vmax.f32 %v1314, 0.0
      %v1557 = vmax.f32 %v1317, 0.0
      %v1558 = vmax.f32 %v1322, 0.0
      %v1559 = vmax.f32 %v1325, 0.0
      %v1560 = vmax.f32 %v1330, 0.0
      %v1561 = vmax.f32 %v1333, 0.0
      %v1562 = vmax.f32 %v1338, 0.0
      %v1563 = vmax.f32 %v1341, 0.0
      %v1564 = vmax.f32 %v1346, 0.0
      %v1565 = vmax.f32 %v1349, 0.0
      %v1566 = vmax.f32 %v1354, 0.0
      %v1567 = vmax.f32 %v1357, 0.0
      %v1568 = vmax.f32 %v1362, 0.0
      %v1569 = vmax.f32 %v1365, 0.0
      %v1570 = vmax.f32 %v1370, 0.0
      %v1571 = vmax.f32 %v1373, 0.0
      %v1572 = vmax.f32 %v1378, 0.0
      %v1573 = vmax.f32 %v1381, 0.0
      %v1574 = vmax.f32 %v1386, 0.0
      %v1575 = vmax.f32 %v1389, 0.0
      %v1576 = vmax.f32 %v1394, 0.0
      %v1577 = vmax.f32 %v1397, 0.0
      %v1578 = vmax.f32 %v1402, 0.0
      %v1579 = vmax.f32 %v1405, 0.0
      %v1580 = vmax.f32 %v1410, 0.0
      %v1581 = vmax.f32 %v1413, 0.0
      %v1582 = vmax.f32 %v1418, 0.0
      %v1583 = vmax.f32 %v1421, 0.0
      %v1584 = vmax.f32 %v1426, 0.0
      %v1585 = vmax.f32 %v1429, 0.0
      %v1586 = vmax.f32 %v1434, 0.0
      %v1587 = vmax.f32 %v1437, 0.0
      %v1588 = vmax.f32 %v1442, 0.0
      %v1589 = vmax.f32 %v1445, 0.0
      %v1590 = vmax.f32 %v1450, 0.0
      %v1591 = vmax.f32 %v1453, 0.0
      %v1592 = vmax.f32 %v1458, 0.0
      %v1593 = vmax.f32 %v1461, 0.0
      %v1594 = vmax.f32 %v1466, 0.0
      %v1595 = vmax.f32 %v1469, 0.0
      %v1596 = vmax.f32 %v1474, 0.0
      %v1597 = vmax.f32 %v1477, 0.0
      %v1598 = vmax.f32 %v1482, 0.0
      %v1599 = vmax.f32 %v1485, 0.0
      %v1600 = vmax.f32 %v1490, 0.0
      %v1601 = vmax.f32 %v1493, 0.0
      %v1602 = vmax.f32 %v1498, 0.0
      %v1603 = vmax.f32 %v1501, 0.0
      %v1604 = vmax.f32 %v1506, 0.0
      %v1605 = vmax.f32 %v1509, 0.0
      %v1606 = vmax.f32 %v1514, 0.0
      %v1607 = vmax.f32 %v1517, 0.0
      %v1608 = vmax.f32 %v1522, 0.0
      %v1609 = vmax.f32 %v1525, 0.0
      %v1610 = vmax.f32 %v1530, 0.0
      %v1611 = vmax.f32 %v1533, 0.0
      %v1612 = vmax.f32 %v1538, 0.0
      %v1613 = vmax.f32 %v1541, 0.0
      %v1614 = vmax.f32 %v1546, 0.0
      %v1615 = vmax.f32 %v1549, 0.0
      %v1616 = vpack.c.bf16 %v1553, %v1552
      %v1617 = vpack.c.bf16 %v1555, %v1554
      %v1618 = vpack.c.bf16 %v1557, %v1556
      %v1619 = vpack.c.bf16 %v1559, %v1558
      %v1620 = vpack.c.bf16 %v1561, %v1560
      %v1621 = vpack.c.bf16 %v1563, %v1562
      %v1622 = vpack.c.bf16 %v1565, %v1564
      %v1623 = vpack.c.bf16 %v1567, %v1566
      %v1624 = vpack.c.bf16 %v1569, %v1568
      %v1625 = vpack.c.bf16 %v1571, %v1570
      %v1626 = vpack.c.bf16 %v1573, %v1572
      %v1627 = vpack.c.bf16 %v1575, %v1574
      %v1628 = vpack.c.bf16 %v1577, %v1576
      %v1629 = vpack.c.bf16 %v1579, %v1578
      %v1630 = vpack.c.bf16 %v1581, %v1580
      %v1631 = vpack.c.bf16 %v1583, %v1582
      %v1632 = vpack.c.bf16 %v1585, %v1584
      %v1633 = vpack.c.bf16 %v1587, %v1586
      %v1634 = vpack.c.bf16 %v1589, %v1588
      %v1635 = vpack.c.bf16 %v1591, %v1590
      %v1636 = vpack.c.bf16 %v1593, %v1592
      %v1637 = vpack.c.bf16 %v1595, %v1594
      %v1638 = vpack.c.bf16 %v1597, %v1596
      %v1639 = vpack.c.bf16 %v1599, %v1598
      %v1640 = vpack.c.bf16 %v1601, %v1600
      %v1641 = vpack.c.bf16 %v1603, %v1602
      %v1642 = vpack.c.bf16 %v1605, %v1604
      %v1643 = vpack.c.bf16 %v1607, %v1606
      %v1644 = vpack.c.bf16 %v1609, %v1608
      %v1645 = vpack.c.bf16 %v1611, %v1610
      %v1646 = vpack.c.bf16 %v1613, %v1612
      %v1647 = vpack.c.bf16 %v1615, %v1614
      %v1648 = vld [vmem:[%s3] sm:$0xf]
      %v1649 = vld [vmem:[%s3 + $0x4] sm:$0xf]
      %v1650 = vld [vmem:[%s3 + $0x8] sm:$0xf]
      %v1651 = vld [vmem:[%s3 + $0xc] sm:$0xf]
      %v1652 = vld [vmem:[%s3 + $0x10] sm:$0xf]
      %v1653 = vld [vmem:[%s3 + $0x14] sm:$0xf]
      %v1654 = vld [vmem:[%s3 + $0x18] sm:$0xf]
      %v1655 = vld [vmem:[%s3 + $0x1c] sm:$0xf]
      %v1656 = vld [vmem:[%s3 + $0x20] sm:$0xf]
      %v1657 = vld [vmem:[%s3 + $0x24] sm:$0xf]
      %v1658 = vld [vmem:[%s3 + $0x28] sm:$0xf]
      %v1659 = vld [vmem:[%s3 + $0x2c] sm:$0xf]
      %v1660 = vld [vmem:[%s3 + $0x30] sm:$0xf]
      %v1661 = vld [vmem:[%s3 + $0x34] sm:$0xf]
      %v1662 = vld [vmem:[%s3 + $0x38] sm:$0xf]
      %v1663 = vld [vmem:[%s3 + $0x3c] sm:$0xf]
      %v1664 = vld [vmem:[%s4] sm:$0x1]
      %v1666 = vlaneseq
      %v1667 = vshrl.u32 %v1666, 7
      %v1668 = vsub.s32 0, %v1667
      %v1669 = vrot.slane %v1664, %v1668
      %v1687 = vunpack.c.l.b16 %v1648
      %v1688 = vunpack.c.l.b16 %v1649
      %v1689 = vunpack.c.l.b16 %v1650
      %v1690 = vunpack.c.l.b16 %v1651
      %v1691 = vunpack.c.l.b16 %v1652
      %v1692 = vunpack.c.l.b16 %v1653
      %v1693 = vunpack.c.l.b16 %v1654
      %v1694 = vunpack.c.l.b16 %v1655
      %v1695 = vunpack.c.l.b16 %v1656
      %v1696 = vunpack.c.l.b16 %v1657
      %v1697 = vunpack.c.l.b16 %v1658
      %v1698 = vunpack.c.l.b16 %v1659
      %v1699 = vunpack.c.l.b16 %v1660
      %v1700 = vunpack.c.l.b16 %v1661
      %v1701 = vunpack.c.l.b16 %v1662
      %v1702 = vunpack.c.l.b16 %v1663
      %v1703 = vpack.c.b16 %v1688, %v1687
      %v1704 = vpack.c.b16 %v1690, %v1689
      %v1705 = vpack.c.b16 %v1692, %v1691
      %v1706 = vpack.c.b16 %v1694, %v1693
      %v1707 = vpack.c.b16 %v1696, %v1695
      %v1708 = vpack.c.b16 %v1698, %v1697
      %v1709 = vpack.c.b16 %v1700, %v1699
      %v1710 = vpack.c.b16 %v1702, %v1701
      %1719 = vmatprep.subr.bf16.mxu0 0
      %1720 = vmatpush1.bf16.msra.mxu0 %v1710
      %1721 = vmatprep.subr.bf16.mxu0 0
      %1722 = vmatpush1.bf16.msra.mxu0 %v1709
      %1723 = vmatprep.subr.bf16.mxu0 0
      %1724 = vmatpush1.bf16.msra.mxu0 %v1708
      %1725 = vmatprep.subr.bf16.mxu0 0
      %1726 = vmatpush1.bf16.msra.mxu0 %v1707
      %1727 = vmatprep.subr.bf16.mxu0 0
      %1728 = vmatpush1.bf16.msra.mxu0 %v1706
      %1729 = vmatprep.subr.bf16.mxu0 0
      %1730 = vmatpush1.bf16.msra.mxu0 %v1705
      %1731 = vmatprep.subr.bf16.mxu0 0
      %1732 = vmatpush1.bf16.msra.mxu0 %v1704
      %1733 = vmatprep.subr.bf16.mxu0 0
      %1734 = vmatpush1.bf16.msra.mxu0 %v1703
      %1735 = vmatprep.subr.bf16.mxu0 0
      %1736 = vmatpush2.bf16.msra.mxu0 0
      %1737 = vmatprep.subr.bf16.mxu0 0
      %1738 = vmatpush2.bf16.msra.mxu0 0
      %1739 = vmatprep.subr.bf16.mxu0 0
      %1740 = vmatpush2.bf16.msra.mxu0 0
      %1741 = vmatprep.subr.bf16.mxu0 0
      %1742 = vmatpush2.bf16.msra.mxu0 0
      %1743 = vmatprep.subr.bf16.mxu0 0
      %1744 = vmatpush2.bf16.msra.mxu0 0
      %1745 = vmatprep.subr.bf16.mxu0 0
      %1746 = vmatpush2.bf16.msra.mxu0 0
      %1747 = vmatprep.subr.bf16.mxu0 0
      %1748 = vmatpush2.bf16.msra.mxu0 0
      %1749 = vmatprep.subr.bf16.mxu0 0
      %1750 = vmatpush2.bf16.msra.mxu0 0
      %1751 = vmatprep.mubr.bf16.mxu0 0
      %1752 = vmatmul.mubr.bf16.gmra.mxu0 %v1616
      %v1753 = vpop.f32.mrf.mxu0
      %v1754 = vadd.f32 %v1669, %v1753
      %v1755 = vpop.f32.mrf.mxu0
      %v1756 = vpop.f32.mrf.mxu0
      %v1757 = vadd.f32 %v1669, %v1756
      %v1758 = vpop.f32.mrf.mxu0
      %1759 = vmatprep.mubr.bf16.mxu0 0
      %1760 = vmatmul.mubr.bf16.gmra.mxu0 %v1617
      %v1761 = vpop.f32.mrf.mxu0
      %v1762 = vadd.f32 %v1669, %v1761
      %v1763 = vpop.f32.mrf.mxu0
      %v1764 = vpop.f32.mrf.mxu0
      %v1765 = vadd.f32 %v1669, %v1764
      %v1766 = vpop.f32.mrf.mxu0
      %1767 = vmatprep.mubr.bf16.mxu0 0
      %1768 = vmatmul.mubr.bf16.gmra.mxu0 %v1618
      %v1769 = vpop.f32.mrf.mxu0
      %v1770 = vadd.f32 %v1669, %v1769
      %v1771 = vpop.f32.mrf.mxu0
      %v1772 = vpop.f32.mrf.mxu0
      %v1773 = vadd.f32 %v1669, %v1772
      %v1774 = vpop.f32.mrf.mxu0
      %1775 = vmatprep.mubr.bf16.mxu0 0
      %1776 = vmatmul.mubr.bf16.gmra.mxu0 %v1619
      %v1777 = vpop.f32.mrf.mxu0
      %v1778 = vadd.f32 %v1669, %v1777
      %v1779 = vpop.f32.mrf.mxu0
      %v1780 = vpop.f32.mrf.mxu0
      %v1781 = vadd.f32 %v1669, %v1780
      %v1782 = vpop.f32.mrf.mxu0
      %1783 = vmatprep.mubr.bf16.mxu0 0
      %1784 = vmatmul.mubr.bf16.gmra.mxu0 %v1620
      %v1785 = vpop.f32.mrf.mxu0
      %v1786 = vadd.f32 %v1669, %v1785
      %v1787 = vpop.f32.mrf.mxu0
      %v1788 = vpop.f32.mrf.mxu0
      %v1789 = vadd.f32 %v1669, %v1788
      %v1790 = vpop.f32.mrf.mxu0
      %1791 = vmatprep.mubr.bf16.mxu0 0
      %1792 = vmatmul.mubr.bf16.gmra.mxu0 %v1621
      %v1793 = vpop.f32.mrf.mxu0
      %v1794 = vadd.f32 %v1669, %v1793
      %v1795 = vpop.f32.mrf.mxu0
      %v1796 = vpop.f32.mrf.mxu0
      %v1797 = vadd.f32 %v1669, %v1796
      %v1798 = vpop.f32.mrf.mxu0
      %1799 = vmatprep.mubr.bf16.mxu0 0
      %1800 = vmatmul.mubr.bf16.gmra.mxu0 %v1622
      %v1801 = vpop.f32.mrf.mxu0
      %v1802 = vadd.f32 %v1669, %v1801
      %v1803 = vpop.f32.mrf.mxu0
      %v1804 = vpop.f32.mrf.mxu0
      %v1805 = vadd.f32 %v1669, %v1804
      %v1806 = vpop.f32.mrf.mxu0
      %1807 = vmatprep.mubr.bf16.mxu0 0
      %1808 = vmatmul.mubr.bf16.gmra.mxu0 %v1623
      %v1809 = vpop.f32.mrf.mxu0
      %v1810 = vadd.f32 %v1669, %v1809
      %v1811 = vpop.f32.mrf.mxu0
      %v1812 = vpop.f32.mrf.mxu0
      %v1813 = vadd.f32 %v1669, %v1812
      %v1814 = vpop.f32.mrf.mxu0
      %1815 = vmatprep.mubr.bf16.mxu0 0
      %1816 = vmatmul.mubr.bf16.gmra.mxu0 %v1624
      %v1817 = vpop.f32.mrf.mxu0
      %v1818 = vadd.f32 %v1669, %v1817
      %v1819 = vpop.f32.mrf.mxu0
      %v1820 = vpop.f32.mrf.mxu0
      %v1821 = vadd.f32 %v1669, %v1820
      %v1822 = vpop.f32.mrf.mxu0
      %1823 = vmatprep.mubr.bf16.mxu0 0
      %1824 = vmatmul.mubr.bf16.gmra.mxu0 %v1625
      %v1825 = vpop.f32.mrf.mxu0
      %v1826 = vadd.f32 %v1669, %v1825
      %v1827 = vpop.f32.mrf.mxu0
      %v1828 = vpop.f32.mrf.mxu0
      %v1829 = vadd.f32 %v1669, %v1828
      %v1830 = vpop.f32.mrf.mxu0
      %1831 = vmatprep.mubr.bf16.mxu0 0
      %1832 = vmatmul.mubr.bf16.gmra.mxu0 %v1626
      %v1833 = vpop.f32.mrf.mxu0
      %v1834 = vadd.f32 %v1669, %v1833
      %v1835 = vpop.f32.mrf.mxu0
      %v1836 = vpop.f32.mrf.mxu0
      %v1837 = vadd.f32 %v1669, %v1836
      %v1838 = vpop.f32.mrf.mxu0
      %1839 = vmatprep.mubr.bf16.mxu0 0
      %1840 = vmatmul.mubr.bf16.gmra.mxu0 %v1627
      %v1841 = vpop.f32.mrf.mxu0
      %v1842 = vadd.f32 %v1669, %v1841
      %v1843 = vpop.f32.mrf.mxu0
      %v1844 = vpop.f32.mrf.mxu0
      %v1845 = vadd.f32 %v1669, %v1844
      %v1846 = vpop.f32.mrf.mxu0
      %1847 = vmatprep.mubr.bf16.mxu0 0
      %1848 = vmatmul.mubr.bf16.gmra.mxu0 %v1628
      %v1849 = vpop.f32.mrf.mxu0
      %v1850 = vadd.f32 %v1669, %v1849
      %v1851 = vpop.f32.mrf.mxu0
      %v1852 = vpop.f32.mrf.mxu0
      %v1853 = vadd.f32 %v1669, %v1852
      %v1854 = vpop.f32.mrf.mxu0
      %1855 = vmatprep.mubr.bf16.mxu0 0
      %1856 = vmatmul.mubr.bf16.gmra.mxu0 %v1629
      %v1857 = vpop.f32.mrf.mxu0
      %v1858 = vadd.f32 %v1669, %v1857
      %v1859 = vpop.f32.mrf.mxu0
      %v1860 = vpop.f32.mrf.mxu0
      %v1861 = vadd.f32 %v1669, %v1860
      %v1862 = vpop.f32.mrf.mxu0
      %1863 = vmatprep.mubr.bf16.mxu0 0
      %1864 = vmatmul.mubr.bf16.gmra.mxu0 %v1630
      %v1865 = vpop.f32.mrf.mxu0
      %v1866 = vadd.f32 %v1669, %v1865
      %v1867 = vpop.f32.mrf.mxu0
      %v1868 = vpop.f32.mrf.mxu0
      %v1869 = vadd.f32 %v1669, %v1868
      %v1870 = vpop.f32.mrf.mxu0
      %1871 = vmatprep.mubr.bf16.mxu0 0
      %1872 = vmatmul.mubr.bf16.gmra.mxu0 %v1631
      %v1873 = vpop.f32.mrf.mxu0
      %v1874 = vadd.f32 %v1669, %v1873
      %v1875 = vpop.f32.mrf.mxu0
      %v1876 = vpop.f32.mrf.mxu0
      %v1877 = vadd.f32 %v1669, %v1876
      %v1878 = vpop.f32.mrf.mxu0
      %1879 = vmatprep.mubr.bf16.mxu0 0
      %1880 = vmatmul.mubr.bf16.gmra.mxu0 %v1632
      %v1881 = vpop.f32.mrf.mxu0
      %v1882 = vadd.f32 %v1669, %v1881
      %v1883 = vpop.f32.mrf.mxu0
      %v1884 = vpop.f32.mrf.mxu0
      %v1885 = vadd.f32 %v1669, %v1884
      %v1886 = vpop.f32.mrf.mxu0
      %1887 = vmatprep.mubr.bf16.mxu0 0
      %1888 = vmatmul.mubr.bf16.gmra.mxu0 %v1633
      %v1889 = vpop.f32.mrf.mxu0
      %v1890 = vadd.f32 %v1669, %v1889
      %v1891 = vpop.f32.mrf.mxu0
      %v1892 = vpop.f32.mrf.mxu0
      %v1893 = vadd.f32 %v1669, %v1892
      %v1894 = vpop.f32.mrf.mxu0
      %1895 = vmatprep.mubr.bf16.mxu0 0
      %1896 = vmatmul.mubr.bf16.gmra.mxu0 %v1634
      %v1897 = vpop.f32.mrf.mxu0
      %v1898 = vadd.f32 %v1669, %v1897
      %v1899 = vpop.f32.mrf.mxu0
      %v1900 = vpop.f32.mrf.mxu0
      %v1901 = vadd.f32 %v1669, %v1900
      %v1902 = vpop.f32.mrf.mxu0
      %1903 = vmatprep.mubr.bf16.mxu0 0
      %1904 = vmatmul.mubr.bf16.gmra.mxu0 %v1635
      %v1905 = vpop.f32.mrf.mxu0
      %v1906 = vadd.f32 %v1669, %v1905
      %v1907 = vpop.f32.mrf.mxu0
      %v1908 = vpop.f32.mrf.mxu0
      %v1909 = vadd.f32 %v1669, %v1908
      %v1910 = vpop.f32.mrf.mxu0
      %1911 = vmatprep.mubr.bf16.mxu0 0
      %1912 = vmatmul.mubr.bf16.gmra.mxu0 %v1636
      %v1913 = vpop.f32.mrf.mxu0
      %v1914 = vadd.f32 %v1669, %v1913
      %v1915 = vpop.f32.mrf.mxu0
      %v1916 = vpop.f32.mrf.mxu0
      %v1917 = vadd.f32 %v1669, %v1916
      %v1918 = vpop.f32.mrf.mxu0
      %1919 = vmatprep.mubr.bf16.mxu0 0
      %1920 = vmatmul.mubr.bf16.gmra.mxu0 %v1637
      %v1921 = vpop.f32.mrf.mxu0
      %v1922 = vadd.f32 %v1669, %v1921
      %v1923 = vpop.f32.mrf.mxu0
      %v1924 = vpop.f32.mrf.mxu0
      %v1925 = vadd.f32 %v1669, %v1924
      %v1926 = vpop.f32.mrf.mxu0
      %1927 = vmatprep.mubr.bf16.mxu0 0
      %1928 = vmatmul.mubr.bf16.gmra.mxu0 %v1638
      %v1929 = vpop.f32.mrf.mxu0
      %v1930 = vadd.f32 %v1669, %v1929
      %v1931 = vpop.f32.mrf.mxu0
      %v1932 = vpop.f32.mrf.mxu0
      %v1933 = vadd.f32 %v1669, %v1932
      %v1934 = vpop.f32.mrf.mxu0
      %1935 = vmatprep.mubr.bf16.mxu0 0
      %1936 = vmatmul.mubr.bf16.gmra.mxu0 %v1639
      %v1937 = vpop.f32.mrf.mxu0
      %v1938 = vadd.f32 %v1669, %v1937
      %v1939 = vpop.f32.mrf.mxu0
      %v1940 = vpop.f32.mrf.mxu0
      %v1941 = vadd.f32 %v1669, %v1940
      %v1942 = vpop.f32.mrf.mxu0
      %1943 = vmatprep.mubr.bf16.mxu0 0
      %1944 = vmatmul.mubr.bf16.gmra.mxu0 %v1640
      %v1945 = vpop.f32.mrf.mxu0
      %v1946 = vadd.f32 %v1669, %v1945
      %v1947 = vpop.f32.mrf.mxu0
      %v1948 = vpop.f32.mrf.mxu0
      %v1949 = vadd.f32 %v1669, %v1948
      %v1950 = vpop.f32.mrf.mxu0
      %1951 = vmatprep.mubr.bf16.mxu0 0
      %1952 = vmatmul.mubr.bf16.gmra.mxu0 %v1641
      %v1953 = vpop.f32.mrf.mxu0
      %v1954 = vadd.f32 %v1669, %v1953
      %v1955 = vpop.f32.mrf.mxu0
      %v1956 = vpop.f32.mrf.mxu0
      %v1957 = vadd.f32 %v1669, %v1956
      %v1958 = vpop.f32.mrf.mxu0
      %1959 = vmatprep.mubr.bf16.mxu0 0
      %1960 = vmatmul.mubr.bf16.gmra.mxu0 %v1642
      %v1961 = vpop.f32.mrf.mxu0
      %v1962 = vadd.f32 %v1669, %v1961
      %v1963 = vpop.f32.mrf.mxu0
      %v1964 = vpop.f32.mrf.mxu0
      %v1965 = vadd.f32 %v1669, %v1964
      %v1966 = vpop.f32.mrf.mxu0
      %1967 = vmatprep.mubr.bf16.mxu0 0
      %1968 = vmatmul.mubr.bf16.gmra.mxu0 %v1643
      %v1969 = vpop.f32.mrf.mxu0
      %v1970 = vadd.f32 %v1669, %v1969
      %v1971 = vpop.f32.mrf.mxu0
      %v1972 = vpop.f32.mrf.mxu0
      %v1973 = vadd.f32 %v1669, %v1972
      %v1974 = vpop.f32.mrf.mxu0
      %1975 = vmatprep.mubr.bf16.mxu0 0
      %1976 = vmatmul.mubr.bf16.gmra.mxu0 %v1644
      %v1977 = vpop.f32.mrf.mxu0
      %v1978 = vadd.f32 %v1669, %v1977
      %v1979 = vpop.f32.mrf.mxu0
      %v1980 = vpop.f32.mrf.mxu0
      %v1981 = vadd.f32 %v1669, %v1980
      %v1982 = vpop.f32.mrf.mxu0
      %1983 = vmatprep.mubr.bf16.mxu0 0
      %1984 = vmatmul.mubr.bf16.gmra.mxu0 %v1645
      %v1985 = vpop.f32.mrf.mxu0
      %v1986 = vadd.f32 %v1669, %v1985
      %v1987 = vpop.f32.mrf.mxu0
      %v1988 = vpop.f32.mrf.mxu0
      %v1989 = vadd.f32 %v1669, %v1988
      %v1990 = vpop.f32.mrf.mxu0
      %1991 = vmatprep.mubr.bf16.mxu0 0
      %1992 = vmatmul.mubr.bf16.gmra.mxu0 %v1646
      %v1993 = vpop.f32.mrf.mxu0
      %v1994 = vadd.f32 %v1669, %v1993
      %v1995 = vpop.f32.mrf.mxu0
      %v1996 = vpop.f32.mrf.mxu0
      %v1997 = vadd.f32 %v1669, %v1996
      %v1998 = vpop.f32.mrf.mxu0
      %1999 = vmatprep.mubr.bf16.mxu0 0
      %2000 = vmatmul.mubr.bf16.gmra.mxu0 %v1647
      %v2001 = vpop.f32.mrf.mxu0
      %v2002 = vadd.f32 %v1669, %v2001
      %v2003 = vpop.f32.mrf.mxu0
      %v2004 = vpop.f32.mrf.mxu0
      %v2005 = vadd.f32 %v1669, %v2004
      %v2006 = vpop.f32.mrf.mxu0
      %2007 = vdwg.mxu0
      %v2008 = vmax.f32 %v1754, 0.0
      %v2009 = vmax.f32 %v1757, 0.0
      %v2010 = vmax.f32 %v1762, 0.0
      %v2011 = vmax.f32 %v1765, 0.0
      %v2012 = vmax.f32 %v1770, 0.0
      %v2013 = vmax.f32 %v1773, 0.0
      %v2014 = vmax.f32 %v1778, 0.0
      %v2015 = vmax.f32 %v1781, 0.0
      %v2016 = vmax.f32 %v1786, 0.0
      %v2017 = vmax.f32 %v1789, 0.0
      %v2018 = vmax.f32 %v1794, 0.0
      %v2019 = vmax.f32 %v1797, 0.0
      %v2020 = vmax.f32 %v1802, 0.0
      %v2021 = vmax.f32 %v1805, 0.0
      %v2022 = vmax.f32 %v1810, 0.0
      %v2023 = vmax.f32 %v1813, 0.0
      %v2024 = vmax.f32 %v1818, 0.0
      %v2025 = vmax.f32 %v1821, 0.0
      %v2026 = vmax.f32 %v1826, 0.0
      %v2027 = vmax.f32 %v1829, 0.0
      %v2028 = vmax.f32 %v1834, 0.0
      %v2029 = vmax.f32 %v1837, 0.0
      %v2030 = vmax.f32 %v1842, 0.0
      %v2031 = vmax.f32 %v1845, 0.0
      %v2032 = vmax.f32 %v1850, 0.0
      %v2033 = vmax.f32 %v1853, 0.0
      %v2034 = vmax.f32 %v1858, 0.0
      %v2035 = vmax.f32 %v1861, 0.0
      %v2036 = vmax.f32 %v1866, 0.0
      %v2037 = vmax.f32 %v1869, 0.0
      %v2038 = vmax.f32 %v1874, 0.0
      %v2039 = vmax.f32 %v1877, 0.0
      %v2040 = vmax.f32 %v1882, 0.0
      %v2041 = vmax.f32 %v1885, 0.0
      %v2042 = vmax.f32 %v1890, 0.0
      %v2043 = vmax.f32 %v1893, 0.0
      %v2044 = vmax.f32 %v1898, 0.0
      %v2045 = vmax.f32 %v1901, 0.0
      %v2046 = vmax.f32 %v1906, 0.0
      %v2047 = vmax.f32 %v1909, 0.0
      %v2048 = vmax.f32 %v1914, 0.0
      %v2049 = vmax.f32 %v1917, 0.0
      %v2050 = vmax.f32 %v1922, 0.0
      %v2051 = vmax.f32 %v1925, 0.0
      %v2052 = vmax.f32 %v1930, 0.0
      %v2053 = vmax.f32 %v1933, 0.0
      %v2054 = vmax.f32 %v1938, 0.0
      %v2055 = vmax.f32 %v1941, 0.0
      %v2056 = vmax.f32 %v1946, 0.0
      %v2057 = vmax.f32 %v1949, 0.0
      %v2058 = vmax.f32 %v1954, 0.0
      %v2059 = vmax.f32 %v1957, 0.0
      %v2060 = vmax.f32 %v1962, 0.0
      %v2061 = vmax.f32 %v1965, 0.0
      %v2062 = vmax.f32 %v1970, 0.0
      %v2063 = vmax.f32 %v1973, 0.0
      %v2064 = vmax.f32 %v1978, 0.0
      %v2065 = vmax.f32 %v1981, 0.0
      %v2066 = vmax.f32 %v1986, 0.0
      %v2067 = vmax.f32 %v1989, 0.0
      %v2068 = vmax.f32 %v1994, 0.0
      %v2069 = vmax.f32 %v1997, 0.0
      %v2070 = vmax.f32 %v2002, 0.0
      %v2071 = vmax.f32 %v2005, 0.0
      %v2072 = vpack.c.bf16 %v2009, %v2008
      %v2073 = vpack.c.bf16 %v2011, %v2010
      %v2074 = vpack.c.bf16 %v2013, %v2012
      %v2075 = vpack.c.bf16 %v2015, %v2014
      %v2076 = vpack.c.bf16 %v2017, %v2016
      %v2077 = vpack.c.bf16 %v2019, %v2018
      %v2078 = vpack.c.bf16 %v2021, %v2020
      %v2079 = vpack.c.bf16 %v2023, %v2022
      %v2080 = vpack.c.bf16 %v2025, %v2024
      %v2081 = vpack.c.bf16 %v2027, %v2026
      %v2082 = vpack.c.bf16 %v2029, %v2028
      %v2083 = vpack.c.bf16 %v2031, %v2030
      %v2084 = vpack.c.bf16 %v2033, %v2032
      %v2085 = vpack.c.bf16 %v2035, %v2034
      %v2086 = vpack.c.bf16 %v2037, %v2036
      %v2087 = vpack.c.bf16 %v2039, %v2038
      %v2088 = vpack.c.bf16 %v2041, %v2040
      %v2089 = vpack.c.bf16 %v2043, %v2042
      %v2090 = vpack.c.bf16 %v2045, %v2044
      %v2091 = vpack.c.bf16 %v2047, %v2046
      %v2092 = vpack.c.bf16 %v2049, %v2048
      %v2093 = vpack.c.bf16 %v2051, %v2050
      %v2094 = vpack.c.bf16 %v2053, %v2052
      %v2095 = vpack.c.bf16 %v2055, %v2054
      %v2096 = vpack.c.bf16 %v2057, %v2056
      %v2097 = vpack.c.bf16 %v2059, %v2058
      %v2098 = vpack.c.bf16 %v2061, %v2060
      %v2099 = vpack.c.bf16 %v2063, %v2062
      %v2100 = vpack.c.bf16 %v2065, %v2064
      %v2101 = vpack.c.bf16 %v2067, %v2066
      %v2102 = vpack.c.bf16 %v2069, %v2068
      %v2103 = vpack.c.bf16 %v2071, %v2070
      %v2104 = vld [vmem:[%s5] sm:$0xf]
      %v2105 = vld [vmem:[%s5 + $0x4] sm:$0xf]
      %v2106 = vld [vmem:[%s5 + $0x8] sm:$0xf]
      %v2107 = vld [vmem:[%s5 + $0xc] sm:$0xf]
      %v2108 = vld [vmem:[%s5 + $0x10] sm:$0xf]
      %v2109 = vld [vmem:[%s5 + $0x14] sm:$0xf]
      %v2110 = vld [vmem:[%s5 + $0x18] sm:$0xf]
      %v2111 = vld [vmem:[%s5 + $0x1c] sm:$0xf]
      %v2112 = vld [vmem:[%s5 + $0x20] sm:$0xf]
      %v2113 = vld [vmem:[%s5 + $0x24] sm:$0xf]
      %v2114 = vld [vmem:[%s5 + $0x28] sm:$0xf]
      %v2115 = vld [vmem:[%s5 + $0x2c] sm:$0xf]
      %v2116 = vld [vmem:[%s5 + $0x30] sm:$0xf]
      %v2117 = vld [vmem:[%s5 + $0x34] sm:$0xf]
      %v2118 = vld [vmem:[%s5 + $0x38] sm:$0xf]
      %v2119 = vld [vmem:[%s5 + $0x3c] sm:$0xf]
      %v2120 = vld [vmem:[%s6] sm:$0x1]
      %v2122 = vlaneseq
      %v2123 = vshrl.u32 %v2122, 7
      %v2124 = vsub.s32 0, %v2123
      %v2125 = vrot.slane %v2120, %v2124
      %v2143 = vunpack.c.l.b16 %v2104
      %v2144 = vunpack.c.l.b16 %v2105
      %v2145 = vunpack.c.l.b16 %v2106
      %v2146 = vunpack.c.l.b16 %v2107
      %v2147 = vunpack.c.l.b16 %v2108
      %v2148 = vunpack.c.l.b16 %v2109
      %v2149 = vunpack.c.l.b16 %v2110
      %v2150 = vunpack.c.l.b16 %v2111
      %v2151 = vunpack.c.l.b16 %v2112
      %v2152 = vunpack.c.l.b16 %v2113
      %v2153 = vunpack.c.l.b16 %v2114
      %v2154 = vunpack.c.l.b16 %v2115
      %v2155 = vunpack.c.l.b16 %v2116
      %v2156 = vunpack.c.l.b16 %v2117
      %v2157 = vunpack.c.l.b16 %v2118
      %v2158 = vunpack.c.l.b16 %v2119
      %v2159 = vpack.c.b16 %v2144, %v2143
      %v2160 = vpack.c.b16 %v2146, %v2145
      %v2161 = vpack.c.b16 %v2148, %v2147
      %v2162 = vpack.c.b16 %v2150, %v2149
      %v2163 = vpack.c.b16 %v2152, %v2151
      %v2164 = vpack.c.b16 %v2154, %v2153
      %v2165 = vpack.c.b16 %v2156, %v2155
      %v2166 = vpack.c.b16 %v2158, %v2157
      %2175 = vmatprep.subr.bf16.mxu0 0
      %2176 = vmatpush1.bf16.msra.mxu0 %v2166
      %2177 = vmatprep.subr.bf16.mxu0 0
      %2178 = vmatpush1.bf16.msra.mxu0 %v2165
      %2179 = vmatprep.subr.bf16.mxu0 0
      %2180 = vmatpush1.bf16.msra.mxu0 %v2164
      %2181 = vmatprep.subr.bf16.mxu0 0
      %2182 = vmatpush1.bf16.msra.mxu0 %v2163
      %2183 = vmatprep.subr.bf16.mxu0 0
      %2184 = vmatpush1.bf16.msra.mxu0 %v2162
      %2185 = vmatprep.subr.bf16.mxu0 0
      %2186 = vmatpush1.bf16.msra.mxu0 %v2161
      %2187 = vmatprep.subr.bf16.mxu0 0
      %2188 = vmatpush1.bf16.msra.mxu0 %v2160
      %2189 = vmatprep.subr.bf16.mxu0 0
      %2190 = vmatpush1.bf16.msra.mxu0 %v2159
      %2191 = vmatprep.subr.bf16.mxu0 0
      %2192 = vmatpush2.bf16.msra.mxu0 0
      %2193 = vmatprep.subr.bf16.mxu0 0
      %2194 = vmatpush2.bf16.msra.mxu0 0
      %2195 = vmatprep.subr.bf16.mxu0 0
      %2196 = vmatpush2.bf16.msra.mxu0 0
      %2197 = vmatprep.subr.bf16.mxu0 0
      %2198 = vmatpush2.bf16.msra.mxu0 0
      %2199 = vmatprep.subr.bf16.mxu0 0
      %2200 = vmatpush2.bf16.msra.mxu0 0
      %2201 = vmatprep.subr.bf16.mxu0 0
      %2202 = vmatpush2.bf16.msra.mxu0 0
      %2203 = vmatprep.subr.bf16.mxu0 0
      %2204 = vmatpush2.bf16.msra.mxu0 0
      %2205 = vmatprep.subr.bf16.mxu0 0
      %2206 = vmatpush2.bf16.msra.mxu0 0
      %2207 = vmatprep.mubr.bf16.mxu0 0
      %2208 = vmatmul.mubr.bf16.gmra.mxu0 %v2072
      %v2209 = vpop.f32.mrf.mxu0
      %v2210 = vadd.f32 %v2125, %v2209
      %v2211 = vpop.f32.mrf.mxu0
      %v2212 = vpop.f32.mrf.mxu0
      %v2213 = vadd.f32 %v2125, %v2212
      %v2214 = vpop.f32.mrf.mxu0
      %2215 = vmatprep.mubr.bf16.mxu0 0
      %2216 = vmatmul.mubr.bf16.gmra.mxu0 %v2073
      %v2217 = vpop.f32.mrf.mxu0
      %v2218 = vadd.f32 %v2125, %v2217
      %v2219 = vpop.f32.mrf.mxu0
      %v2220 = vpop.f32.mrf.mxu0
      %v2221 = vadd.f32 %v2125, %v2220
      %v2222 = vpop.f32.mrf.mxu0
      %2223 = vmatprep.mubr.bf16.mxu0 0
      %2224 = vmatmul.mubr.bf16.gmra.mxu0 %v2074
      %v2225 = vpop.f32.mrf.mxu0
      %v2226 = vadd.f32 %v2125, %v2225
      %v2227 = vpop.f32.mrf.mxu0
      %v2228 = vpop.f32.mrf.mxu0
      %v2229 = vadd.f32 %v2125, %v2228
      %v2230 = vpop.f32.mrf.mxu0
      %2231 = vmatprep.mubr.bf16.mxu0 0
      %2232 = vmatmul.mubr.bf16.gmra.mxu0 %v2075
      %v2233 = vpop.f32.mrf.mxu0
      %v2234 = vadd.f32 %v2125, %v2233
      %v2235 = vpop.f32.mrf.mxu0
      %v2236 = vpop.f32.mrf.mxu0
      %v2237 = vadd.f32 %v2125, %v2236
      %v2238 = vpop.f32.mrf.mxu0
      %2239 = vmatprep.mubr.bf16.mxu0 0
      %2240 = vmatmul.mubr.bf16.gmra.mxu0 %v2076
      %v2241 = vpop.f32.mrf.mxu0
      %v2242 = vadd.f32 %v2125, %v2241
      %v2243 = vpop.f32.mrf.mxu0
      %v2244 = vpop.f32.mrf.mxu0
      %v2245 = vadd.f32 %v2125, %v2244
      %v2246 = vpop.f32.mrf.mxu0
      %2247 = vmatprep.mubr.bf16.mxu0 0
      %2248 = vmatmul.mubr.bf16.gmra.mxu0 %v2077
      %v2249 = vpop.f32.mrf.mxu0
      %v2250 = vadd.f32 %v2125, %v2249
      %v2251 = vpop.f32.mrf.mxu0
      %v2252 = vpop.f32.mrf.mxu0
      %v2253 = vadd.f32 %v2125, %v2252
      %v2254 = vpop.f32.mrf.mxu0
      %2255 = vmatprep.mubr.bf16.mxu0 0
      %2256 = vmatmul.mubr.bf16.gmra.mxu0 %v2078
      %v2257 = vpop.f32.mrf.mxu0
      %v2258 = vadd.f32 %v2125, %v2257
      %v2259 = vpop.f32.mrf.mxu0
      %v2260 = vpop.f32.mrf.mxu0
      %v2261 = vadd.f32 %v2125, %v2260
      %v2262 = vpop.f32.mrf.mxu0
      %2263 = vmatprep.mubr.bf16.mxu0 0
      %2264 = vmatmul.mubr.bf16.gmra.mxu0 %v2079
      %v2265 = vpop.f32.mrf.mxu0
      %v2266 = vadd.f32 %v2125, %v2265
      %v2267 = vpop.f32.mrf.mxu0
      %v2268 = vpop.f32.mrf.mxu0
      %v2269 = vadd.f32 %v2125, %v2268
      %v2270 = vpop.f32.mrf.mxu0
      %2271 = vmatprep.mubr.bf16.mxu0 0
      %2272 = vmatmul.mubr.bf16.gmra.mxu0 %v2080
      %v2273 = vpop.f32.mrf.mxu0
      %v2274 = vadd.f32 %v2125, %v2273
      %v2275 = vpop.f32.mrf.mxu0
      %v2276 = vpop.f32.mrf.mxu0
      %v2277 = vadd.f32 %v2125, %v2276
      %v2278 = vpop.f32.mrf.mxu0
      %2279 = vmatprep.mubr.bf16.mxu0 0
      %2280 = vmatmul.mubr.bf16.gmra.mxu0 %v2081
      %v2281 = vpop.f32.mrf.mxu0
      %v2282 = vadd.f32 %v2125, %v2281
      %v2283 = vpop.f32.mrf.mxu0
      %v2284 = vpop.f32.mrf.mxu0
      %v2285 = vadd.f32 %v2125, %v2284
      %v2286 = vpop.f32.mrf.mxu0
      %2287 = vmatprep.mubr.bf16.mxu0 0
      %2288 = vmatmul.mubr.bf16.gmra.mxu0 %v2082
      %v2289 = vpop.f32.mrf.mxu0
      %v2290 = vadd.f32 %v2125, %v2289
      %v2291 = vpop.f32.mrf.mxu0
      %v2292 = vpop.f32.mrf.mxu0
      %v2293 = vadd.f32 %v2125, %v2292
      %v2294 = vpop.f32.mrf.mxu0
      %2295 = vmatprep.mubr.bf16.mxu0 0
      %2296 = vmatmul.mubr.bf16.gmra.mxu0 %v2083
      %v2297 = vpop.f32.mrf.mxu0
      %v2298 = vadd.f32 %v2125, %v2297
      %v2299 = vpop.f32.mrf.mxu0
      %v2300 = vpop.f32.mrf.mxu0
      %v2301 = vadd.f32 %v2125, %v2300
      %v2302 = vpop.f32.mrf.mxu0
      %2303 = vmatprep.mubr.bf16.mxu0 0
      %2304 = vmatmul.mubr.bf16.gmra.mxu0 %v2084
      %v2305 = vpop.f32.mrf.mxu0
      %v2306 = vadd.f32 %v2125, %v2305
      %v2307 = vpop.f32.mrf.mxu0
      %v2308 = vpop.f32.mrf.mxu0
      %v2309 = vadd.f32 %v2125, %v2308
      %v2310 = vpop.f32.mrf.mxu0
      %2311 = vmatprep.mubr.bf16.mxu0 0
      %2312 = vmatmul.mubr.bf16.gmra.mxu0 %v2085
      %v2313 = vpop.f32.mrf.mxu0
      %v2314 = vadd.f32 %v2125, %v2313
      %v2315 = vpop.f32.mrf.mxu0
      %v2316 = vpop.f32.mrf.mxu0
      %v2317 = vadd.f32 %v2125, %v2316
      %v2318 = vpop.f32.mrf.mxu0
      %2319 = vmatprep.mubr.bf16.mxu0 0
      %2320 = vmatmul.mubr.bf16.gmra.mxu0 %v2086
      %v2321 = vpop.f32.mrf.mxu0
      %v2322 = vadd.f32 %v2125, %v2321
      %v2323 = vpop.f32.mrf.mxu0
      %v2324 = vpop.f32.mrf.mxu0
      %v2325 = vadd.f32 %v2125, %v2324
      %v2326 = vpop.f32.mrf.mxu0
      %2327 = vmatprep.mubr.bf16.mxu0 0
      %2328 = vmatmul.mubr.bf16.gmra.mxu0 %v2087
      %v2329 = vpop.f32.mrf.mxu0
      %v2330 = vadd.f32 %v2125, %v2329
      %v2331 = vpop.f32.mrf.mxu0
      %v2332 = vpop.f32.mrf.mxu0
      %v2333 = vadd.f32 %v2125, %v2332
      %v2334 = vpop.f32.mrf.mxu0
      %2335 = vmatprep.mubr.bf16.mxu0 0
      %2336 = vmatmul.mubr.bf16.gmra.mxu0 %v2088
      %v2337 = vpop.f32.mrf.mxu0
      %v2338 = vadd.f32 %v2125, %v2337
      %v2339 = vpop.f32.mrf.mxu0
      %v2340 = vpop.f32.mrf.mxu0
      %v2341 = vadd.f32 %v2125, %v2340
      %v2342 = vpop.f32.mrf.mxu0
      %2343 = vmatprep.mubr.bf16.mxu0 0
      %2344 = vmatmul.mubr.bf16.gmra.mxu0 %v2089
      %v2345 = vpop.f32.mrf.mxu0
      %v2346 = vadd.f32 %v2125, %v2345
      %v2347 = vpop.f32.mrf.mxu0
      %v2348 = vpop.f32.mrf.mxu0
      %v2349 = vadd.f32 %v2125, %v2348
      %v2350 = vpop.f32.mrf.mxu0
      %2351 = vmatprep.mubr.bf16.mxu0 0
      %2352 = vmatmul.mubr.bf16.gmra.mxu0 %v2090
      %v2353 = vpop.f32.mrf.mxu0
      %v2354 = vadd.f32 %v2125, %v2353
      %v2355 = vpop.f32.mrf.mxu0
      %v2356 = vpop.f32.mrf.mxu0
      %v2357 = vadd.f32 %v2125, %v2356
      %v2358 = vpop.f32.mrf.mxu0
      %2359 = vmatprep.mubr.bf16.mxu0 0
      %2360 = vmatmul.mubr.bf16.gmra.mxu0 %v2091
      %v2361 = vpop.f32.mrf.mxu0
      %v2362 = vadd.f32 %v2125, %v2361
      %v2363 = vpop.f32.mrf.mxu0
      %v2364 = vpop.f32.mrf.mxu0
      %v2365 = vadd.f32 %v2125, %v2364
      %v2366 = vpop.f32.mrf.mxu0
      %2367 = vmatprep.mubr.bf16.mxu0 0
      %2368 = vmatmul.mubr.bf16.gmra.mxu0 %v2092
      %v2369 = vpop.f32.mrf.mxu0
      %v2370 = vadd.f32 %v2125, %v2369
      %v2371 = vpop.f32.mrf.mxu0
      %v2372 = vpop.f32.mrf.mxu0
      %v2373 = vadd.f32 %v2125, %v2372
      %v2374 = vpop.f32.mrf.mxu0
      %2375 = vmatprep.mubr.bf16.mxu0 0
      %2376 = vmatmul.mubr.bf16.gmra.mxu0 %v2093
      %v2377 = vpop.f32.mrf.mxu0
      %v2378 = vadd.f32 %v2125, %v2377
      %v2379 = vpop.f32.mrf.mxu0
      %v2380 = vpop.f32.mrf.mxu0
      %v2381 = vadd.f32 %v2125, %v2380
      %v2382 = vpop.f32.mrf.mxu0
      %2383 = vmatprep.mubr.bf16.mxu0 0
      %2384 = vmatmul.mubr.bf16.gmra.mxu0 %v2094
      %v2385 = vpop.f32.mrf.mxu0
      %v2386 = vadd.f32 %v2125, %v2385
      %v2387 = vpop.f32.mrf.mxu0
      %v2388 = vpop.f32.mrf.mxu0
      %v2389 = vadd.f32 %v2125, %v2388
      %v2390 = vpop.f32.mrf.mxu0
      %2391 = vmatprep.mubr.bf16.mxu0 0
      %2392 = vmatmul.mubr.bf16.gmra.mxu0 %v2095
      %v2393 = vpop.f32.mrf.mxu0
      %v2394 = vadd.f32 %v2125, %v2393
      %v2395 = vpop.f32.mrf.mxu0
      %v2396 = vpop.f32.mrf.mxu0
      %v2397 = vadd.f32 %v2125, %v2396
      %v2398 = vpop.f32.mrf.mxu0
      %2399 = vmatprep.mubr.bf16.mxu0 0
      %2400 = vmatmul.mubr.bf16.gmra.mxu0 %v2096
      %v2401 = vpop.f32.mrf.mxu0
      %v2402 = vadd.f32 %v2125, %v2401
      %v2403 = vpop.f32.mrf.mxu0
      %v2404 = vpop.f32.mrf.mxu0
      %v2405 = vadd.f32 %v2125, %v2404
      %v2406 = vpop.f32.mrf.mxu0
      %2407 = vmatprep.mubr.bf16.mxu0 0
      %2408 = vmatmul.mubr.bf16.gmra.mxu0 %v2097
      %v2409 = vpop.f32.mrf.mxu0
      %v2410 = vadd.f32 %v2125, %v2409
      %v2411 = vpop.f32.mrf.mxu0
      %v2412 = vpop.f32.mrf.mxu0
      %v2413 = vadd.f32 %v2125, %v2412
      %v2414 = vpop.f32.mrf.mxu0
      %2415 = vmatprep.mubr.bf16.mxu0 0
      %2416 = vmatmul.mubr.bf16.gmra.mxu0 %v2098
      %v2417 = vpop.f32.mrf.mxu0
      %v2418 = vadd.f32 %v2125, %v2417
      %v2419 = vpop.f32.mrf.mxu0
      %v2420 = vpop.f32.mrf.mxu0
      %v2421 = vadd.f32 %v2125, %v2420
      %v2422 = vpop.f32.mrf.mxu0
      %2423 = vmatprep.mubr.bf16.mxu0 0
      %2424 = vmatmul.mubr.bf16.gmra.mxu0 %v2099
      %v2425 = vpop.f32.mrf.mxu0
      %v2426 = vadd.f32 %v2125, %v2425
      %v2427 = vpop.f32.mrf.mxu0
      %v2428 = vpop.f32.mrf.mxu0
      %v2429 = vadd.f32 %v2125, %v2428
      %v2430 = vpop.f32.mrf.mxu0
      %2431 = vmatprep.mubr.bf16.mxu0 0
      %2432 = vmatmul.mubr.bf16.gmra.mxu0 %v2100
      %v2433 = vpop.f32.mrf.mxu0
      %v2434 = vadd.f32 %v2125, %v2433
      %v2435 = vpop.f32.mrf.mxu0
      %v2436 = vpop.f32.mrf.mxu0
      %v2437 = vadd.f32 %v2125, %v2436
      %v2438 = vpop.f32.mrf.mxu0
      %2439 = vmatprep.mubr.bf16.mxu0 0
      %2440 = vmatmul.mubr.bf16.gmra.mxu0 %v2101
      %v2441 = vpop.f32.mrf.mxu0
      %v2442 = vadd.f32 %v2125, %v2441
      %v2443 = vpop.f32.mrf.mxu0
      %v2444 = vpop.f32.mrf.mxu0
      %v2445 = vadd.f32 %v2125, %v2444
      %v2446 = vpop.f32.mrf.mxu0
      %2447 = vmatprep.mubr.bf16.mxu0 0
      %2448 = vmatmul.mubr.bf16.gmra.mxu0 %v2102
      %v2449 = vpop.f32.mrf.mxu0
      %v2450 = vadd.f32 %v2125, %v2449
      %v2451 = vpop.f32.mrf.mxu0
      %v2452 = vpop.f32.mrf.mxu0
      %v2453 = vadd.f32 %v2125, %v2452
      %v2454 = vpop.f32.mrf.mxu0
      %2455 = vmatprep.mubr.bf16.mxu0 0
      %2456 = vmatmul.mubr.bf16.gmra.mxu0 %v2103
      %v2457 = vpop.f32.mrf.mxu0
      %v2458 = vadd.f32 %v2125, %v2457
      %v2459 = vpop.f32.mrf.mxu0
      %v2460 = vpop.f32.mrf.mxu0
      %v2461 = vadd.f32 %v2125, %v2460
      %v2462 = vpop.f32.mrf.mxu0
      %2463 = vdwg.mxu0
      %v2464 = vpack.c.bf16 %v2213, %v2210
      %v2465 = vpack.c.bf16 %v2221, %v2218
      %v2466 = vpack.c.bf16 %v2229, %v2226
      %v2467 = vpack.c.bf16 %v2237, %v2234
      %v2468 = vpack.c.bf16 %v2245, %v2242
      %v2469 = vpack.c.bf16 %v2253, %v2250
      %v2470 = vpack.c.bf16 %v2261, %v2258
      %v2471 = vpack.c.bf16 %v2269, %v2266
      %v2472 = vpack.c.bf16 %v2277, %v2274
      %v2473 = vpack.c.bf16 %v2285, %v2282
      %v2474 = vpack.c.bf16 %v2293, %v2290
      %v2475 = vpack.c.bf16 %v2301, %v2298
      %v2476 = vpack.c.bf16 %v2309, %v2306
      %v2477 = vpack.c.bf16 %v2317, %v2314
      %v2478 = vpack.c.bf16 %v2325, %v2322
      %v2479 = vpack.c.bf16 %v2333, %v2330
      %v2480 = vpack.c.bf16 %v2341, %v2338
      %v2481 = vpack.c.bf16 %v2349, %v2346
      %v2482 = vpack.c.bf16 %v2357, %v2354
      %v2483 = vpack.c.bf16 %v2365, %v2362
      %v2484 = vpack.c.bf16 %v2373, %v2370
      %v2485 = vpack.c.bf16 %v2381, %v2378
      %v2486 = vpack.c.bf16 %v2389, %v2386
      %v2487 = vpack.c.bf16 %v2397, %v2394
      %v2488 = vpack.c.bf16 %v2405, %v2402
      %v2489 = vpack.c.bf16 %v2413, %v2410
      %v2490 = vpack.c.bf16 %v2421, %v2418
      %v2491 = vpack.c.bf16 %v2429, %v2426
      %v2492 = vpack.c.bf16 %v2437, %v2434
      %v2493 = vpack.c.bf16 %v2445, %v2442
      %v2494 = vpack.c.bf16 %v2453, %v2450
      %v2495 = vpack.c.bf16 %v2461, %v2458
      %v2528 = vunpack.c.l.b16 %v2464
      %v2529 = vunpack.c.h.b16 %v2464
      %v2530 = vunpack.c.l.b16 %v2465
      %v2531 = vunpack.c.h.b16 %v2465
      %v2532 = vunpack.c.l.b16 %v2466
      %v2533 = vunpack.c.h.b16 %v2466
      %v2534 = vunpack.c.l.b16 %v2467
      %v2535 = vunpack.c.h.b16 %v2467
      %v2536 = vunpack.c.l.b16 %v2468
      %v2537 = vunpack.c.h.b16 %v2468
      %v2538 = vunpack.c.l.b16 %v2469
      %v2539 = vunpack.c.h.b16 %v2469
      %v2540 = vunpack.c.l.b16 %v2470
      %v2541 = vunpack.c.h.b16 %v2470
      %v2542 = vunpack.c.l.b16 %v2471
      %v2543 = vunpack.c.h.b16 %v2471
      %v2544 = vunpack.c.l.b16 %v2472
      %v2545 = vunpack.c.h.b16 %v2472
      %v2546 = vunpack.c.l.b16 %v2473
      %v2547 = vunpack.c.h.b16 %v2473
      %v2548 = vunpack.c.l.b16 %v2474
      %v2549 = vunpack.c.h.b16 %v2474
      %v2550 = vunpack.c.l.b16 %v2475
      %v2551 = vunpack.c.h.b16 %v2475
      %v2552 = vunpack.c.l.b16 %v2476
      %v2553 = vunpack.c.h.b16 %v2476
      %v2554 = vunpack.c.l.b16 %v2477
      %v2555 = vunpack.c.h.b16 %v2477
      %v2556 = vunpack.c.l.b16 %v2478
      %v2557 = vunpack.c.h.b16 %v2478
      %v2558 = vunpack.c.l.b16 %v2479
      %v2559 = vunpack.c.h.b16 %v2479
      %v2560 = vunpack.c.l.b16 %v2480
      %v2561 = vunpack.c.h.b16 %v2480
      %v2562 = vunpack.c.l.b16 %v2481
      %v2563 = vunpack.c.h.b16 %v2481
      %v2564 = vunpack.c.l.b16 %v2482
      %v2565 = vunpack.c.h.b16 %v2482
      %v2566 = vunpack.c.l.b16 %v2483
      %v2567 = vunpack.c.h.b16 %v2483
      %v2568 = vunpack.c.l.b16 %v2484
      %v2569 = vunpack.c.h.b16 %v2484
      %v2570 = vunpack.c.l.b16 %v2485
      %v2571 = vunpack.c.h.b16 %v2485
      %v2572 = vunpack.c.l.b16 %v2486
      %v2573 = vunpack.c.h.b16 %v2486
      %v2574 = vunpack.c.l.b16 %v2487
      %v2575 = vunpack.c.h.b16 %v2487
      %v2576 = vunpack.c.l.b16 %v2488
      %v2577 = vunpack.c.h.b16 %v2488
      %v2578 = vunpack.c.l.b16 %v2489
      %v2579 = vunpack.c.h.b16 %v2489
      %v2580 = vunpack.c.l.b16 %v2490
      %v2581 = vunpack.c.h.b16 %v2490
      %v2582 = vunpack.c.l.b16 %v2491
      %v2583 = vunpack.c.h.b16 %v2491
      %v2584 = vunpack.c.l.b16 %v2492
      %v2585 = vunpack.c.h.b16 %v2492
      %v2586 = vunpack.c.l.b16 %v2493
      %v2587 = vunpack.c.h.b16 %v2493
      %v2588 = vunpack.c.l.b16 %v2494
      %v2589 = vunpack.c.h.b16 %v2494
      %v2590 = vunpack.c.l.b16 %v2495
      %v2591 = vunpack.c.h.b16 %v2495
      %v2592 = vpack.c.b16 %v2528, %v2528
      %v2593 = vpack.c.b16 %v2529, %v2529
      %v2594 = vpack.c.b16 %v2530, %v2530
      %v2595 = vpack.c.b16 %v2531, %v2531
      %v2596 = vpack.c.b16 %v2532, %v2532
      %v2597 = vpack.c.b16 %v2533, %v2533
      %v2598 = vpack.c.b16 %v2534, %v2534
      %v2599 = vpack.c.b16 %v2535, %v2535
      %v2600 = vpack.c.b16 %v2536, %v2536
      %v2601 = vpack.c.b16 %v2537, %v2537
      %v2602 = vpack.c.b16 %v2538, %v2538
      %v2603 = vpack.c.b16 %v2539, %v2539
      %v2604 = vpack.c.b16 %v2540, %v2540
      %v2605 = vpack.c.b16 %v2541, %v2541
      %v2606 = vpack.c.b16 %v2542, %v2542
      %v2607 = vpack.c.b16 %v2543, %v2543
      %v2608 = vpack.c.b16 %v2544, %v2544
      %v2609 = vpack.c.b16 %v2545, %v2545
      %v2610 = vpack.c.b16 %v2546, %v2546
      %v2611 = vpack.c.b16 %v2547, %v2547
      %v2612 = vpack.c.b16 %v2548, %v2548
      %v2613 = vpack.c.b16 %v2549, %v2549
      %v2614 = vpack.c.b16 %v2550, %v2550
      %v2615 = vpack.c.b16 %v2551, %v2551
      %v2616 = vpack.c.b16 %v2552, %v2552
      %v2617 = vpack.c.b16 %v2553, %v2553
      %v2618 = vpack.c.b16 %v2554, %v2554
      %v2619 = vpack.c.b16 %v2555, %v2555
      %v2620 = vpack.c.b16 %v2556, %v2556
      %v2621 = vpack.c.b16 %v2557, %v2557
      %v2622 = vpack.c.b16 %v2558, %v2558
      %v2623 = vpack.c.b16 %v2559, %v2559
      %v2624 = vpack.c.b16 %v2560, %v2560
      %v2625 = vpack.c.b16 %v2561, %v2561
      %v2626 = vpack.c.b16 %v2562, %v2562
      %v2627 = vpack.c.b16 %v2563, %v2563
      %v2628 = vpack.c.b16 %v2564, %v2564
      %v2629 = vpack.c.b16 %v2565, %v2565
      %v2630 = vpack.c.b16 %v2566, %v2566
      %v2631 = vpack.c.b16 %v2567, %v2567
      %v2632 = vpack.c.b16 %v2568, %v2568
      %v2633 = vpack.c.b16 %v2569, %v2569
      %v2634 = vpack.c.b16 %v2570, %v2570
      %v2635 = vpack.c.b16 %v2571, %v2571
      %v2636 = vpack.c.b16 %v2572, %v2572
      %v2637 = vpack.c.b16 %v2573, %v2573
      %v2638 = vpack.c.b16 %v2574, %v2574
      %v2639 = vpack.c.b16 %v2575, %v2575
      %v2640 = vpack.c.b16 %v2576, %v2576
      %v2641 = vpack.c.b16 %v2577, %v2577
      %v2642 = vpack.c.b16 %v2578, %v2578
      %v2643 = vpack.c.b16 %v2579, %v2579
      %v2644 = vpack.c.b16 %v2580, %v2580
      %v2645 = vpack.c.b16 %v2581, %v2581
      %v2646 = vpack.c.b16 %v2582, %v2582
      %v2647 = vpack.c.b16 %v2583, %v2583
      %v2648 = vpack.c.b16 %v2584, %v2584
      %v2649 = vpack.c.b16 %v2585, %v2585
      %v2650 = vpack.c.b16 %v2586, %v2586
      %v2651 = vpack.c.b16 %v2587, %v2587
      %v2652 = vpack.c.b16 %v2588, %v2588
      %v2653 = vpack.c.b16 %v2589, %v2589
      %v2654 = vpack.c.b16 %v2590, %v2590
      %v2655 = vpack.c.b16 %v2591, %v2591
      %2720 = vst [vmem:[%s477] sm:$0xf] %v2592
      %2721 = vst [vmem:[%s477 + $0x4] sm:$0xf] %v2593
      %2722 = vst [vmem:[%s477 + $0x8] sm:$0xf] %v2594
      %2723 = vst [vmem:[%s477 + $0xc] sm:$0xf] %v2595
      %2724 = vst [vmem:[%s477 + $0x10] sm:$0xf] %v2596
      %2725 = vst [vmem:[%s477 + $0x14] sm:$0xf] %v2597
      %2726 = vst [vmem:[%s477 + $0x18] sm:$0xf] %v2598
      %2727 = vst [vmem:[%s477 + $0x1c] sm:$0xf] %v2599
      %2728 = vst [vmem:[%s477 + $0x20] sm:$0xf] %v2600
      %2729 = vst [vmem:[%s477 + $0x24] sm:$0xf] %v2601
      %2730 = vst [vmem:[%s477 + $0x28] sm:$0xf] %v2602
      %2731 = vst [vmem:[%s477 + $0x2c] sm:$0xf] %v2603
      %2732 = vst [vmem:[%s477 + $0x30] sm:$0xf] %v2604
      %2733 = vst [vmem:[%s477 + $0x34] sm:$0xf] %v2605
      %2734 = vst [vmem:[%s477 + $0x38] sm:$0xf] %v2606
      %2735 = vst [vmem:[%s477 + $0x3c] sm:$0xf] %v2607
      %2736 = vst [vmem:[%s477 + $0x40] sm:$0xf] %v2608
      %2737 = vst [vmem:[%s477 + $0x44] sm:$0xf] %v2609
      %2738 = vst [vmem:[%s477 + $0x48] sm:$0xf] %v2610
      %2739 = vst [vmem:[%s477 + $0x4c] sm:$0xf] %v2611
      %2740 = vst [vmem:[%s477 + $0x50] sm:$0xf] %v2612
      %2741 = vst [vmem:[%s477 + $0x54] sm:$0xf] %v2613
      %2742 = vst [vmem:[%s477 + $0x58] sm:$0xf] %v2614
      %2743 = vst [vmem:[%s477 + $0x5c] sm:$0xf] %v2615
      %2744 = vst [vmem:[%s477 + $0x60] sm:$0xf] %v2616
      %2745 = vst [vmem:[%s477 + $0x64] sm:$0xf] %v2617
      %2746 = vst [vmem:[%s477 + $0x68] sm:$0xf] %v2618
      %2747 = vst [vmem:[%s477 + $0x6c] sm:$0xf] %v2619
      %2748 = vst [vmem:[%s477 + $0x70] sm:$0xf] %v2620
      %2749 = vst [vmem:[%s477 + $0x74] sm:$0xf] %v2621
      %2750 = vst [vmem:[%s477 + $0x78] sm:$0xf] %v2622
      %2751 = vst [vmem:[%s477 + $0x7c] sm:$0xf] %v2623
      %2752 = vst [vmem:[%s477 + $0x80] sm:$0xf] %v2624
      %2753 = vst [vmem:[%s477 + $0x84] sm:$0xf] %v2625
      %2754 = vst [vmem:[%s477 + $0x88] sm:$0xf] %v2626
      %2755 = vst [vmem:[%s477 + $0x8c] sm:$0xf] %v2627
      %2756 = vst [vmem:[%s477 + $0x90] sm:$0xf] %v2628
      %2757 = vst [vmem:[%s477 + $0x94] sm:$0xf] %v2629
      %2758 = vst [vmem:[%s477 + $0x98] sm:$0xf] %v2630
      %2759 = vst [vmem:[%s477 + $0x9c] sm:$0xf] %v2631
      %2760 = vst [vmem:[%s477 + $0xa0] sm:$0xf] %v2632
      %2761 = vst [vmem:[%s477 + $0xa4] sm:$0xf] %v2633
      %2762 = vst [vmem:[%s477 + $0xa8] sm:$0xf] %v2634
      %2763 = vst [vmem:[%s477 + $0xac] sm:$0xf] %v2635
      %2764 = vst [vmem:[%s477 + $0xb0] sm:$0xf] %v2636
      %2765 = vst [vmem:[%s477 + $0xb4] sm:$0xf] %v2637
      %2766 = vst [vmem:[%s477 + $0xb8] sm:$0xf] %v2638
      %2767 = vst [vmem:[%s477 + $0xbc] sm:$0xf] %v2639
      %2768 = vst [vmem:[%s477 + $0xc0] sm:$0xf] %v2640
      %2769 = vst [vmem:[%s477 + $0xc4] sm:$0xf] %v2641
      %2770 = vst [vmem:[%s477 + $0xc8] sm:$0xf] %v2642
      %2771 = vst [vmem:[%s477 + $0xcc] sm:$0xf] %v2643
      %2772 = vst [vmem:[%s477 + $0xd0] sm:$0xf] %v2644
      %2773 = vst [vmem:[%s477 + $0xd4] sm:$0xf] %v2645
      %2774 = vst [vmem:[%s477 + $0xd8] sm:$0xf] %v2646
      %2775 = vst [vmem:[%s477 + $0xdc] sm:$0xf] %v2647
      %2776 = vst [vmem:[%s477 + $0xe0] sm:$0xf] %v2648
      %2777 = vst [vmem:[%s477 + $0xe4] sm:$0xf] %v2649
      %2778 = vst [vmem:[%s477 + $0xe8] sm:$0xf] %v2650
      %2779 = vst [vmem:[%s477 + $0xec] sm:$0xf] %v2651
      %2780 = vst [vmem:[%s477 + $0xf0] sm:$0xf] %v2652
      %2781 = vst [vmem:[%s477 + $0xf4] sm:$0xf] %v2653
      %2782 = vst [vmem:[%s477 + $0xf8] sm:$0xf] %v2654
      %2783 = vst [vmem:[%s477 + $0xfc] sm:$0xf] %v2655
      %v2784 = vld [vmem:[%s7] sm:$0xf]
      %v2785 = vld [vmem:[%s7 + $0x4] sm:$0xf]
      %v2786 = vld [vmem:[%s7 + $0x8] sm:$0xf]
      %v2787 = vld [vmem:[%s7 + $0xc] sm:$0xf]
      %v2788 = vld [vmem:[%s7 + $0x10] sm:$0xf]
      %v2789 = vld [vmem:[%s7 + $0x14] sm:$0xf]
      %v2790 = vld [vmem:[%s7 + $0x18] sm:$0xf]
      %v2791 = vld [vmem:[%s7 + $0x1c] sm:$0xf]
      %v2792 = vld [vmem:[%s7 + $0x20] sm:$0xf]
      %v2793 = vld [vmem:[%s7 + $0x24] sm:$0xf]
      %v2794 = vld [vmem:[%s7 + $0x28] sm:$0xf]
      %v2795 = vld [vmem:[%s7 + $0x2c] sm:$0xf]
      %v2796 = vld [vmem:[%s7 + $0x30] sm:$0xf]
      %v2797 = vld [vmem:[%s7 + $0x34] sm:$0xf]
      %v2798 = vld [vmem:[%s7 + $0x38] sm:$0xf]
      %v2799 = vld [vmem:[%s7 + $0x3c] sm:$0xf]
      %v2800 = vld [vmem:[%s8] sm:$0x1]
      %v2802 = vlaneseq
      %v2803 = vshrl.u32 %v2802, 7
      %v2804 = vsub.s32 0, %v2803
      %v2805 = vrot.slane %v2800, %v2804
      %v2823 = vunpack.c.l.b16 %v2784
      %v2824 = vunpack.c.l.b16 %v2785
      %v2825 = vunpack.c.l.b16 %v2786
      %v2826 = vunpack.c.l.b16 %v2787
      %v2827 = vunpack.c.l.b16 %v2788
      %v2828 = vunpack.c.l.b16 %v2789
      %v2829 = vunpack.c.l.b16 %v2790
      %v2830 = vunpack.c.l.b16 %v2791
      %v2831 = vunpack.c.l.b16 %v2792
      %v2832 = vunpack.c.l.b16 %v2793
      %v2833 = vunpack.c.l.b16 %v2794
      %v2834 = vunpack.c.l.b16 %v2795
      %v2835 = vunpack.c.l.b16 %v2796
      %v2836 = vunpack.c.l.b16 %v2797
      %v2837 = vunpack.c.l.b16 %v2798
      %v2838 = vunpack.c.l.b16 %v2799
      %v2839 = vpack.c.b16 %v2824, %v2823
      %v2840 = vpack.c.b16 %v2826, %v2825
      %v2841 = vpack.c.b16 %v2828, %v2827
      %v2842 = vpack.c.b16 %v2830, %v2829
      %v2843 = vpack.c.b16 %v2832, %v2831
      %v2844 = vpack.c.b16 %v2834, %v2833
      %v2845 = vpack.c.b16 %v2836, %v2835
      %v2846 = vpack.c.b16 %v2838, %v2837
      %2855 = vmatprep.subr.bf16.mxu0 0
      %2856 = vmatpush1.bf16.msra.mxu0 %v2846
      %2857 = vmatprep.subr.bf16.mxu0 0
      %2858 = vmatpush1.bf16.msra.mxu0 %v2845
      %2859 = vmatprep.subr.bf16.mxu0 0
      %2860 = vmatpush1.bf16.msra.mxu0 %v2844
      %2861 = vmatprep.subr.bf16.mxu0 0
      %2862 = vmatpush1.bf16.msra.mxu0 %v2843
      %2863 = vmatprep.subr.bf16.mxu0 0
      %2864 = vmatpush1.bf16.msra.mxu0 %v2842
      %2865 = vmatprep.subr.bf16.mxu0 0
      %2866 = vmatpush1.bf16.msra.mxu0 %v2841
      %2867 = vmatprep.subr.bf16.mxu0 0
      %2868 = vmatpush1.bf16.msra.mxu0 %v2840
      %2869 = vmatprep.subr.bf16.mxu0 0
      %2870 = vmatpush1.bf16.msra.mxu0 %v2839
      %2871 = vmatprep.subr.bf16.mxu0 0
      %2872 = vmatpush2.bf16.msra.mxu0 0
      %2873 = vmatprep.subr.bf16.mxu0 0
      %2874 = vmatpush2.bf16.msra.mxu0 0
      %2875 = vmatprep.subr.bf16.mxu0 0
      %2876 = vmatpush2.bf16.msra.mxu0 0
      %2877 = vmatprep.subr.bf16.mxu0 0
      %2878 = vmatpush2.bf16.msra.mxu0 0
      %2879 = vmatprep.subr.bf16.mxu0 0
      %2880 = vmatpush2.bf16.msra.mxu0 0
      %2881 = vmatprep.subr.bf16.mxu0 0
      %2882 = vmatpush2.bf16.msra.mxu0 0
      %2883 = vmatprep.subr.bf16.mxu0 0
      %2884 = vmatpush2.bf16.msra.mxu0 0
      %2885 = vmatprep.subr.bf16.mxu0 0
      %2886 = vmatpush2.bf16.msra.mxu0 0
      %2887 = vmatprep.mubr.bf16.mxu0 0
      %2888 = vmatmul.mubr.bf16.gmra.mxu0 %v2464
      %v2889 = vpop.f32.mrf.mxu0
      %v2890 = vadd.f32 %v2805, %v2889
      %v2891 = vpop.f32.mrf.mxu0
      %v2892 = vpop.f32.mrf.mxu0
      %v2893 = vadd.f32 %v2805, %v2892
      %v2894 = vpop.f32.mrf.mxu0
      %2895 = vmatprep.mubr.bf16.mxu0 0
      %2896 = vmatmul.mubr.bf16.gmra.mxu0 %v2465
      %v2897 = vpop.f32.mrf.mxu0
      %v2898 = vadd.f32 %v2805, %v2897
      %v2899 = vpop.f32.mrf.mxu0
      %v2900 = vpop.f32.mrf.mxu0
      %v2901 = vadd.f32 %v2805, %v2900
      %v2902 = vpop.f32.mrf.mxu0
      %2903 = vmatprep.mubr.bf16.mxu0 0
      %2904 = vmatmul.mubr.bf16.gmra.mxu0 %v2466
      %v2905 = vpop.f32.mrf.mxu0
      %v2906 = vadd.f32 %v2805, %v2905
      %v2907 = vpop.f32.mrf.mxu0
      %v2908 = vpop.f32.mrf.mxu0
      %v2909 = vadd.f32 %v2805, %v2908
      %v2910 = vpop.f32.mrf.mxu0
      %2911 = vmatprep.mubr.bf16.mxu0 0
      %2912 = vmatmul.mubr.bf16.gmra.mxu0 %v2467
      %v2913 = vpop.f32.mrf.mxu0
      %v2914 = vadd.f32 %v2805, %v2913
      %v2915 = vpop.f32.mrf.mxu0
      %v2916 = vpop.f32.mrf.mxu0
      %v2917 = vadd.f32 %v2805, %v2916
      %v2918 = vpop.f32.mrf.mxu0
      %2919 = vmatprep.mubr.bf16.mxu0 0
      %2920 = vmatmul.mubr.bf16.gmra.mxu0 %v2468
      %v2921 = vpop.f32.mrf.mxu0
      %v2922 = vadd.f32 %v2805, %v2921
      %v2923 = vpop.f32.mrf.mxu0
      %v2924 = vpop.f32.mrf.mxu0
      %v2925 = vadd.f32 %v2805, %v2924
      %v2926 = vpop.f32.mrf.mxu0
      %2927 = vmatprep.mubr.bf16.mxu0 0
      %2928 = vmatmul.mubr.bf16.gmra.mxu0 %v2469
      %v2929 = vpop.f32.mrf.mxu0
      %v2930 = vadd.f32 %v2805, %v2929
      %v2931 = vpop.f32.mrf.mxu0
      %v2932 = vpop.f32.mrf.mxu0
      %v2933 = vadd.f32 %v2805, %v2932
      %v2934 = vpop.f32.mrf.mxu0
      %2935 = vmatprep.mubr.bf16.mxu0 0
      %2936 = vmatmul.mubr.bf16.gmra.mxu0 %v2470
      %v2937 = vpop.f32.mrf.mxu0
      %v2938 = vadd.f32 %v2805, %v2937
      %v2939 = vpop.f32.mrf.mxu0
      %v2940 = vpop.f32.mrf.mxu0
      %v2941 = vadd.f32 %v2805, %v2940
      %v2942 = vpop.f32.mrf.mxu0
      %2943 = vmatprep.mubr.bf16.mxu0 0
      %2944 = vmatmul.mubr.bf16.gmra.mxu0 %v2471
      %v2945 = vpop.f32.mrf.mxu0
      %v2946 = vadd.f32 %v2805, %v2945
      %v2947 = vpop.f32.mrf.mxu0
      %v2948 = vpop.f32.mrf.mxu0
      %v2949 = vadd.f32 %v2805, %v2948
      %v2950 = vpop.f32.mrf.mxu0
      %2951 = vmatprep.mubr.bf16.mxu0 0
      %2952 = vmatmul.mubr.bf16.gmra.mxu0 %v2472
      %v2953 = vpop.f32.mrf.mxu0
      %v2954 = vadd.f32 %v2805, %v2953
      %v2955 = vpop.f32.mrf.mxu0
      %v2956 = vpop.f32.mrf.mxu0
      %v2957 = vadd.f32 %v2805, %v2956
      %v2958 = vpop.f32.mrf.mxu0
      %2959 = vmatprep.mubr.bf16.mxu0 0
      %2960 = vmatmul.mubr.bf16.gmra.mxu0 %v2473
      %v2961 = vpop.f32.mrf.mxu0
      %v2962 = vadd.f32 %v2805, %v2961
      %v2963 = vpop.f32.mrf.mxu0
      %v2964 = vpop.f32.mrf.mxu0
      %v2965 = vadd.f32 %v2805, %v2964
      %v2966 = vpop.f32.mrf.mxu0
      %2967 = vmatprep.mubr.bf16.mxu0 0
      %2968 = vmatmul.mubr.bf16.gmra.mxu0 %v2474
      %v2969 = vpop.f32.mrf.mxu0
      %v2970 = vadd.f32 %v2805, %v2969
      %v2971 = vpop.f32.mrf.mxu0
      %v2972 = vpop.f32.mrf.mxu0
      %v2973 = vadd.f32 %v2805, %v2972
      %v2974 = vpop.f32.mrf.mxu0
      %2975 = vmatprep.mubr.bf16.mxu0 0
      %2976 = vmatmul.mubr.bf16.gmra.mxu0 %v2475
      %v2977 = vpop.f32.mrf.mxu0
      %v2978 = vadd.f32 %v2805, %v2977
      %v2979 = vpop.f32.mrf.mxu0
      %v2980 = vpop.f32.mrf.mxu0
      %v2981 = vadd.f32 %v2805, %v2980
      %v2982 = vpop.f32.mrf.mxu0
      %2983 = vmatprep.mubr.bf16.mxu0 0
      %2984 = vmatmul.mubr.bf16.gmra.mxu0 %v2476
      %v2985 = vpop.f32.mrf.mxu0
      %v2986 = vadd.f32 %v2805, %v2985
      %v2987 = vpop.f32.mrf.mxu0
      %v2988 = vpop.f32.mrf.mxu0
      %v2989 = vadd.f32 %v2805, %v2988
      %v2990 = vpop.f32.mrf.mxu0
      %2991 = vmatprep.mubr.bf16.mxu0 0
      %2992 = vmatmul.mubr.bf16.gmra.mxu0 %v2477
      %v2993 = vpop.f32.mrf.mxu0
      %v2994 = vadd.f32 %v2805, %v2993
      %v2995 = vpop.f32.mrf.mxu0
      %v2996 = vpop.f32.mrf.mxu0
      %v2997 = vadd.f32 %v2805, %v2996
      %v2998 = vpop.f32.mrf.mxu0
      %2999 = vmatprep.mubr.bf16.mxu0 0
      %3000 = vmatmul.mubr.bf16.gmra.mxu0 %v2478
      %v3001 = vpop.f32.mrf.mxu0
      %v3002 = vadd.f32 %v2805, %v3001
      %v3003 = vpop.f32.mrf.mxu0
      %v3004 = vpop.f32.mrf.mxu0
      %v3005 = vadd.f32 %v2805, %v3004
      %v3006 = vpop.f32.mrf.mxu0
      %3007 = vmatprep.mubr.bf16.mxu0 0
      %3008 = vmatmul.mubr.bf16.gmra.mxu0 %v2479
      %v3009 = vpop.f32.mrf.mxu0
      %v3010 = vadd.f32 %v2805, %v3009
      %v3011 = vpop.f32.mrf.mxu0
      %v3012 = vpop.f32.mrf.mxu0
      %v3013 = vadd.f32 %v2805, %v3012
      %v3014 = vpop.f32.mrf.mxu0
      %3015 = vmatprep.mubr.bf16.mxu0 0
      %3016 = vmatmul.mubr.bf16.gmra.mxu0 %v2480
      %v3017 = vpop.f32.mrf.mxu0
      %v3018 = vadd.f32 %v2805, %v3017
      %v3019 = vpop.f32.mrf.mxu0
      %v3020 = vpop.f32.mrf.mxu0
      %v3021 = vadd.f32 %v2805, %v3020
      %v3022 = vpop.f32.mrf.mxu0
      %3023 = vmatprep.mubr.bf16.mxu0 0
      %3024 = vmatmul.mubr.bf16.gmra.mxu0 %v2481
      %v3025 = vpop.f32.mrf.mxu0
      %v3026 = vadd.f32 %v2805, %v3025
      %v3027 = vpop.f32.mrf.mxu0
      %v3028 = vpop.f32.mrf.mxu0
      %v3029 = vadd.f32 %v2805, %v3028
      %v3030 = vpop.f32.mrf.mxu0
      %3031 = vmatprep.mubr.bf16.mxu0 0
      %3032 = vmatmul.mubr.bf16.gmra.mxu0 %v2482
      %v3033 = vpop.f32.mrf.mxu0
      %v3034 = vadd.f32 %v2805, %v3033
      %v3035 = vpop.f32.mrf.mxu0
      %v3036 = vpop.f32.mrf.mxu0
      %v3037 = vadd.f32 %v2805, %v3036
      %v3038 = vpop.f32.mrf.mxu0
      %3039 = vmatprep.mubr.bf16.mxu0 0
      %3040 = vmatmul.mubr.bf16.gmra.mxu0 %v2483
      %v3041 = vpop.f32.mrf.mxu0
      %v3042 = vadd.f32 %v2805, %v3041
      %v3043 = vpop.f32.mrf.mxu0
      %v3044 = vpop.f32.mrf.mxu0
      %v3045 = vadd.f32 %v2805, %v3044
      %v3046 = vpop.f32.mrf.mxu0
      %3047 = vmatprep.mubr.bf16.mxu0 0
      %3048 = vmatmul.mubr.bf16.gmra.mxu0 %v2484
      %v3049 = vpop.f32.mrf.mxu0
      %v3050 = vadd.f32 %v2805, %v3049
      %v3051 = vpop.f32.mrf.mxu0
      %v3052 = vpop.f32.mrf.mxu0
      %v3053 = vadd.f32 %v2805, %v3052
      %v3054 = vpop.f32.mrf.mxu0
      %3055 = vmatprep.mubr.bf16.mxu0 0
      %3056 = vmatmul.mubr.bf16.gmra.mxu0 %v2485
      %v3057 = vpop.f32.mrf.mxu0
      %v3058 = vadd.f32 %v2805, %v3057
      %v3059 = vpop.f32.mrf.mxu0
      %v3060 = vpop.f32.mrf.mxu0
      %v3061 = vadd.f32 %v2805, %v3060
      %v3062 = vpop.f32.mrf.mxu0
      %3063 = vmatprep.mubr.bf16.mxu0 0
      %3064 = vmatmul.mubr.bf16.gmra.mxu0 %v2486
      %v3065 = vpop.f32.mrf.mxu0
      %v3066 = vadd.f32 %v2805, %v3065
      %v3067 = vpop.f32.mrf.mxu0
      %v3068 = vpop.f32.mrf.mxu0
      %v3069 = vadd.f32 %v2805, %v3068
      %v3070 = vpop.f32.mrf.mxu0
      %3071 = vmatprep.mubr.bf16.mxu0 0
      %3072 = vmatmul.mubr.bf16.gmra.mxu0 %v2487
      %v3073 = vpop.f32.mrf.mxu0
      %v3074 = vadd.f32 %v2805, %v3073
      %v3075 = vpop.f32.mrf.mxu0
      %v3076 = vpop.f32.mrf.mxu0
      %v3077 = vadd.f32 %v2805, %v3076
      %v3078 = vpop.f32.mrf.mxu0
      %3079 = vmatprep.mubr.bf16.mxu0 0
      %3080 = vmatmul.mubr.bf16.gmra.mxu0 %v2488
      %v3081 = vpop.f32.mrf.mxu0
      %v3082 = vadd.f32 %v2805, %v3081
      %v3083 = vpop.f32.mrf.mxu0
      %v3084 = vpop.f32.mrf.mxu0
      %v3085 = vadd.f32 %v2805, %v3084
      %v3086 = vpop.f32.mrf.mxu0
      %3087 = vmatprep.mubr.bf16.mxu0 0
      %3088 = vmatmul.mubr.bf16.gmra.mxu0 %v2489
      %v3089 = vpop.f32.mrf.mxu0
      %v3090 = vadd.f32 %v2805, %v3089
      %v3091 = vpop.f32.mrf.mxu0
      %v3092 = vpop.f32.mrf.mxu0
      %v3093 = vadd.f32 %v2805, %v3092
      %v3094 = vpop.f32.mrf.mxu0
      %3095 = vmatprep.mubr.bf16.mxu0 0
      %3096 = vmatmul.mubr.bf16.gmra.mxu0 %v2490
      %v3097 = vpop.f32.mrf.mxu0
      %v3098 = vadd.f32 %v2805, %v3097
      %v3099 = vpop.f32.mrf.mxu0
      %v3100 = vpop.f32.mrf.mxu0
      %v3101 = vadd.f32 %v2805, %v3100
      %v3102 = vpop.f32.mrf.mxu0
      %3103 = vmatprep.mubr.bf16.mxu0 0
      %3104 = vmatmul.mubr.bf16.gmra.mxu0 %v2491
      %v3105 = vpop.f32.mrf.mxu0
      %v3106 = vadd.f32 %v2805, %v3105
      %v3107 = vpop.f32.mrf.mxu0
      %v3108 = vpop.f32.mrf.mxu0
      %v3109 = vadd.f32 %v2805, %v3108
      %v3110 = vpop.f32.mrf.mxu0
      %3111 = vmatprep.mubr.bf16.mxu0 0
      %3112 = vmatmul.mubr.bf16.gmra.mxu0 %v2492
      %v3113 = vpop.f32.mrf.mxu0
      %v3114 = vadd.f32 %v2805, %v3113
      %v3115 = vpop.f32.mrf.mxu0
      %v3116 = vpop.f32.mrf.mxu0
      %v3117 = vadd.f32 %v2805, %v3116
      %v3118 = vpop.f32.mrf.mxu0
      %3119 = vmatprep.mubr.bf16.mxu0 0
      %3120 = vmatmul.mubr.bf16.gmra.mxu0 %v2493
      %v3121 = vpop.f32.mrf.mxu0
      %v3122 = vadd.f32 %v2805, %v3121
      %v3123 = vpop.f32.mrf.mxu0
      %v3124 = vpop.f32.mrf.mxu0
      %v3125 = vadd.f32 %v2805, %v3124
      %v3126 = vpop.f32.mrf.mxu0
      %3127 = vmatprep.mubr.bf16.mxu0 0
      %3128 = vmatmul.mubr.bf16.gmra.mxu0 %v2494
      %v3129 = vpop.f32.mrf.mxu0
      %v3130 = vadd.f32 %v2805, %v3129
      %v3131 = vpop.f32.mrf.mxu0
      %v3132 = vpop.f32.mrf.mxu0
      %v3133 = vadd.f32 %v2805, %v3132
      %v3134 = vpop.f32.mrf.mxu0
      %3135 = vmatprep.mubr.bf16.mxu0 0
      %3136 = vmatmul.mubr.bf16.gmra.mxu0 %v2495
      %v3137 = vpop.f32.mrf.mxu0
      %v3138 = vadd.f32 %v2805, %v3137
      %v3139 = vpop.f32.mrf.mxu0
      %v3140 = vpop.f32.mrf.mxu0
      %v3141 = vadd.f32 %v2805, %v3140
      %v3142 = vpop.f32.mrf.mxu0
      %3143 = vdwg.mxu0
      %v3144 = vmax.f32 %v2890, 0.0
      %v3145 = vmax.f32 %v2893, 0.0
      %v3146 = vmax.f32 %v2898, 0.0
      %v3147 = vmax.f32 %v2901, 0.0
      %v3148 = vmax.f32 %v2906, 0.0
      %v3149 = vmax.f32 %v2909, 0.0
      %v3150 = vmax.f32 %v2914, 0.0
      %v3151 = vmax.f32 %v2917, 0.0
      %v3152 = vmax.f32 %v2922, 0.0
      %v3153 = vmax.f32 %v2925, 0.0
      %v3154 = vmax.f32 %v2930, 0.0
      %v3155 = vmax.f32 %v2933, 0.0
      %v3156 = vmax.f32 %v2938, 0.0
      %v3157 = vmax.f32 %v2941, 0.0
      %v3158 = vmax.f32 %v2946, 0.0
      %v3159 = vmax.f32 %v2949, 0.0
      %v3160 = vmax.f32 %v2954, 0.0
      %v3161 = vmax.f32 %v2957, 0.0
      %v3162 = vmax.f32 %v2962, 0.0
      %v3163 = vmax.f32 %v2965, 0.0
      %v3164 = vmax.f32 %v2970, 0.0
      %v3165 = vmax.f32 %v2973, 0.0
      %v3166 = vmax.f32 %v2978, 0.0
      %v3167 = vmax.f32 %v2981, 0.0
      %v3168 = vmax.f32 %v2986, 0.0
      %v3169 = vmax.f32 %v2989, 0.0
      %v3170 = vmax.f32 %v2994, 0.0
      %v3171 = vmax.f32 %v2997, 0.0
      %v3172 = vmax.f32 %v3002, 0.0
      %v3173 = vmax.f32 %v3005, 0.0
      %v3174 = vmax.f32 %v3010, 0.0
      %v3175 = vmax.f32 %v3013, 0.0
      %v3176 = vmax.f32 %v3018, 0.0
      %v3177 = vmax.f32 %v3021, 0.0
      %v3178 = vmax.f32 %v3026, 0.0
      %v3179 = vmax.f32 %v3029, 0.0
      %v3180 = vmax.f32 %v3034, 0.0
      %v3181 = vmax.f32 %v3037, 0.0
      %v3182 = vmax.f32 %v3042, 0.0
      %v3183 = vmax.f32 %v3045, 0.0
      %v3184 = vmax.f32 %v3050, 0.0
      %v3185 = vmax.f32 %v3053, 0.0
      %v3186 = vmax.f32 %v3058, 0.0
      %v3187 = vmax.f32 %v3061, 0.0
      %v3188 = vmax.f32 %v3066, 0.0
      %v3189 = vmax.f32 %v3069, 0.0
      %v3190 = vmax.f32 %v3074, 0.0
      %v3191 = vmax.f32 %v3077, 0.0
      %v3192 = vmax.f32 %v3082, 0.0
      %v3193 = vmax.f32 %v3085, 0.0
      %v3194 = vmax.f32 %v3090, 0.0
      %v3195 = vmax.f32 %v3093, 0.0
      %v3196 = vmax.f32 %v3098, 0.0
      %v3197 = vmax.f32 %v3101, 0.0
      %v3198 = vmax.f32 %v3106, 0.0
      %v3199 = vmax.f32 %v3109, 0.0
      %v3200 = vmax.f32 %v3114, 0.0
      %v3201 = vmax.f32 %v3117, 0.0
      %v3202 = vmax.f32 %v3122, 0.0
      %v3203 = vmax.f32 %v3125, 0.0
      %v3204 = vmax.f32 %v3130, 0.0
      %v3205 = vmax.f32 %v3133, 0.0
      %v3206 = vmax.f32 %v3138, 0.0
      %v3207 = vmax.f32 %v3141, 0.0
      %v3208 = vpack.c.bf16 %v3145, %v3144
      %v3209 = vpack.c.bf16 %v3147, %v3146
      %v3210 = vpack.c.bf16 %v3149, %v3148
      %v3211 = vpack.c.bf16 %v3151, %v3150
      %v3212 = vpack.c.bf16 %v3153, %v3152
      %v3213 = vpack.c.bf16 %v3155, %v3154
      %v3214 = vpack.c.bf16 %v3157, %v3156
      %v3215 = vpack.c.bf16 %v3159, %v3158
      %v3216 = vpack.c.bf16 %v3161, %v3160
      %v3217 = vpack.c.bf16 %v3163, %v3162
      %v3218 = vpack.c.bf16 %v3165, %v3164
      %v3219 = vpack.c.bf16 %v3167, %v3166
      %v3220 = vpack.c.bf16 %v3169, %v3168
      %v3221 = vpack.c.bf16 %v3171, %v3170
      %v3222 = vpack.c.bf16 %v3173, %v3172
      %v3223 = vpack.c.bf16 %v3175, %v3174
      %v3224 = vpack.c.bf16 %v3177, %v3176
      %v3225 = vpack.c.bf16 %v3179, %v3178
      %v3226 = vpack.c.bf16 %v3181, %v3180
      %v3227 = vpack.c.bf16 %v3183, %v3182
      %v3228 = vpack.c.bf16 %v3185, %v3184
      %v3229 = vpack.c.bf16 %v3187, %v3186
      %v3230 = vpack.c.bf16 %v3189, %v3188
      %v3231 = vpack.c.bf16 %v3191, %v3190
      %v3232 = vpack.c.bf16 %v3193, %v3192
      %v3233 = vpack.c.bf16 %v3195, %v3194
      %v3234 = vpack.c.bf16 %v3197, %v3196
      %v3235 = vpack.c.bf16 %v3199, %v3198
      %v3236 = vpack.c.bf16 %v3201, %v3200
      %v3237 = vpack.c.bf16 %v3203, %v3202
      %v3238 = vpack.c.bf16 %v3205, %v3204
      %v3239 = vpack.c.bf16 %v3207, %v3206
      %v3240 = vld [vmem:[%s9] sm:$0xf]
      %v3241 = vld [vmem:[%s9 + $0x4] sm:$0xf]
      %v3242 = vld [vmem:[%s9 + $0x8] sm:$0xf]
      %v3243 = vld [vmem:[%s9 + $0xc] sm:$0xf]
      %v3244 = vld [vmem:[%s9 + $0x10] sm:$0xf]
      %v3245 = vld [vmem:[%s9 + $0x14] sm:$0xf]
      %v3246 = vld [vmem:[%s9 + $0x18] sm:$0xf]
      %v3247 = vld [vmem:[%s9 + $0x1c] sm:$0xf]
      %v3248 = vld [vmem:[%s9 + $0x20] sm:$0xf]
      %v3249 = vld [vmem:[%s9 + $0x24] sm:$0xf]
      %v3250 = vld [vmem:[%s9 + $0x28] sm:$0xf]
      %v3251 = vld [vmem:[%s9 + $0x2c] sm:$0xf]
      %v3252 = vld [vmem:[%s9 + $0x30] sm:$0xf]
      %v3253 = vld [vmem:[%s9 + $0x34] sm:$0xf]
      %v3254 = vld [vmem:[%s9 + $0x38] sm:$0xf]
      %v3255 = vld [vmem:[%s9 + $0x3c] sm:$0xf]
      %v3256 = vld [vmem:[%s10] sm:$0x1]
      %v3258 = vlaneseq
      %v3259 = vshrl.u32 %v3258, 7
      %v3260 = vsub.s32 0, %v3259
      %v3261 = vrot.slane %v3256, %v3260
      %v3279 = vunpack.c.l.b16 %v3240
      %v3280 = vunpack.c.l.b16 %v3241
      %v3281 = vunpack.c.l.b16 %v3242
      %v3282 = vunpack.c.l.b16 %v3243
      %v3283 = vunpack.c.l.b16 %v3244
      %v3284 = vunpack.c.l.b16 %v3245
      %v3285 = vunpack.c.l.b16 %v3246
      %v3286 = vunpack.c.l.b16 %v3247
      %v3287 = vunpack.c.l.b16 %v3248
      %v3288 = vunpack.c.l.b16 %v3249
      %v3289 = vunpack.c.l.b16 %v3250
      %v3290 = vunpack.c.l.b16 %v3251
      %v3291 = vunpack.c.l.b16 %v3252
      %v3292 = vunpack.c.l.b16 %v3253
      %v3293 = vunpack.c.l.b16 %v3254
      %v3294 = vunpack.c.l.b16 %v3255
      %v3295 = vpack.c.b16 %v3280, %v3279
      %v3296 = vpack.c.b16 %v3282, %v3281
      %v3297 = vpack.c.b16 %v3284, %v3283
      %v3298 = vpack.c.b16 %v3286, %v3285
      %v3299 = vpack.c.b16 %v3288, %v3287
      %v3300 = vpack.c.b16 %v3290, %v3289
      %v3301 = vpack.c.b16 %v3292, %v3291
      %v3302 = vpack.c.b16 %v3294, %v3293
      %3311 = vmatprep.subr.bf16.mxu0 0
      %3312 = vmatpush1.bf16.msra.mxu0 %v3302
      %3313 = vmatprep.subr.bf16.mxu0 0
      %3314 = vmatpush1.bf16.msra.mxu0 %v3301
      %3315 = vmatprep.subr.bf16.mxu0 0
      %3316 = vmatpush1.bf16.msra.mxu0 %v3300
      %3317 = vmatprep.subr.bf16.mxu0 0
      %3318 = vmatpush1.bf16.msra.mxu0 %v3299
      %3319 = vmatprep.subr.bf16.mxu0 0
      %3320 = vmatpush1.bf16.msra.mxu0 %v3298
      %3321 = vmatprep.subr.bf16.mxu0 0
      %3322 = vmatpush1.bf16.msra.mxu0 %v3297
      %3323 = vmatprep.subr.bf16.mxu0 0
      %3324 = vmatpush1.bf16.msra.mxu0 %v3296
      %3325 = vmatprep.subr.bf16.mxu0 0
      %3326 = vmatpush1.bf16.msra.mxu0 %v3295
      %3327 = vmatprep.subr.bf16.mxu0 0
      %3328 = vmatpush2.bf16.msra.mxu0 0
      %3329 = vmatprep.subr.bf16.mxu0 0
      %3330 = vmatpush2.bf16.msra.mxu0 0
      %3331 = vmatprep.subr.bf16.mxu0 0
      %3332 = vmatpush2.bf16.msra.mxu0 0
      %3333 = vmatprep.subr.bf16.mxu0 0
      %3334 = vmatpush2.bf16.msra.mxu0 0
      %3335 = vmatprep.subr.bf16.mxu0 0
      %3336 = vmatpush2.bf16.msra.mxu0 0
      %3337 = vmatprep.subr.bf16.mxu0 0
      %3338 = vmatpush2.bf16.msra.mxu0 0
      %3339 = vmatprep.subr.bf16.mxu0 0
      %3340 = vmatpush2.bf16.msra.mxu0 0
      %3341 = vmatprep.subr.bf16.mxu0 0
      %3342 = vmatpush2.bf16.msra.mxu0 0
      %3343 = vmatprep.mubr.bf16.mxu0 0
      %3344 = vmatmul.mubr.bf16.gmra.mxu0 %v3208
      %v3345 = vpop.f32.mrf.mxu0
      %v3346 = vadd.f32 %v3261, %v3345
      %v3347 = vpop.f32.mrf.mxu0
      %v3348 = vpop.f32.mrf.mxu0
      %v3349 = vadd.f32 %v3261, %v3348
      %v3350 = vpop.f32.mrf.mxu0
      %3351 = vmatprep.mubr.bf16.mxu0 0
      %3352 = vmatmul.mubr.bf16.gmra.mxu0 %v3209
      %v3353 = vpop.f32.mrf.mxu0
      %v3354 = vadd.f32 %v3261, %v3353
      %v3355 = vpop.f32.mrf.mxu0
      %v3356 = vpop.f32.mrf.mxu0
      %v3357 = vadd.f32 %v3261, %v3356
      %v3358 = vpop.f32.mrf.mxu0
      %3359 = vmatprep.mubr.bf16.mxu0 0
      %3360 = vmatmul.mubr.bf16.gmra.mxu0 %v3210
      %v3361 = vpop.f32.mrf.mxu0
      %v3362 = vadd.f32 %v3261, %v3361
      %v3363 = vpop.f32.mrf.mxu0
      %v3364 = vpop.f32.mrf.mxu0
      %v3365 = vadd.f32 %v3261, %v3364
      %v3366 = vpop.f32.mrf.mxu0
      %3367 = vmatprep.mubr.bf16.mxu0 0
      %3368 = vmatmul.mubr.bf16.gmra.mxu0 %v3211
      %v3369 = vpop.f32.mrf.mxu0
      %v3370 = vadd.f32 %v3261, %v3369
      %v3371 = vpop.f32.mrf.mxu0
      %v3372 = vpop.f32.mrf.mxu0
      %v3373 = vadd.f32 %v3261, %v3372
      %v3374 = vpop.f32.mrf.mxu0
      %3375 = vmatprep.mubr.bf16.mxu0 0
      %3376 = vmatmul.mubr.bf16.gmra.mxu0 %v3212
      %v3377 = vpop.f32.mrf.mxu0
      %v3378 = vadd.f32 %v3261, %v3377
      %v3379 = vpop.f32.mrf.mxu0
      %v3380 = vpop.f32.mrf.mxu0
      %v3381 = vadd.f32 %v3261, %v3380
      %v3382 = vpop.f32.mrf.mxu0
      %3383 = vmatprep.mubr.bf16.mxu0 0
      %3384 = vmatmul.mubr.bf16.gmra.mxu0 %v3213
      %v3385 = vpop.f32.mrf.mxu0
      %v3386 = vadd.f32 %v3261, %v3385
      %v3387 = vpop.f32.mrf.mxu0
      %v3388 = vpop.f32.mrf.mxu0
      %v3389 = vadd.f32 %v3261, %v3388
      %v3390 = vpop.f32.mrf.mxu0
      %3391 = vmatprep.mubr.bf16.mxu0 0
      %3392 = vmatmul.mubr.bf16.gmra.mxu0 %v3214
      %v3393 = vpop.f32.mrf.mxu0
      %v3394 = vadd.f32 %v3261, %v3393
      %v3395 = vpop.f32.mrf.mxu0
      %v3396 = vpop.f32.mrf.mxu0
      %v3397 = vadd.f32 %v3261, %v3396
      %v3398 = vpop.f32.mrf.mxu0
      %3399 = vmatprep.mubr.bf16.mxu0 0
      %3400 = vmatmul.mubr.bf16.gmra.mxu0 %v3215
      %v3401 = vpop.f32.mrf.mxu0
      %v3402 = vadd.f32 %v3261, %v3401
      %v3403 = vpop.f32.mrf.mxu0
      %v3404 = vpop.f32.mrf.mxu0
      %v3405 = vadd.f32 %v3261, %v3404
      %v3406 = vpop.f32.mrf.mxu0
      %3407 = vmatprep.mubr.bf16.mxu0 0
      %3408 = vmatmul.mubr.bf16.gmra.mxu0 %v3216
      %v3409 = vpop.f32.mrf.mxu0
      %v3410 = vadd.f32 %v3261, %v3409
      %v3411 = vpop.f32.mrf.mxu0
      %v3412 = vpop.f32.mrf.mxu0
      %v3413 = vadd.f32 %v3261, %v3412
      %v3414 = vpop.f32.mrf.mxu0
      %3415 = vmatprep.mubr.bf16.mxu0 0
      %3416 = vmatmul.mubr.bf16.gmra.mxu0 %v3217
      %v3417 = vpop.f32.mrf.mxu0
      %v3418 = vadd.f32 %v3261, %v3417
      %v3419 = vpop.f32.mrf.mxu0
      %v3420 = vpop.f32.mrf.mxu0
      %v3421 = vadd.f32 %v3261, %v3420
      %v3422 = vpop.f32.mrf.mxu0
      %3423 = vmatprep.mubr.bf16.mxu0 0
      %3424 = vmatmul.mubr.bf16.gmra.mxu0 %v3218
      %v3425 = vpop.f32.mrf.mxu0
      %v3426 = vadd.f32 %v3261, %v3425
      %v3427 = vpop.f32.mrf.mxu0
      %v3428 = vpop.f32.mrf.mxu0
      %v3429 = vadd.f32 %v3261, %v3428
      %v3430 = vpop.f32.mrf.mxu0
      %3431 = vmatprep.mubr.bf16.mxu0 0
      %3432 = vmatmul.mubr.bf16.gmra.mxu0 %v3219
      %v3433 = vpop.f32.mrf.mxu0
      %v3434 = vadd.f32 %v3261, %v3433
      %v3435 = vpop.f32.mrf.mxu0
      %v3436 = vpop.f32.mrf.mxu0
      %v3437 = vadd.f32 %v3261, %v3436
      %v3438 = vpop.f32.mrf.mxu0
      %3439 = vmatprep.mubr.bf16.mxu0 0
      %3440 = vmatmul.mubr.bf16.gmra.mxu0 %v3220
      %v3441 = vpop.f32.mrf.mxu0
      %v3442 = vadd.f32 %v3261, %v3441
      %v3443 = vpop.f32.mrf.mxu0
      %v3444 = vpop.f32.mrf.mxu0
      %v3445 = vadd.f32 %v3261, %v3444
      %v3446 = vpop.f32.mrf.mxu0
      %3447 = vmatprep.mubr.bf16.mxu0 0
      %3448 = vmatmul.mubr.bf16.gmra.mxu0 %v3221
      %v3449 = vpop.f32.mrf.mxu0
      %v3450 = vadd.f32 %v3261, %v3449
      %v3451 = vpop.f32.mrf.mxu0
      %v3452 = vpop.f32.mrf.mxu0
      %v3453 = vadd.f32 %v3261, %v3452
      %v3454 = vpop.f32.mrf.mxu0
      %3455 = vmatprep.mubr.bf16.mxu0 0
      %3456 = vmatmul.mubr.bf16.gmra.mxu0 %v3222
      %v3457 = vpop.f32.mrf.mxu0
      %v3458 = vadd.f32 %v3261, %v3457
      %v3459 = vpop.f32.mrf.mxu0
      %v3460 = vpop.f32.mrf.mxu0
      %v3461 = vadd.f32 %v3261, %v3460
      %v3462 = vpop.f32.mrf.mxu0
      %3463 = vmatprep.mubr.bf16.mxu0 0
      %3464 = vmatmul.mubr.bf16.gmra.mxu0 %v3223
      %v3465 = vpop.f32.mrf.mxu0
      %v3466 = vadd.f32 %v3261, %v3465
      %v3467 = vpop.f32.mrf.mxu0
      %v3468 = vpop.f32.mrf.mxu0
      %v3469 = vadd.f32 %v3261, %v3468
      %v3470 = vpop.f32.mrf.mxu0
      %3471 = vmatprep.mubr.bf16.mxu0 0
      %3472 = vmatmul.mubr.bf16.gmra.mxu0 %v3224
      %v3473 = vpop.f32.mrf.mxu0
      %v3474 = vadd.f32 %v3261, %v3473
      %v3475 = vpop.f32.mrf.mxu0
      %v3476 = vpop.f32.mrf.mxu0
      %v3477 = vadd.f32 %v3261, %v3476
      %v3478 = vpop.f32.mrf.mxu0
      %3479 = vmatprep.mubr.bf16.mxu0 0
      %3480 = vmatmul.mubr.bf16.gmra.mxu0 %v3225
      %v3481 = vpop.f32.mrf.mxu0
      %v3482 = vadd.f32 %v3261, %v3481
      %v3483 = vpop.f32.mrf.mxu0
      %v3484 = vpop.f32.mrf.mxu0
      %v3485 = vadd.f32 %v3261, %v3484
      %v3486 = vpop.f32.mrf.mxu0
      %3487 = vmatprep.mubr.bf16.mxu0 0
      %3488 = vmatmul.mubr.bf16.gmra.mxu0 %v3226
      %v3489 = vpop.f32.mrf.mxu0
      %v3490 = vadd.f32 %v3261, %v3489
      %v3491 = vpop.f32.mrf.mxu0
      %v3492 = vpop.f32.mrf.mxu0
      %v3493 = vadd.f32 %v3261, %v3492
      %v3494 = vpop.f32.mrf.mxu0
      %3495 = vmatprep.mubr.bf16.mxu0 0
      %3496 = vmatmul.mubr.bf16.gmra.mxu0 %v3227
      %v3497 = vpop.f32.mrf.mxu0
      %v3498 = vadd.f32 %v3261, %v3497
      %v3499 = vpop.f32.mrf.mxu0
      %v3500 = vpop.f32.mrf.mxu0
      %v3501 = vadd.f32 %v3261, %v3500
      %v3502 = vpop.f32.mrf.mxu0
      %3503 = vmatprep.mubr.bf16.mxu0 0
      %3504 = vmatmul.mubr.bf16.gmra.mxu0 %v3228
      %v3505 = vpop.f32.mrf.mxu0
      %v3506 = vadd.f32 %v3261, %v3505
      %v3507 = vpop.f32.mrf.mxu0
      %v3508 = vpop.f32.mrf.mxu0
      %v3509 = vadd.f32 %v3261, %v3508
      %v3510 = vpop.f32.mrf.mxu0
      %3511 = vmatprep.mubr.bf16.mxu0 0
      %3512 = vmatmul.mubr.bf16.gmra.mxu0 %v3229
      %v3513 = vpop.f32.mrf.mxu0
      %v3514 = vadd.f32 %v3261, %v3513
      %v3515 = vpop.f32.mrf.mxu0
      %v3516 = vpop.f32.mrf.mxu0
      %v3517 = vadd.f32 %v3261, %v3516
      %v3518 = vpop.f32.mrf.mxu0
      %3519 = vmatprep.mubr.bf16.mxu0 0
      %3520 = vmatmul.mubr.bf16.gmra.mxu0 %v3230
      %v3521 = vpop.f32.mrf.mxu0
      %v3522 = vadd.f32 %v3261, %v3521
      %v3523 = vpop.f32.mrf.mxu0
      %v3524 = vpop.f32.mrf.mxu0
      %v3525 = vadd.f32 %v3261, %v3524
      %v3526 = vpop.f32.mrf.mxu0
      %3527 = vmatprep.mubr.bf16.mxu0 0
      %3528 = vmatmul.mubr.bf16.gmra.mxu0 %v3231
      %v3529 = vpop.f32.mrf.mxu0
      %v3530 = vadd.f32 %v3261, %v3529
      %v3531 = vpop.f32.mrf.mxu0
      %v3532 = vpop.f32.mrf.mxu0
      %v3533 = vadd.f32 %v3261, %v3532
      %v3534 = vpop.f32.mrf.mxu0
      %3535 = vmatprep.mubr.bf16.mxu0 0
      %3536 = vmatmul.mubr.bf16.gmra.mxu0 %v3232
      %v3537 = vpop.f32.mrf.mxu0
      %v3538 = vadd.f32 %v3261, %v3537
      %v3539 = vpop.f32.mrf.mxu0
      %v3540 = vpop.f32.mrf.mxu0
      %v3541 = vadd.f32 %v3261, %v3540
      %v3542 = vpop.f32.mrf.mxu0
      %3543 = vmatprep.mubr.bf16.mxu0 0
      %3544 = vmatmul.mubr.bf16.gmra.mxu0 %v3233
      %v3545 = vpop.f32.mrf.mxu0
      %v3546 = vadd.f32 %v3261, %v3545
      %v3547 = vpop.f32.mrf.mxu0
      %v3548 = vpop.f32.mrf.mxu0
      %v3549 = vadd.f32 %v3261, %v3548
      %v3550 = vpop.f32.mrf.mxu0
      %3551 = vmatprep.mubr.bf16.mxu0 0
      %3552 = vmatmul.mubr.bf16.gmra.mxu0 %v3234
      %v3553 = vpop.f32.mrf.mxu0
      %v3554 = vadd.f32 %v3261, %v3553
      %v3555 = vpop.f32.mrf.mxu0
      %v3556 = vpop.f32.mrf.mxu0
      %v3557 = vadd.f32 %v3261, %v3556
      %v3558 = vpop.f32.mrf.mxu0
      %3559 = vmatprep.mubr.bf16.mxu0 0
      %3560 = vmatmul.mubr.bf16.gmra.mxu0 %v3235
      %v3561 = vpop.f32.mrf.mxu0
      %v3562 = vadd.f32 %v3261, %v3561
      %v3563 = vpop.f32.mrf.mxu0
      %v3564 = vpop.f32.mrf.mxu0
      %v3565 = vadd.f32 %v3261, %v3564
      %v3566 = vpop.f32.mrf.mxu0
      %3567 = vmatprep.mubr.bf16.mxu0 0
      %3568 = vmatmul.mubr.bf16.gmra.mxu0 %v3236
      %v3569 = vpop.f32.mrf.mxu0
      %v3570 = vadd.f32 %v3261, %v3569
      %v3571 = vpop.f32.mrf.mxu0
      %v3572 = vpop.f32.mrf.mxu0
      %v3573 = vadd.f32 %v3261, %v3572
      %v3574 = vpop.f32.mrf.mxu0
      %3575 = vmatprep.mubr.bf16.mxu0 0
      %3576 = vmatmul.mubr.bf16.gmra.mxu0 %v3237
      %v3577 = vpop.f32.mrf.mxu0
      %v3578 = vadd.f32 %v3261, %v3577
      %v3579 = vpop.f32.mrf.mxu0
      %v3580 = vpop.f32.mrf.mxu0
      %v3581 = vadd.f32 %v3261, %v3580
      %v3582 = vpop.f32.mrf.mxu0
      %3583 = vmatprep.mubr.bf16.mxu0 0
      %3584 = vmatmul.mubr.bf16.gmra.mxu0 %v3238
      %v3585 = vpop.f32.mrf.mxu0
      %v3586 = vadd.f32 %v3261, %v3585
      %v3587 = vpop.f32.mrf.mxu0
      %v3588 = vpop.f32.mrf.mxu0
      %v3589 = vadd.f32 %v3261, %v3588
      %v3590 = vpop.f32.mrf.mxu0
      %3591 = vmatprep.mubr.bf16.mxu0 0
      %3592 = vmatmul.mubr.bf16.gmra.mxu0 %v3239
      %v3593 = vpop.f32.mrf.mxu0
      %v3594 = vadd.f32 %v3261, %v3593
      %v3595 = vpop.f32.mrf.mxu0
      %v3596 = vpop.f32.mrf.mxu0
      %v3597 = vadd.f32 %v3261, %v3596
      %v3598 = vpop.f32.mrf.mxu0
      %3599 = vdwg.mxu0
      %v3600 = vmax.f32 %v3346, 0.0
      %v3601 = vmax.f32 %v3349, 0.0
      %v3602 = vmax.f32 %v3354, 0.0
      %v3603 = vmax.f32 %v3357, 0.0
      %v3604 = vmax.f32 %v3362, 0.0
      %v3605 = vmax.f32 %v3365, 0.0
      %v3606 = vmax.f32 %v3370, 0.0
      %v3607 = vmax.f32 %v3373, 0.0
      %v3608 = vmax.f32 %v3378, 0.0
      %v3609 = vmax.f32 %v3381, 0.0
      %v3610 = vmax.f32 %v3386, 0.0
      %v3611 = vmax.f32 %v3389, 0.0
      %v3612 = vmax.f32 %v3394, 0.0
      %v3613 = vmax.f32 %v3397, 0.0
      %v3614 = vmax.f32 %v3402, 0.0
      %v3615 = vmax.f32 %v3405, 0.0
      %v3616 = vmax.f32 %v3410, 0.0
      %v3617 = vmax.f32 %v3413, 0.0
      %v3618 = vmax.f32 %v3418, 0.0
      %v3619 = vmax.f32 %v3421, 0.0
      %v3620 = vmax.f32 %v3426, 0.0
      %v3621 = vmax.f32 %v3429, 0.0
      %v3622 = vmax.f32 %v3434, 0.0
      %v3623 = vmax.f32 %v3437, 0.0
      %v3624 = vmax.f32 %v3442, 0.0
      %v3625 = vmax.f32 %v3445, 0.0
      %v3626 = vmax.f32 %v3450, 0.0
      %v3627 = vmax.f32 %v3453, 0.0
      %v3628 = vmax.f32 %v3458, 0.0
      %v3629 = vmax.f32 %v3461, 0.0
      %v3630 = vmax.f32 %v3466, 0.0
      %v3631 = vmax.f32 %v3469, 0.0
      %v3632 = vmax.f32 %v3474, 0.0
      %v3633 = vmax.f32 %v3477, 0.0
      %v3634 = vmax.f32 %v3482, 0.0
      %v3635 = vmax.f32 %v3485, 0.0
      %v3636 = vmax.f32 %v3490, 0.0
      %v3637 = vmax.f32 %v3493, 0.0
      %v3638 = vmax.f32 %v3498, 0.0
      %v3639 = vmax.f32 %v3501, 0.0
      %v3640 = vmax.f32 %v3506, 0.0
      %v3641 = vmax.f32 %v3509, 0.0
      %v3642 = vmax.f32 %v3514, 0.0
      %v3643 = vmax.f32 %v3517, 0.0
      %v3644 = vmax.f32 %v3522, 0.0
      %v3645 = vmax.f32 %v3525, 0.0
      %v3646 = vmax.f32 %v3530, 0.0
      %v3647 = vmax.f32 %v3533, 0.0
      %v3648 = vmax.f32 %v3538, 0.0
      %v3649 = vmax.f32 %v3541, 0.0
      %v3650 = vmax.f32 %v3546, 0.0
      %v3651 = vmax.f32 %v3549, 0.0
      %v3652 = vmax.f32 %v3554, 0.0
      %v3653 = vmax.f32 %v3557, 0.0
      %v3654 = vmax.f32 %v3562, 0.0
      %v3655 = vmax.f32 %v3565, 0.0
      %v3656 = vmax.f32 %v3570, 0.0
      %v3657 = vmax.f32 %v3573, 0.0
      %v3658 = vmax.f32 %v3578, 0.0
      %v3659 = vmax.f32 %v3581, 0.0
      %v3660 = vmax.f32 %v3586, 0.0
      %v3661 = vmax.f32 %v3589, 0.0
      %v3662 = vmax.f32 %v3594, 0.0
      %v3663 = vmax.f32 %v3597, 0.0
      %v3664 = vpack.c.bf16 %v3601, %v3600
      %v3665 = vpack.c.bf16 %v3603, %v3602
      %v3666 = vpack.c.bf16 %v3605, %v3604
      %v3667 = vpack.c.bf16 %v3607, %v3606
      %v3668 = vpack.c.bf16 %v3609, %v3608
      %v3669 = vpack.c.bf16 %v3611, %v3610
      %v3670 = vpack.c.bf16 %v3613, %v3612
      %v3671 = vpack.c.bf16 %v3615, %v3614
      %v3672 = vpack.c.bf16 %v3617, %v3616
      %v3673 = vpack.c.bf16 %v3619, %v3618
      %v3674 = vpack.c.bf16 %v3621, %v3620
      %v3675 = vpack.c.bf16 %v3623, %v3622
      %v3676 = vpack.c.bf16 %v3625, %v3624
      %v3677 = vpack.c.bf16 %v3627, %v3626
      %v3678 = vpack.c.bf16 %v3629, %v3628
      %v3679 = vpack.c.bf16 %v3631, %v3630
      %v3680 = vpack.c.bf16 %v3633, %v3632
      %v3681 = vpack.c.bf16 %v3635, %v3634
      %v3682 = vpack.c.bf16 %v3637, %v3636
      %v3683 = vpack.c.bf16 %v3639, %v3638
      %v3684 = vpack.c.bf16 %v3641, %v3640
      %v3685 = vpack.c.bf16 %v3643, %v3642
      %v3686 = vpack.c.bf16 %v3645, %v3644
      %v3687 = vpack.c.bf16 %v3647, %v3646
      %v3688 = vpack.c.bf16 %v3649, %v3648
      %v3689 = vpack.c.bf16 %v3651, %v3650
      %v3690 = vpack.c.bf16 %v3653, %v3652
      %v3691 = vpack.c.bf16 %v3655, %v3654
      %v3692 = vpack.c.bf16 %v3657, %v3656
      %v3693 = vpack.c.bf16 %v3659, %v3658
      %v3694 = vpack.c.bf16 %v3661, %v3660
      %v3695 = vpack.c.bf16 %v3663, %v3662
      %v3696 = vld [vmem:[%s11] sm:$0xf]
      %v3697 = vld [vmem:[%s11 + $0x4] sm:$0xf]
      %v3698 = vld [vmem:[%s11 + $0x8] sm:$0xf]
      %v3699 = vld [vmem:[%s11 + $0xc] sm:$0xf]
      %v3700 = vld [vmem:[%s11 + $0x10] sm:$0xf]
      %v3701 = vld [vmem:[%s11 + $0x14] sm:$0xf]
      %v3702 = vld [vmem:[%s11 + $0x18] sm:$0xf]
      %v3703 = vld [vmem:[%s11 + $0x1c] sm:$0xf]
      %v3704 = vld [vmem:[%s11 + $0x20] sm:$0xf]
      %v3705 = vld [vmem:[%s11 + $0x24] sm:$0xf]
      %v3706 = vld [vmem:[%s11 + $0x28] sm:$0xf]
      %v3707 = vld [vmem:[%s11 + $0x2c] sm:$0xf]
      %v3708 = vld [vmem:[%s11 + $0x30] sm:$0xf]
      %v3709 = vld [vmem:[%s11 + $0x34] sm:$0xf]
      %v3710 = vld [vmem:[%s11 + $0x38] sm:$0xf]
      %v3711 = vld [vmem:[%s11 + $0x3c] sm:$0xf]
      %v3712 = vld [vmem:[%s12] sm:$0x1]
      %v3714 = vlaneseq
      %v3715 = vshrl.u32 %v3714, 7
      %v3716 = vsub.s32 0, %v3715
      %v3717 = vrot.slane %v3712, %v3716
      %v3735 = vunpack.c.l.b16 %v3696
      %v3736 = vunpack.c.l.b16 %v3697
      %v3737 = vunpack.c.l.b16 %v3698
      %v3738 = vunpack.c.l.b16 %v3699
      %v3739 = vunpack.c.l.b16 %v3700
      %v3740 = vunpack.c.l.b16 %v3701
      %v3741 = vunpack.c.l.b16 %v3702
      %v3742 = vunpack.c.l.b16 %v3703
      %v3743 = vunpack.c.l.b16 %v3704
      %v3744 = vunpack.c.l.b16 %v3705
      %v3745 = vunpack.c.l.b16 %v3706
      %v3746 = vunpack.c.l.b16 %v3707
      %v3747 = vunpack.c.l.b16 %v3708
      %v3748 = vunpack.c.l.b16 %v3709
      %v3749 = vunpack.c.l.b16 %v3710
      %v3750 = vunpack.c.l.b16 %v3711
      %v3751 = vpack.c.b16 %v3736, %v3735
      %v3752 = vpack.c.b16 %v3738, %v3737
      %v3753 = vpack.c.b16 %v3740, %v3739
      %v3754 = vpack.c.b16 %v3742, %v3741
      %v3755 = vpack.c.b16 %v3744, %v3743
      %v3756 = vpack.c.b16 %v3746, %v3745
      %v3757 = vpack.c.b16 %v3748, %v3747
      %v3758 = vpack.c.b16 %v3750, %v3749
      %3767 = vmatprep.subr.bf16.mxu0 0
      %3768 = vmatpush1.bf16.msra.mxu0 %v3758
      %3769 = vmatprep.subr.bf16.mxu0 0
      %3770 = vmatpush1.bf16.msra.mxu0 %v3757
      %3771 = vmatprep.subr.bf16.mxu0 0
      %3772 = vmatpush1.bf16.msra.mxu0 %v3756
      %3773 = vmatprep.subr.bf16.mxu0 0
      %3774 = vmatpush1.bf16.msra.mxu0 %v3755
      %3775 = vmatprep.subr.bf16.mxu0 0
      %3776 = vmatpush1.bf16.msra.mxu0 %v3754
      %3777 = vmatprep.subr.bf16.mxu0 0
      %3778 = vmatpush1.bf16.msra.mxu0 %v3753
      %3779 = vmatprep.subr.bf16.mxu0 0
      %3780 = vmatpush1.bf16.msra.mxu0 %v3752
      %3781 = vmatprep.subr.bf16.mxu0 0
      %3782 = vmatpush1.bf16.msra.mxu0 %v3751
      %3783 = vmatprep.subr.bf16.mxu0 0
      %3784 = vmatpush2.bf16.msra.mxu0 0
      %3785 = vmatprep.subr.bf16.mxu0 0
      %3786 = vmatpush2.bf16.msra.mxu0 0
      %3787 = vmatprep.subr.bf16.mxu0 0
      %3788 = vmatpush2.bf16.msra.mxu0 0
      %3789 = vmatprep.subr.bf16.mxu0 0
      %3790 = vmatpush2.bf16.msra.mxu0 0
      %3791 = vmatprep.subr.bf16.mxu0 0
      %3792 = vmatpush2.bf16.msra.mxu0 0
      %3793 = vmatprep.subr.bf16.mxu0 0
      %3794 = vmatpush2.bf16.msra.mxu0 0
      %3795 = vmatprep.subr.bf16.mxu0 0
      %3796 = vmatpush2.bf16.msra.mxu0 0
      %3797 = vmatprep.subr.bf16.mxu0 0
      %3798 = vmatpush2.bf16.msra.mxu0 0
      %3799 = vmatprep.mubr.bf16.mxu0 0
      %3800 = vmatmul.mubr.bf16.gmra.mxu0 %v3664
      %v3801 = vpop.f32.mrf.mxu0
      %v3802 = vadd.f32 %v3717, %v3801
      %v3803 = vpop.f32.mrf.mxu0
      %v3804 = vpop.f32.mrf.mxu0
      %v3805 = vadd.f32 %v3717, %v3804
      %v3806 = vpop.f32.mrf.mxu0
      %3807 = vmatprep.mubr.bf16.mxu0 0
      %3808 = vmatmul.mubr.bf16.gmra.mxu0 %v3665
      %v3809 = vpop.f32.mrf.mxu0
      %v3810 = vadd.f32 %v3717, %v3809
      %v3811 = vpop.f32.mrf.mxu0
      %v3812 = vpop.f32.mrf.mxu0
      %v3813 = vadd.f32 %v3717, %v3812
      %v3814 = vpop.f32.mrf.mxu0
      %3815 = vmatprep.mubr.bf16.mxu0 0
      %3816 = vmatmul.mubr.bf16.gmra.mxu0 %v3666
      %v3817 = vpop.f32.mrf.mxu0
      %v3818 = vadd.f32 %v3717, %v3817
      %v3819 = vpop.f32.mrf.mxu0
      %v3820 = vpop.f32.mrf.mxu0
      %v3821 = vadd.f32 %v3717, %v3820
      %v3822 = vpop.f32.mrf.mxu0
      %3823 = vmatprep.mubr.bf16.mxu0 0
      %3824 = vmatmul.mubr.bf16.gmra.mxu0 %v3667
      %v3825 = vpop.f32.mrf.mxu0
      %v3826 = vadd.f32 %v3717, %v3825
      %v3827 = vpop.f32.mrf.mxu0
      %v3828 = vpop.f32.mrf.mxu0
      %v3829 = vadd.f32 %v3717, %v3828
      %v3830 = vpop.f32.mrf.mxu0
      %3831 = vmatprep.mubr.bf16.mxu0 0
      %3832 = vmatmul.mubr.bf16.gmra.mxu0 %v3668
      %v3833 = vpop.f32.mrf.mxu0
      %v3834 = vadd.f32 %v3717, %v3833
      %v3835 = vpop.f32.mrf.mxu0
      %v3836 = vpop.f32.mrf.mxu0
      %v3837 = vadd.f32 %v3717, %v3836
      %v3838 = vpop.f32.mrf.mxu0
      %3839 = vmatprep.mubr.bf16.mxu0 0
      %3840 = vmatmul.mubr.bf16.gmra.mxu0 %v3669
      %v3841 = vpop.f32.mrf.mxu0
      %v3842 = vadd.f32 %v3717, %v3841
      %v3843 = vpop.f32.mrf.mxu0
      %v3844 = vpop.f32.mrf.mxu0
      %v3845 = vadd.f32 %v3717, %v3844
      %v3846 = vpop.f32.mrf.mxu0
      %3847 = vmatprep.mubr.bf16.mxu0 0
      %3848 = vmatmul.mubr.bf16.gmra.mxu0 %v3670
      %v3849 = vpop.f32.mrf.mxu0
      %v3850 = vadd.f32 %v3717, %v3849
      %v3851 = vpop.f32.mrf.mxu0
      %v3852 = vpop.f32.mrf.mxu0
      %v3853 = vadd.f32 %v3717, %v3852
      %v3854 = vpop.f32.mrf.mxu0
      %3855 = vmatprep.mubr.bf16.mxu0 0
      %3856 = vmatmul.mubr.bf16.gmra.mxu0 %v3671
      %v3857 = vpop.f32.mrf.mxu0
      %v3858 = vadd.f32 %v3717, %v3857
      %v3859 = vpop.f32.mrf.mxu0
      %v3860 = vpop.f32.mrf.mxu0
      %v3861 = vadd.f32 %v3717, %v3860
      %v3862 = vpop.f32.mrf.mxu0
      %3863 = vmatprep.mubr.bf16.mxu0 0
      %3864 = vmatmul.mubr.bf16.gmra.mxu0 %v3672
      %v3865 = vpop.f32.mrf.mxu0
      %v3866 = vadd.f32 %v3717, %v3865
      %v3867 = vpop.f32.mrf.mxu0
      %v3868 = vpop.f32.mrf.mxu0
      %v3869 = vadd.f32 %v3717, %v3868
      %v3870 = vpop.f32.mrf.mxu0
      %3871 = vmatprep.mubr.bf16.mxu0 0
      %3872 = vmatmul.mubr.bf16.gmra.mxu0 %v3673
      %v3873 = vpop.f32.mrf.mxu0
      %v3874 = vadd.f32 %v3717, %v3873
      %v3875 = vpop.f32.mrf.mxu0
      %v3876 = vpop.f32.mrf.mxu0
      %v3877 = vadd.f32 %v3717, %v3876
      %v3878 = vpop.f32.mrf.mxu0
      %3879 = vmatprep.mubr.bf16.mxu0 0
      %3880 = vmatmul.mubr.bf16.gmra.mxu0 %v3674
      %v3881 = vpop.f32.mrf.mxu0
      %v3882 = vadd.f32 %v3717, %v3881
      %v3883 = vpop.f32.mrf.mxu0
      %v3884 = vpop.f32.mrf.mxu0
      %v3885 = vadd.f32 %v3717, %v3884
      %v3886 = vpop.f32.mrf.mxu0
      %3887 = vmatprep.mubr.bf16.mxu0 0
      %3888 = vmatmul.mubr.bf16.gmra.mxu0 %v3675
      %v3889 = vpop.f32.mrf.mxu0
      %v3890 = vadd.f32 %v3717, %v3889
      %v3891 = vpop.f32.mrf.mxu0
      %v3892 = vpop.f32.mrf.mxu0
      %v3893 = vadd.f32 %v3717, %v3892
      %v3894 = vpop.f32.mrf.mxu0
      %3895 = vmatprep.mubr.bf16.mxu0 0
      %3896 = vmatmul.mubr.bf16.gmra.mxu0 %v3676
      %v3897 = vpop.f32.mrf.mxu0
      %v3898 = vadd.f32 %v3717, %v3897
      %v3899 = vpop.f32.mrf.mxu0
      %v3900 = vpop.f32.mrf.mxu0
      %v3901 = vadd.f32 %v3717, %v3900
      %v3902 = vpop.f32.mrf.mxu0
      %3903 = vmatprep.mubr.bf16.mxu0 0
      %3904 = vmatmul.mubr.bf16.gmra.mxu0 %v3677
      %v3905 = vpop.f32.mrf.mxu0
      %v3906 = vadd.f32 %v3717, %v3905
      %v3907 = vpop.f32.mrf.mxu0
      %v3908 = vpop.f32.mrf.mxu0
      %v3909 = vadd.f32 %v3717, %v3908
      %v3910 = vpop.f32.mrf.mxu0
      %3911 = vmatprep.mubr.bf16.mxu0 0
      %3912 = vmatmul.mubr.bf16.gmra.mxu0 %v3678
      %v3913 = vpop.f32.mrf.mxu0
      %v3914 = vadd.f32 %v3717, %v3913
      %v3915 = vpop.f32.mrf.mxu0
      %v3916 = vpop.f32.mrf.mxu0
      %v3917 = vadd.f32 %v3717, %v3916
      %v3918 = vpop.f32.mrf.mxu0
      %3919 = vmatprep.mubr.bf16.mxu0 0
      %3920 = vmatmul.mubr.bf16.gmra.mxu0 %v3679
      %v3921 = vpop.f32.mrf.mxu0
      %v3922 = vadd.f32 %v3717, %v3921
      %v3923 = vpop.f32.mrf.mxu0
      %v3924 = vpop.f32.mrf.mxu0
      %v3925 = vadd.f32 %v3717, %v3924
      %v3926 = vpop.f32.mrf.mxu0
      %3927 = vmatprep.mubr.bf16.mxu0 0
      %3928 = vmatmul.mubr.bf16.gmra.mxu0 %v3680
      %v3929 = vpop.f32.mrf.mxu0
      %v3930 = vadd.f32 %v3717, %v3929
      %v3931 = vpop.f32.mrf.mxu0
      %v3932 = vpop.f32.mrf.mxu0
      %v3933 = vadd.f32 %v3717, %v3932
      %v3934 = vpop.f32.mrf.mxu0
      %3935 = vmatprep.mubr.bf16.mxu0 0
      %3936 = vmatmul.mubr.bf16.gmra.mxu0 %v3681
      %v3937 = vpop.f32.mrf.mxu0
      %v3938 = vadd.f32 %v3717, %v3937
      %v3939 = vpop.f32.mrf.mxu0
      %v3940 = vpop.f32.mrf.mxu0
      %v3941 = vadd.f32 %v3717, %v3940
      %v3942 = vpop.f32.mrf.mxu0
      %3943 = vmatprep.mubr.bf16.mxu0 0
      %3944 = vmatmul.mubr.bf16.gmra.mxu0 %v3682
      %v3945 = vpop.f32.mrf.mxu0
      %v3946 = vadd.f32 %v3717, %v3945
      %v3947 = vpop.f32.mrf.mxu0
      %v3948 = vpop.f32.mrf.mxu0
      %v3949 = vadd.f32 %v3717, %v3948
      %v3950 = vpop.f32.mrf.mxu0
      %3951 = vmatprep.mubr.bf16.mxu0 0
      %3952 = vmatmul.mubr.bf16.gmra.mxu0 %v3683
      %v3953 = vpop.f32.mrf.mxu0
      %v3954 = vadd.f32 %v3717, %v3953
      %v3955 = vpop.f32.mrf.mxu0
      %v3956 = vpop.f32.mrf.mxu0
      %v3957 = vadd.f32 %v3717, %v3956
      %v3958 = vpop.f32.mrf.mxu0
      %3959 = vmatprep.mubr.bf16.mxu0 0
      %3960 = vmatmul.mubr.bf16.gmra.mxu0 %v3684
      %v3961 = vpop.f32.mrf.mxu0
      %v3962 = vadd.f32 %v3717, %v3961
      %v3963 = vpop.f32.mrf.mxu0
      %v3964 = vpop.f32.mrf.mxu0
      %v3965 = vadd.f32 %v3717, %v3964
      %v3966 = vpop.f32.mrf.mxu0
      %3967 = vmatprep.mubr.bf16.mxu0 0
      %3968 = vmatmul.mubr.bf16.gmra.mxu0 %v3685
      %v3969 = vpop.f32.mrf.mxu0
      %v3970 = vadd.f32 %v3717, %v3969
      %v3971 = vpop.f32.mrf.mxu0
      %v3972 = vpop.f32.mrf.mxu0
      %v3973 = vadd.f32 %v3717, %v3972
      %v3974 = vpop.f32.mrf.mxu0
      %3975 = vmatprep.mubr.bf16.mxu0 0
      %3976 = vmatmul.mubr.bf16.gmra.mxu0 %v3686
      %v3977 = vpop.f32.mrf.mxu0
      %v3978 = vadd.f32 %v3717, %v3977
      %v3979 = vpop.f32.mrf.mxu0
      %v3980 = vpop.f32.mrf.mxu0
      %v3981 = vadd.f32 %v3717, %v3980
      %v3982 = vpop.f32.mrf.mxu0
      %3983 = vmatprep.mubr.bf16.mxu0 0
      %3984 = vmatmul.mubr.bf16.gmra.mxu0 %v3687
      %v3985 = vpop.f32.mrf.mxu0
      %v3986 = vadd.f32 %v3717, %v3985
      %v3987 = vpop.f32.mrf.mxu0
      %v3988 = vpop.f32.mrf.mxu0
      %v3989 = vadd.f32 %v3717, %v3988
      %v3990 = vpop.f32.mrf.mxu0
      %3991 = vmatprep.mubr.bf16.mxu0 0
      %3992 = vmatmul.mubr.bf16.gmra.mxu0 %v3688
      %v3993 = vpop.f32.mrf.mxu0
      %v3994 = vadd.f32 %v3717, %v3993
      %v3995 = vpop.f32.mrf.mxu0
      %v3996 = vpop.f32.mrf.mxu0
      %v3997 = vadd.f32 %v3717, %v3996
      %v3998 = vpop.f32.mrf.mxu0
      %3999 = vmatprep.mubr.bf16.mxu0 0
      %4000 = vmatmul.mubr.bf16.gmra.mxu0 %v3689
      %v4001 = vpop.f32.mrf.mxu0
      %v4002 = vadd.f32 %v3717, %v4001
      %v4003 = vpop.f32.mrf.mxu0
      %v4004 = vpop.f32.mrf.mxu0
      %v4005 = vadd.f32 %v3717, %v4004
      %v4006 = vpop.f32.mrf.mxu0
      %4007 = vmatprep.mubr.bf16.mxu0 0
      %4008 = vmatmul.mubr.bf16.gmra.mxu0 %v3690
      %v4009 = vpop.f32.mrf.mxu0
      %v4010 = vadd.f32 %v3717, %v4009
      %v4011 = vpop.f32.mrf.mxu0
      %v4012 = vpop.f32.mrf.mxu0
      %v4013 = vadd.f32 %v3717, %v4012
      %v4014 = vpop.f32.mrf.mxu0
      %4015 = vmatprep.mubr.bf16.mxu0 0
      %4016 = vmatmul.mubr.bf16.gmra.mxu0 %v3691
      %v4017 = vpop.f32.mrf.mxu0
      %v4018 = vadd.f32 %v3717, %v4017
      %v4019 = vpop.f32.mrf.mxu0
      %v4020 = vpop.f32.mrf.mxu0
      %v4021 = vadd.f32 %v3717, %v4020
      %v4022 = vpop.f32.mrf.mxu0
      %4023 = vmatprep.mubr.bf16.mxu0 0
      %4024 = vmatmul.mubr.bf16.gmra.mxu0 %v3692
      %v4025 = vpop.f32.mrf.mxu0
      %v4026 = vadd.f32 %v3717, %v4025
      %v4027 = vpop.f32.mrf.mxu0
      %v4028 = vpop.f32.mrf.mxu0
      %v4029 = vadd.f32 %v3717, %v4028
      %v4030 = vpop.f32.mrf.mxu0
      %4031 = vmatprep.mubr.bf16.mxu0 0
      %4032 = vmatmul.mubr.bf16.gmra.mxu0 %v3693
      %v4033 = vpop.f32.mrf.mxu0
      %v4034 = vadd.f32 %v3717, %v4033
      %v4035 = vpop.f32.mrf.mxu0
      %v4036 = vpop.f32.mrf.mxu0
      %v4037 = vadd.f32 %v3717, %v4036
      %v4038 = vpop.f32.mrf.mxu0
      %4039 = vmatprep.mubr.bf16.mxu0 0
      %4040 = vmatmul.mubr.bf16.gmra.mxu0 %v3694
      %v4041 = vpop.f32.mrf.mxu0
      %v4042 = vadd.f32 %v3717, %v4041
      %v4043 = vpop.f32.mrf.mxu0
      %v4044 = vpop.f32.mrf.mxu0
      %v4045 = vadd.f32 %v3717, %v4044
      %v4046 = vpop.f32.mrf.mxu0
      %4047 = vmatprep.mubr.bf16.mxu0 0
      %4048 = vmatmul.mubr.bf16.gmra.mxu0 %v3695
      %v4049 = vpop.f32.mrf.mxu0
      %v4050 = vadd.f32 %v3717, %v4049
      %v4051 = vpop.f32.mrf.mxu0
      %v4052 = vpop.f32.mrf.mxu0
      %v4053 = vadd.f32 %v3717, %v4052
      %v4054 = vpop.f32.mrf.mxu0
      %4055 = vdwg.mxu0
      %v4056 = vxor.u32 %v3802, 2147483648
      %v4057 = vxor.u32 %v3805, 2147483648
      %v4058 = vxor.u32 %v3810, 2147483648
      %v4059 = vxor.u32 %v3813, 2147483648
      %v4060 = vxor.u32 %v3818, 2147483648
      %v4061 = vxor.u32 %v3821, 2147483648
      %v4062 = vxor.u32 %v3826, 2147483648
      %v4063 = vxor.u32 %v3829, 2147483648
      %v4064 = vxor.u32 %v3834, 2147483648
      %v4065 = vxor.u32 %v3837, 2147483648
      %v4066 = vxor.u32 %v3842, 2147483648
      %v4067 = vxor.u32 %v3845, 2147483648
      %v4068 = vxor.u32 %v3850, 2147483648
      %v4069 = vxor.u32 %v3853, 2147483648
      %v4070 = vxor.u32 %v3858, 2147483648
      %v4071 = vxor.u32 %v3861, 2147483648
      %v4072 = vxor.u32 %v3866, 2147483648
      %v4073 = vxor.u32 %v3869, 2147483648
      %v4074 = vxor.u32 %v3874, 2147483648
      %v4075 = vxor.u32 %v3877, 2147483648
      %v4076 = vxor.u32 %v3882, 2147483648
      %v4077 = vxor.u32 %v3885, 2147483648
      %v4078 = vxor.u32 %v3890, 2147483648
      %v4079 = vxor.u32 %v3893, 2147483648
      %v4080 = vxor.u32 %v3898, 2147483648
      %v4081 = vxor.u32 %v3901, 2147483648
      %v4082 = vxor.u32 %v3906, 2147483648
      %v4083 = vxor.u32 %v3909, 2147483648
      %v4084 = vxor.u32 %v3914, 2147483648
      %v4085 = vxor.u32 %v3917, 2147483648
      %v4086 = vxor.u32 %v3922, 2147483648
      %v4087 = vxor.u32 %v3925, 2147483648
      %v4088 = vxor.u32 %v3930, 2147483648
      %v4089 = vxor.u32 %v3933, 2147483648
      %v4090 = vxor.u32 %v3938, 2147483648
      %v4091 = vxor.u32 %v3941, 2147483648
      %v4092 = vxor.u32 %v3946, 2147483648
      %v4093 = vxor.u32 %v3949, 2147483648
      %v4094 = vxor.u32 %v3954, 2147483648
      %v4095 = vxor.u32 %v3957, 2147483648
      %v4096 = vxor.u32 %v3962, 2147483648
      %v4097 = vxor.u32 %v3965, 2147483648
      %v4098 = vxor.u32 %v3970, 2147483648
      %v4099 = vxor.u32 %v3973, 2147483648
      %v4100 = vxor.u32 %v3978, 2147483648
      %v4101 = vxor.u32 %v3981, 2147483648
      %v4102 = vxor.u32 %v3986, 2147483648
      %v4103 = vxor.u32 %v3989, 2147483648
      %v4104 = vxor.u32 %v3994, 2147483648
      %v4105 = vxor.u32 %v3997, 2147483648
      %v4106 = vxor.u32 %v4002, 2147483648
      %v4107 = vxor.u32 %v4005, 2147483648
      %v4108 = vxor.u32 %v4010, 2147483648
      %v4109 = vxor.u32 %v4013, 2147483648
      %v4110 = vxor.u32 %v4018, 2147483648
      %v4111 = vxor.u32 %v4021, 2147483648
      %v4112 = vxor.u32 %v4026, 2147483648
      %v4113 = vxor.u32 %v4029, 2147483648
      %v4114 = vxor.u32 %v4034, 2147483648
      %v4115 = vxor.u32 %v4037, 2147483648
      %v4116 = vxor.u32 %v4042, 2147483648
      %v4117 = vxor.u32 %v4045, 2147483648
      %v4118 = vxor.u32 %v4050, 2147483648
      %v4119 = vxor.u32 %v4053, 2147483648
      %v4120 = vmul.f32 %v4056, 1.442695
      %v4121 = vpow.pop %v4120
      %v4122 = vmul.f32 %v4057, 1.442695
      %v4123 = vpow.pop %v4122
      %v4124 = vmul.f32 %v4058, 1.442695
      %v4125 = vpow.pop %v4124
      %v4126 = vmul.f32 %v4059, 1.442695
      %v4127 = vpow.pop %v4126
      %v4128 = vmul.f32 %v4060, 1.442695
      %v4129 = vpow.pop %v4128
      %v4130 = vmul.f32 %v4061, 1.442695
      %v4131 = vpow.pop %v4130
      %v4132 = vmul.f32 %v4062, 1.442695
      %v4133 = vpow.pop %v4132
      %v4134 = vmul.f32 %v4063, 1.442695
      %v4135 = vpow.pop %v4134
      %v4136 = vmul.f32 %v4064, 1.442695
      %v4137 = vpow.pop %v4136
      %v4138 = vmul.f32 %v4065, 1.442695
      %v4139 = vpow.pop %v4138
      %v4140 = vmul.f32 %v4066, 1.442695
      %v4141 = vpow.pop %v4140
      %v4142 = vmul.f32 %v4067, 1.442695
      %v4143 = vpow.pop %v4142
      %v4144 = vmul.f32 %v4068, 1.442695
      %v4145 = vpow.pop %v4144
      %v4146 = vmul.f32 %v4069, 1.442695
      %v4147 = vpow.pop %v4146
      %v4148 = vmul.f32 %v4070, 1.442695
      %v4149 = vpow.pop %v4148
      %v4150 = vmul.f32 %v4071, 1.442695
      %v4151 = vpow.pop %v4150
      %v4152 = vmul.f32 %v4072, 1.442695
      %v4153 = vpow.pop %v4152
      %v4154 = vmul.f32 %v4073, 1.442695
      %v4155 = vpow.pop %v4154
      %v4156 = vmul.f32 %v4074, 1.442695
      %v4157 = vpow.pop %v4156
      %v4158 = vmul.f32 %v4075, 1.442695
      %v4159 = vpow.pop %v4158
      %v4160 = vmul.f32 %v4076, 1.442695
      %v4161 = vpow.pop %v4160
      %v4162 = vmul.f32 %v4077, 1.442695
      %v4163 = vpow.pop %v4162
      %v4164 = vmul.f32 %v4078, 1.442695
      %v4165 = vpow.pop %v4164
      %v4166 = vmul.f32 %v4079, 1.442695
      %v4167 = vpow.pop %v4166
      %v4168 = vmul.f32 %v4080, 1.442695
      %v4169 = vpow.pop %v4168
      %v4170 = vmul.f32 %v4081, 1.442695
      %v4171 = vpow.pop %v4170
      %v4172 = vmul.f32 %v4082, 1.442695
      %v4173 = vpow.pop %v4172
      %v4174 = vmul.f32 %v4083, 1.442695
      %v4175 = vpow.pop %v4174
      %v4176 = vmul.f32 %v4084, 1.442695
      %v4177 = vpow.pop %v4176
      %v4178 = vmul.f32 %v4085, 1.442695
      %v4179 = vpow.pop %v4178
      %v4180 = vmul.f32 %v4086, 1.442695
      %v4181 = vpow.pop %v4180
      %v4182 = vmul.f32 %v4087, 1.442695
      %v4183 = vpow.pop %v4182
      %v4184 = vmul.f32 %v4088, 1.442695
      %v4185 = vpow.pop %v4184
      %v4186 = vmul.f32 %v4089, 1.442695
      %v4187 = vpow.pop %v4186
      %v4188 = vmul.f32 %v4090, 1.442695
      %v4189 = vpow.pop %v4188
      %v4190 = vmul.f32 %v4091, 1.442695
      %v4191 = vpow.pop %v4190
      %v4192 = vmul.f32 %v4092, 1.442695
      %v4193 = vpow.pop %v4192
      %v4194 = vmul.f32 %v4093, 1.442695
      %v4195 = vpow.pop %v4194
      %v4196 = vmul.f32 %v4094, 1.442695
      %v4197 = vpow.pop %v4196
      %v4198 = vmul.f32 %v4095, 1.442695
      %v4199 = vpow.pop %v4198
      %v4200 = vmul.f32 %v4096, 1.442695
      %v4201 = vpow.pop %v4200
      %v4202 = vmul.f32 %v4097, 1.442695
      %v4203 = vpow.pop %v4202
      %v4204 = vmul.f32 %v4098, 1.442695
      %v4205 = vpow.pop %v4204
      %v4206 = vmul.f32 %v4099, 1.442695
      %v4207 = vpow.pop %v4206
      %v4208 = vmul.f32 %v4100, 1.442695
      %v4209 = vpow.pop %v4208
      %v4210 = vmul.f32 %v4101, 1.442695
      %v4211 = vpow.pop %v4210
      %v4212 = vmul.f32 %v4102, 1.442695
      %v4213 = vpow.pop %v4212
      %v4214 = vmul.f32 %v4103, 1.442695
      %v4215 = vpow.pop %v4214
      %v4216 = vmul.f32 %v4104, 1.442695
      %v4217 = vpow.pop %v4216
      %v4218 = vmul.f32 %v4105, 1.442695
      %v4219 = vpow.pop %v4218
      %v4220 = vmul.f32 %v4106, 1.442695
      %v4221 = vpow.pop %v4220
      %v4222 = vmul.f32 %v4107, 1.442695
      %v4223 = vpow.pop %v4222
      %v4224 = vmul.f32 %v4108, 1.442695
      %v4225 = vpow.pop %v4224
      %v4226 = vmul.f32 %v4109, 1.442695
      %v4227 = vpow.pop %v4226
      %v4228 = vmul.f32 %v4110, 1.442695
      %v4229 = vpow.pop %v4228
      %v4230 = vmul.f32 %v4111, 1.442695
      %v4231 = vpow.pop %v4230
      %v4232 = vmul.f32 %v4112, 1.442695
      %v4233 = vpow.pop %v4232
      %v4234 = vmul.f32 %v4113, 1.442695
      %v4235 = vpow.pop %v4234
      %v4236 = vmul.f32 %v4114, 1.442695
      %v4237 = vpow.pop %v4236
      %v4238 = vmul.f32 %v4115, 1.442695
      %v4239 = vpow.pop %v4238
      %v4240 = vmul.f32 %v4116, 1.442695
      %v4241 = vpow.pop %v4240
      %v4242 = vmul.f32 %v4117, 1.442695
      %v4243 = vpow.pop %v4242
      %v4244 = vmul.f32 %v4118, 1.442695
      %v4245 = vpow.pop %v4244
      %v4246 = vmul.f32 %v4119, 1.442695
      %v4247 = vpow.pop %v4246
      %v4248 = vadd.f32 %v4121, 1.0
      %v4249 = vadd.f32 %v4123, 1.0
      %v4250 = vadd.f32 %v4125, 1.0
      %v4251 = vadd.f32 %v4127, 1.0
      %v4252 = vadd.f32 %v4129, 1.0
      %v4253 = vadd.f32 %v4131, 1.0
      %v4254 = vadd.f32 %v4133, 1.0
      %v4255 = vadd.f32 %v4135, 1.0
      %v4256 = vadd.f32 %v4137, 1.0
      %v4257 = vadd.f32 %v4139, 1.0
      %v4258 = vadd.f32 %v4141, 1.0
      %v4259 = vadd.f32 %v4143, 1.0
      %v4260 = vadd.f32 %v4145, 1.0
      %v4261 = vadd.f32 %v4147, 1.0
      %v4262 = vadd.f32 %v4149, 1.0
      %v4263 = vadd.f32 %v4151, 1.0
      %v4264 = vadd.f32 %v4153, 1.0
      %v4265 = vadd.f32 %v4155, 1.0
      %v4266 = vadd.f32 %v4157, 1.0
      %v4267 = vadd.f32 %v4159, 1.0
      %v4268 = vadd.f32 %v4161, 1.0
      %v4269 = vadd.f32 %v4163, 1.0
      %v4270 = vadd.f32 %v4165, 1.0
      %v4271 = vadd.f32 %v4167, 1.0
      %v4272 = vadd.f32 %v4169, 1.0
      %v4273 = vadd.f32 %v4171, 1.0
      %v4274 = vadd.f32 %v4173, 1.0
      %v4275 = vadd.f32 %v4175, 1.0
      %v4276 = vadd.f32 %v4177, 1.0
      %v4277 = vadd.f32 %v4179, 1.0
      %v4278 = vadd.f32 %v4181, 1.0
      %v4279 = vadd.f32 %v4183, 1.0
      %v4280 = vadd.f32 %v4185, 1.0
      %v4281 = vadd.f32 %v4187, 1.0
      %v4282 = vadd.f32 %v4189, 1.0
      %v4283 = vadd.f32 %v4191, 1.0
      %v4284 = vadd.f32 %v4193, 1.0
      %v4285 = vadd.f32 %v4195, 1.0
      %v4286 = vadd.f32 %v4197, 1.0
      %v4287 = vadd.f32 %v4199, 1.0
      %v4288 = vadd.f32 %v4201, 1.0
      %v4289 = vadd.f32 %v4203, 1.0
      %v4290 = vadd.f32 %v4205, 1.0
      %v4291 = vadd.f32 %v4207, 1.0
      %v4292 = vadd.f32 %v4209, 1.0
      %v4293 = vadd.f32 %v4211, 1.0
      %v4294 = vadd.f32 %v4213, 1.0
      %v4295 = vadd.f32 %v4215, 1.0
      %v4296 = vadd.f32 %v4217, 1.0
      %v4297 = vadd.f32 %v4219, 1.0
      %v4298 = vadd.f32 %v4221, 1.0
      %v4299 = vadd.f32 %v4223, 1.0
      %v4300 = vadd.f32 %v4225, 1.0
      %v4301 = vadd.f32 %v4227, 1.0
      %v4302 = vadd.f32 %v4229, 1.0
      %v4303 = vadd.f32 %v4231, 1.0
      %v4304 = vadd.f32 %v4233, 1.0
      %v4305 = vadd.f32 %v4235, 1.0
      %v4306 = vadd.f32 %v4237, 1.0
      %v4307 = vadd.f32 %v4239, 1.0
      %v4308 = vadd.f32 %v4241, 1.0
      %v4309 = vadd.f32 %v4243, 1.0
      %v4310 = vadd.f32 %v4245, 1.0
      %v4311 = vadd.f32 %v4247, 1.0
      %v4312 = vrcp.pop %v4248
      %v4313 = vmul.f32 1.0, %v4312
      %v4314 = vrcp.pop %v4249
      %v4315 = vmul.f32 1.0, %v4314
      %v4316 = vrcp.pop %v4250
      %v4317 = vmul.f32 1.0, %v4316
      %v4318 = vrcp.pop %v4251
      %v4319 = vmul.f32 1.0, %v4318
      %v4320 = vrcp.pop %v4252
      %v4321 = vmul.f32 1.0, %v4320
      %v4322 = vrcp.pop %v4253
      %v4323 = vmul.f32 1.0, %v4322
      %v4324 = vrcp.pop %v4254
      %v4325 = vmul.f32 1.0, %v4324
      %v4326 = vrcp.pop %v4255
      %v4327 = vmul.f32 1.0, %v4326
      %v4328 = vrcp.pop %v4256
      %v4329 = vmul.f32 1.0, %v4328
      %v4330 = vrcp.pop %v4257
      %v4331 = vmul.f32 1.0, %v4330
      %v4332 = vrcp.pop %v4258
      %v4333 = vmul.f32 1.0, %v4332
      %v4334 = vrcp.pop %v4259
      %v4335 = vmul.f32 1.0, %v4334
      %v4336 = vrcp.pop %v4260
      %v4337 = vmul.f32 1.0, %v4336
      %v4338 = vrcp.pop %v4261
      %v4339 = vmul.f32 1.0, %v4338
      %v4340 = vrcp.pop %v4262
      %v4341 = vmul.f32 1.0, %v4340
      %v4342 = vrcp.pop %v4263
      %v4343 = vmul.f32 1.0, %v4342
      %v4344 = vrcp.pop %v4264
      %v4345 = vmul.f32 1.0, %v4344
      %v4346 = vrcp.pop %v4265
      %v4347 = vmul.f32 1.0, %v4346
      %v4348 = vrcp.pop %v4266
      %v4349 = vmul.f32 1.0, %v4348
      %v4350 = vrcp.pop %v4267
      %v4351 = vmul.f32 1.0, %v4350
      %v4352 = vrcp.pop %v4268
      %v4353 = vmul.f32 1.0, %v4352
      %v4354 = vrcp.pop %v4269
      %v4355 = vmul.f32 1.0, %v4354
      %v4356 = vrcp.pop %v4270
      %v4357 = vmul.f32 1.0, %v4356
      %v4358 = vrcp.pop %v4271
      %v4359 = vmul.f32 1.0, %v4358
      %v4360 = vrcp.pop %v4272
      %v4361 = vmul.f32 1.0, %v4360
      %v4362 = vrcp.pop %v4273
      %v4363 = vmul.f32 1.0, %v4362
      %v4364 = vrcp.pop %v4274
      %v4365 = vmul.f32 1.0, %v4364
      %v4366 = vrcp.pop %v4275
      %v4367 = vmul.f32 1.0, %v4366
      %v4368 = vrcp.pop %v4276
      %v4369 = vmul.f32 1.0, %v4368
      %v4370 = vrcp.pop %v4277
      %v4371 = vmul.f32 1.0, %v4370
      %v4372 = vrcp.pop %v4278
      %v4373 = vmul.f32 1.0, %v4372
      %v4374 = vrcp.pop %v4279
      %v4375 = vmul.f32 1.0, %v4374
      %v4376 = vrcp.pop %v4280
      %v4377 = vmul.f32 1.0, %v4376
      %v4378 = vrcp.pop %v4281
      %v4379 = vmul.f32 1.0, %v4378
      %v4380 = vrcp.pop %v4282
      %v4381 = vmul.f32 1.0, %v4380
      %v4382 = vrcp.pop %v4283
      %v4383 = vmul.f32 1.0, %v4382
      %v4384 = vrcp.pop %v4284
      %v4385 = vmul.f32 1.0, %v4384
      %v4386 = vrcp.pop %v4285
      %v4387 = vmul.f32 1.0, %v4386
      %v4388 = vrcp.pop %v4286
      %v4389 = vmul.f32 1.0, %v4388
      %v4390 = vrcp.pop %v4287
      %v4391 = vmul.f32 1.0, %v4390
      %v4392 = vrcp.pop %v4288
      %v4393 = vmul.f32 1.0, %v4392
      %v4394 = vrcp.pop %v4289
      %v4395 = vmul.f32 1.0, %v4394
      %v4396 = vrcp.pop %v4290
      %v4397 = vmul.f32 1.0, %v4396
      %v4398 = vrcp.pop %v4291
      %v4399 = vmul.f32 1.0, %v4398
      %v4400 = vrcp.pop %v4292
      %v4401 = vmul.f32 1.0, %v4400
      %v4402 = vrcp.pop %v4293
      %v4403 = vmul.f32 1.0, %v4402
      %v4404 = vrcp.pop %v4294
      %v4405 = vmul.f32 1.0, %v4404
      %v4406 = vrcp.pop %v4295
      %v4407 = vmul.f32 1.0, %v4406
      %v4408 = vrcp.pop %v4296
      %v4409 = vmul.f32 1.0, %v4408
      %v4410 = vrcp.pop %v4297
      %v4411 = vmul.f32 1.0, %v4410
      %v4412 = vrcp.pop %v4298
      %v4413 = vmul.f32 1.0, %v4412
      %v4414 = vrcp.pop %v4299
      %v4415 = vmul.f32 1.0, %v4414
      %v4416 = vrcp.pop %v4300
      %v4417 = vmul.f32 1.0, %v4416
      %v4418 = vrcp.pop %v4301
      %v4419 = vmul.f32 1.0, %v4418
      %v4420 = vrcp.pop %v4302
      %v4421 = vmul.f32 1.0, %v4420
      %v4422 = vrcp.pop %v4303
      %v4423 = vmul.f32 1.0, %v4422
      %v4424 = vrcp.pop %v4304
      %v4425 = vmul.f32 1.0, %v4424
      %v4426 = vrcp.pop %v4305
      %v4427 = vmul.f32 1.0, %v4426
      %v4428 = vrcp.pop %v4306
      %v4429 = vmul.f32 1.0, %v4428
      %v4430 = vrcp.pop %v4307
      %v4431 = vmul.f32 1.0, %v4430
      %v4432 = vrcp.pop %v4308
      %v4433 = vmul.f32 1.0, %v4432
      %v4434 = vrcp.pop %v4309
      %v4435 = vmul.f32 1.0, %v4434
      %v4436 = vrcp.pop %v4310
      %v4437 = vmul.f32 1.0, %v4436
      %v4438 = vrcp.pop %v4311
      %v4439 = vmul.f32 1.0, %v4438
      %v4440 = vpack.c.bf16 %v4315, %v4313
      %v4441 = vpack.c.bf16 %v4319, %v4317
      %v4442 = vpack.c.bf16 %v4323, %v4321
      %v4443 = vpack.c.bf16 %v4327, %v4325
      %v4444 = vpack.c.bf16 %v4331, %v4329
      %v4445 = vpack.c.bf16 %v4335, %v4333
      %v4446 = vpack.c.bf16 %v4339, %v4337
      %v4447 = vpack.c.bf16 %v4343, %v4341
      %v4448 = vpack.c.bf16 %v4347, %v4345
      %v4449 = vpack.c.bf16 %v4351, %v4349
      %v4450 = vpack.c.bf16 %v4355, %v4353
      %v4451 = vpack.c.bf16 %v4359, %v4357
      %v4452 = vpack.c.bf16 %v4363, %v4361
      %v4453 = vpack.c.bf16 %v4367, %v4365
      %v4454 = vpack.c.bf16 %v4371, %v4369
      %v4455 = vpack.c.bf16 %v4375, %v4373
      %v4456 = vpack.c.bf16 %v4379, %v4377
      %v4457 = vpack.c.bf16 %v4383, %v4381
      %v4458 = vpack.c.bf16 %v4387, %v4385
      %v4459 = vpack.c.bf16 %v4391, %v4389
      %v4460 = vpack.c.bf16 %v4395, %v4393
      %v4461 = vpack.c.bf16 %v4399, %v4397
      %v4462 = vpack.c.bf16 %v4403, %v4401
      %v4463 = vpack.c.bf16 %v4407, %v4405
      %v4464 = vpack.c.bf16 %v4411, %v4409
      %v4465 = vpack.c.bf16 %v4415, %v4413
      %v4466 = vpack.c.bf16 %v4419, %v4417
      %v4467 = vpack.c.bf16 %v4423, %v4421
      %v4468 = vpack.c.bf16 %v4427, %v4425
      %v4469 = vpack.c.bf16 %v4431, %v4429
      %v4470 = vpack.c.bf16 %v4435, %v4433
      %v4471 = vpack.c.bf16 %v4439, %v4437
      %v4504 = vunpack.c.l.b16 %v4440
      %v4505 = vunpack.c.h.b16 %v4440
      %v4506 = vunpack.c.l.b16 %v4441
      %v4507 = vunpack.c.h.b16 %v4441
      %v4508 = vunpack.c.l.b16 %v4442
      %v4509 = vunpack.c.h.b16 %v4442
      %v4510 = vunpack.c.l.b16 %v4443
      %v4511 = vunpack.c.h.b16 %v4443
      %v4512 = vunpack.c.l.b16 %v4444
      %v4513 = vunpack.c.h.b16 %v4444
      %v4514 = vunpack.c.l.b16 %v4445
      %v4515 = vunpack.c.h.b16 %v4445
      %v4516 = vunpack.c.l.b16 %v4446
      %v4517 = vunpack.c.h.b16 %v4446
      %v4518 = vunpack.c.l.b16 %v4447
      %v4519 = vunpack.c.h.b16 %v4447
      %v4520 = vunpack.c.l.b16 %v4448
      %v4521 = vunpack.c.h.b16 %v4448
      %v4522 = vunpack.c.l.b16 %v4449
      %v4523 = vunpack.c.h.b16 %v4449
      %v4524 = vunpack.c.l.b16 %v4450
      %v4525 = vunpack.c.h.b16 %v4450
      %v4526 = vunpack.c.l.b16 %v4451
      %v4527 = vunpack.c.h.b16 %v4451
      %v4528 = vunpack.c.l.b16 %v4452
      %v4529 = vunpack.c.h.b16 %v4452
      %v4530 = vunpack.c.l.b16 %v4453
      %v4531 = vunpack.c.h.b16 %v4453
      %v4532 = vunpack.c.l.b16 %v4454
      %v4533 = vunpack.c.h.b16 %v4454
      %v4534 = vunpack.c.l.b16 %v4455
      %v4535 = vunpack.c.h.b16 %v4455
      %v4536 = vunpack.c.l.b16 %v4456
      %v4537 = vunpack.c.h.b16 %v4456
      %v4538 = vunpack.c.l.b16 %v4457
      %v4539 = vunpack.c.h.b16 %v4457
      %v4540 = vunpack.c.l.b16 %v4458
      %v4541 = vunpack.c.h.b16 %v4458
      %v4542 = vunpack.c.l.b16 %v4459
      %v4543 = vunpack.c.h.b16 %v4459
      %v4544 = vunpack.c.l.b16 %v4460
      %v4545 = vunpack.c.h.b16 %v4460
      %v4546 = vunpack.c.l.b16 %v4461
      %v4547 = vunpack.c.h.b16 %v4461
      %v4548 = vunpack.c.l.b16 %v4462
      %v4549 = vunpack.c.h.b16 %v4462
      %v4550 = vunpack.c.l.b16 %v4463
      %v4551 = vunpack.c.h.b16 %v4463
      %v4552 = vunpack.c.l.b16 %v4464
      %v4553 = vunpack.c.h.b16 %v4464
      %v4554 = vunpack.c.l.b16 %v4465
      %v4555 = vunpack.c.h.b16 %v4465
      %v4556 = vunpack.c.l.b16 %v4466
      %v4557 = vunpack.c.h.b16 %v4466
      %v4558 = vunpack.c.l.b16 %v4467
      %v4559 = vunpack.c.h.b16 %v4467
      %v4560 = vunpack.c.l.b16 %v4468
      %v4561 = vunpack.c.h.b16 %v4468
      %v4562 = vunpack.c.l.b16 %v4469
      %v4563 = vunpack.c.h.b16 %v4469
      %v4564 = vunpack.c.l.b16 %v4470
      %v4565 = vunpack.c.h.b16 %v4470
      %v4566 = vunpack.c.l.b16 %v4471
      %v4567 = vunpack.c.h.b16 %v4471
      %v4568 = vpack.c.b16 %v4504, %v4504
      %v4569 = vpack.c.b16 %v4505, %v4505
      %v4570 = vpack.c.b16 %v4506, %v4506
      %v4571 = vpack.c.b16 %v4507, %v4507
      %v4572 = vpack.c.b16 %v4508, %v4508
      %v4573 = vpack.c.b16 %v4509, %v4509
      %v4574 = vpack.c.b16 %v4510, %v4510
      %v4575 = vpack.c.b16 %v4511, %v4511
      %v4576 = vpack.c.b16 %v4512, %v4512
      %v4577 = vpack.c.b16 %v4513, %v4513
      %v4578 = vpack.c.b16 %v4514, %v4514
      %v4579 = vpack.c.b16 %v4515, %v4515
      %v4580 = vpack.c.b16 %v4516, %v4516
      %v4581 = vpack.c.b16 %v4517, %v4517
      %v4582 = vpack.c.b16 %v4518, %v4518
      %v4583 = vpack.c.b16 %v4519, %v4519
      %v4584 = vpack.c.b16 %v4520, %v4520
      %v4585 = vpack.c.b16 %v4521, %v4521
      %v4586 = vpack.c.b16 %v4522, %v4522
      %v4587 = vpack.c.b16 %v4523, %v4523
      %v4588 = vpack.c.b16 %v4524, %v4524
      %v4589 = vpack.c.b16 %v4525, %v4525
      %v4590 = vpack.c.b16 %v4526, %v4526
      %v4591 = vpack.c.b16 %v4527, %v4527
      %v4592 = vpack.c.b16 %v4528, %v4528
      %v4593 = vpack.c.b16 %v4529, %v4529
      %v4594 = vpack.c.b16 %v4530, %v4530
      %v4595 = vpack.c.b16 %v4531, %v4531
      %v4596 = vpack.c.b16 %v4532, %v4532
      %v4597 = vpack.c.b16 %v4533, %v4533
      %v4598 = vpack.c.b16 %v4534, %v4534
      %v4599 = vpack.c.b16 %v4535, %v4535
      %v4600 = vpack.c.b16 %v4536, %v4536
      %v4601 = vpack.c.b16 %v4537, %v4537
      %v4602 = vpack.c.b16 %v4538, %v4538
      %v4603 = vpack.c.b16 %v4539, %v4539
      %v4604 = vpack.c.b16 %v4540, %v4540
      %v4605 = vpack.c.b16 %v4541, %v4541
      %v4606 = vpack.c.b16 %v4542, %v4542
      %v4607 = vpack.c.b16 %v4543, %v4543
      %v4608 = vpack.c.b16 %v4544, %v4544
      %v4609 = vpack.c.b16 %v4545, %v4545
      %v4610 = vpack.c.b16 %v4546, %v4546
      %v4611 = vpack.c.b16 %v4547, %v4547
      %v4612 = vpack.c.b16 %v4548, %v4548
      %v4613 = vpack.c.b16 %v4549, %v4549
      %v4614 = vpack.c.b16 %v4550, %v4550
      %v4615 = vpack.c.b16 %v4551, %v4551
      %v4616 = vpack.c.b16 %v4552, %v4552
      %v4617 = vpack.c.b16 %v4553, %v4553
      %v4618 = vpack.c.b16 %v4554, %v4554
      %v4619 = vpack.c.b16 %v4555, %v4555
      %v4620 = vpack.c.b16 %v4556, %v4556
      %v4621 = vpack.c.b16 %v4557, %v4557
      %v4622 = vpack.c.b16 %v4558, %v4558
      %v4623 = vpack.c.b16 %v4559, %v4559
      %v4624 = vpack.c.b16 %v4560, %v4560
      %v4625 = vpack.c.b16 %v4561, %v4561
      %v4626 = vpack.c.b16 %v4562, %v4562
      %v4627 = vpack.c.b16 %v4563, %v4563
      %v4628 = vpack.c.b16 %v4564, %v4564
      %v4629 = vpack.c.b16 %v4565, %v4565
      %v4630 = vpack.c.b16 %v4566, %v4566
      %v4631 = vpack.c.b16 %v4567, %v4567
      %4696 = vst [vmem:[%s483] sm:$0xf] %v4568
      %4697 = vst [vmem:[%s483 + $0x4] sm:$0xf] %v4569
      %4698 = vst [vmem:[%s483 + $0x8] sm:$0xf] %v4570
      %4699 = vst [vmem:[%s483 + $0xc] sm:$0xf] %v4571
      %4700 = vst [vmem:[%s483 + $0x10] sm:$0xf] %v4572
      %4701 = vst [vmem:[%s483 + $0x14] sm:$0xf] %v4573
      %4702 = vst [vmem:[%s483 + $0x18] sm:$0xf] %v4574
      %4703 = vst [vmem:[%s483 + $0x1c] sm:$0xf] %v4575
      %4704 = vst [vmem:[%s483 + $0x20] sm:$0xf] %v4576
      %4705 = vst [vmem:[%s483 + $0x24] sm:$0xf] %v4577
      %4706 = vst [vmem:[%s483 + $0x28] sm:$0xf] %v4578
      %4707 = vst [vmem:[%s483 + $0x2c] sm:$0xf] %v4579
      %4708 = vst [vmem:[%s483 + $0x30] sm:$0xf] %v4580
      %4709 = vst [vmem:[%s483 + $0x34] sm:$0xf] %v4581
      %4710 = vst [vmem:[%s483 + $0x38] sm:$0xf] %v4582
      %4711 = vst [vmem:[%s483 + $0x3c] sm:$0xf] %v4583
      %4712 = vst [vmem:[%s483 + $0x40] sm:$0xf] %v4584
      %4713 = vst [vmem:[%s483 + $0x44] sm:$0xf] %v4585
      %4714 = vst [vmem:[%s483 + $0x48] sm:$0xf] %v4586
      %4715 = vst [vmem:[%s483 + $0x4c] sm:$0xf] %v4587
      %4716 = vst [vmem:[%s483 + $0x50] sm:$0xf] %v4588
      %4717 = vst [vmem:[%s483 + $0x54] sm:$0xf] %v4589
      %4718 = vst [vmem:[%s483 + $0x58] sm:$0xf] %v4590
      %4719 = vst [vmem:[%s483 + $0x5c] sm:$0xf] %v4591
      %4720 = vst [vmem:[%s483 + $0x60] sm:$0xf] %v4592
      %4721 = vst [vmem:[%s483 + $0x64] sm:$0xf] %v4593
      %4722 = vst [vmem:[%s483 + $0x68] sm:$0xf] %v4594
      %4723 = vst [vmem:[%s483 + $0x6c] sm:$0xf] %v4595
      %4724 = vst [vmem:[%s483 + $0x70] sm:$0xf] %v4596
      %4725 = vst [vmem:[%s483 + $0x74] sm:$0xf] %v4597
      %4726 = vst [vmem:[%s483 + $0x78] sm:$0xf] %v4598
      %4727 = vst [vmem:[%s483 + $0x7c] sm:$0xf] %v4599
      %4728 = vst [vmem:[%s483 + $0x80] sm:$0xf] %v4600
      %4729 = vst [vmem:[%s483 + $0x84] sm:$0xf] %v4601
      %4730 = vst [vmem:[%s483 + $0x88] sm:$0xf] %v4602
      %4731 = vst [vmem:[%s483 + $0x8c] sm:$0xf] %v4603
      %4732 = vst [vmem:[%s483 + $0x90] sm:$0xf] %v4604
      %4733 = vst [vmem:[%s483 + $0x94] sm:$0xf] %v4605
      %4734 = vst [vmem:[%s483 + $0x98] sm:$0xf] %v4606
      %4735 = vst [vmem:[%s483 + $0x9c] sm:$0xf] %v4607
      %4736 = vst [vmem:[%s483 + $0xa0] sm:$0xf] %v4608
      %4737 = vst [vmem:[%s483 + $0xa4] sm:$0xf] %v4609
      %4738 = vst [vmem:[%s483 + $0xa8] sm:$0xf] %v4610
      %4739 = vst [vmem:[%s483 + $0xac] sm:$0xf] %v4611
      %4740 = vst [vmem:[%s483 + $0xb0] sm:$0xf] %v4612
      %4741 = vst [vmem:[%s483 + $0xb4] sm:$0xf] %v4613
      %4742 = vst [vmem:[%s483 + $0xb8] sm:$0xf] %v4614
      %4743 = vst [vmem:[%s483 + $0xbc] sm:$0xf] %v4615
      %4744 = vst [vmem:[%s483 + $0xc0] sm:$0xf] %v4616
      %4745 = vst [vmem:[%s483 + $0xc4] sm:$0xf] %v4617
      %4746 = vst [vmem:[%s483 + $0xc8] sm:$0xf] %v4618
      %4747 = vst [vmem:[%s483 + $0xcc] sm:$0xf] %v4619
      %4748 = vst [vmem:[%s483 + $0xd0] sm:$0xf] %v4620
      %4749 = vst [vmem:[%s483 + $0xd4] sm:$0xf] %v4621
      %4750 = vst [vmem:[%s483 + $0xd8] sm:$0xf] %v4622
      %4751 = vst [vmem:[%s483 + $0xdc] sm:$0xf] %v4623
      %4752 = vst [vmem:[%s483 + $0xe0] sm:$0xf] %v4624
      %4753 = vst [vmem:[%s483 + $0xe4] sm:$0xf] %v4625
      %4754 = vst [vmem:[%s483 + $0xe8] sm:$0xf] %v4626
      %4755 = vst [vmem:[%s483 + $0xec] sm:$0xf] %v4627
      %4756 = vst [vmem:[%s483 + $0xf0] sm:$0xf] %v4628
      %4757 = vst [vmem:[%s483 + $0xf4] sm:$0xf] %v4629
      %4758 = vst [vmem:[%s483 + $0xf8] sm:$0xf] %v4630
      %4759 = vst [vmem:[%s483 + $0xfc] sm:$0xf] %v4631
      %s4760 = smul.u32 64, %s26
      %p4761 = scmp.lt.s32.totalorder %s4760, 127
      %s4762 = scalar_select %p4761, %s4760, 127
      %s4763 = smul.addr %s4762, 4
      %s4764 = scalar_lea.vmem %s13, %s4763
      %s4765 = smul.u32 64, %s26
      %p4766 = scmp.lt.s32.totalorder %s4765, 127
      %s4767 = scalar_select %p4766, %s4765, 127
      %s4768 = smul.addr %s4767, 4
      %s4769 = scalar_lea.vmem %s14, %s4768
      // Predicated region
      $region73: #{autoencoder_forward.1} parent=71 // pred_check
        %p4770 = pneg %p322
      $region74: #{autoencoder_forward.1} parent=71 // pred_check_branch
        %4772 = sbr.rel (%p4770) target = $region76
      $region75: #{autoencoder_forward.1} parent=71 // pred_region
        %s4773 = smul.u32 64, %s26
      $region76: #{autoencoder_forward.1} parent=71 // pred_fallthru
        _
      // Predicated region
      $region77: #{autoencoder_forward.1} parent=71 // pred_check
        %p4774 = pneg %p348
      $region78: #{autoencoder_forward.1} parent=71 // pred_check_branch
        %4776 = sbr.rel (%p4774) target = $region80
      $region79: #{autoencoder_forward.1} parent=71 // pred_region
        %s4777 = smul.u32 64, %s26
      $region80: #{autoencoder_forward.1} parent=71 // pred_fallthru
        _
    $region72: #{autoencoder_forward.1} parent=5 // pred_fallthru
      _
    %p4778 = scmp.le.s32.totalorder 2, %s21
    // Predicated region
    $region81: #{autoencoder_forward.1} parent=5 // pred_check
      %p4779 = pneg %p4778
    $region82: #{autoencoder_forward.1} parent=5 // pred_check_branch
      %4781 = sbr.rel (%p4779) target = $region84
    $region83: #{autoencoder_forward.1} parent=5 // pred_region
      %s4782 = ssub.s32 %s21, 2
      // Predicated region
      $region85: #{autoencoder_forward.1} parent=83 // pred_check
        %p4783 = pneg %p328
      $region86: #{autoencoder_forward.1} parent=83 // pred_check_branch
        %4785 = sbr.rel (%p4783) target = $region88
      $region87: #{autoencoder_forward.1} parent=83 // pred_region
        %s4786 = smul.u32 64, %s27
        %p4787 = scmp.lt.s32.totalorder %s4786, 127
        %s4788 = scalar_select %p4787, %s4786, 127
        %s4789 = smul.addr %s4788, 4
        %s4790 = scalar_lea.vmem %s13, %s4789
      $region88: #{autoencoder_forward.1} parent=83 // pred_fallthru
        _
      // Predicated region
      $region89: #{autoencoder_forward.1} parent=83 // pred_check
        %p4791 = pneg %p354
      $region90: #{autoencoder_forward.1} parent=83 // pred_check_branch
        %4793 = sbr.rel (%p4791) target = $region92
      $region91: #{autoencoder_forward.1} parent=83 // pred_region
        %s4794 = smul.u32 64, %s27
        %p4795 = scmp.lt.s32.totalorder %s4794, 127
        %s4796 = scalar_select %p4795, %s4794, 127
        %s4797 = smul.addr %s4796, 4
        %s4798 = scalar_lea.vmem %s14, %s4797
      $region92: #{autoencoder_forward.1} parent=83 // pred_fallthru
        _
    $region84: #{autoencoder_forward.1} parent=5 // pred_fallthru
      _
  $region6: #{autoencoder_forward.1} parent=0 // loop_footer
    %s25 = sadd.s32 1, %s21
  $region7: #{autoencoder_forward.1} parent=0 // loop_footer_branch
    %20 = sbr.rel target = $region3
  $region8: #{autoencoder_forward.1} parent=0 // loop_exit
    _

</llo_original>
